<compile_context>
chip_gen: v7x
topology: tpu7x:2x2x1
jax: 0.10.0
libtpu: 0.0.40
codegen_flags: <defaults>
</compile_context>

<pallas_src>
import functools

import jax
import jax.numpy as jnp
from jax import lax
from jax.experimental import pallas as pl
from jax.experimental.pallas import tpu as pltpu

EPS = 1e-3


def _fused_kernel(s_ref, w_ref, x_ref, gb_ref, o_ref, *, fast_math: bool):
    # s_ref:  (1, Cin)    pre-sigmoid per-channel gate logits
    # w_ref:  (Tc, Cin)   1x1-conv weight tile (this program's Cout slice)
    # x_ref:  (Cin, P)    activations, channels-major (free reshape of NCHW, N=1)
    # gb_ref: (Tc, 2)     column 0 = BN gamma, column 1 = BN beta
    # o_ref:  (Tc, P)
    p = o_ref.shape[-1]
    inv_p = 1.0 / float(p)

    one_plus = 1.0 + jnp.exp(-s_ref[...])                  # (1, Cin), EUP exp
    if fast_math:
        gate = pl.reciprocal(one_plus, approx=True)        # EUP vrcp (frees VALU)
    else:
        gate = 1.0 / one_plus
    ws = w_ref[...] * gate                                  # fold gate into weight

    if fast_math:
        # bf16 MXU passes (~3x fewer vmatmuls), f32 accumulation.
        y = jnp.dot(ws.astype(jnp.bfloat16),
                    x_ref[...].astype(jnp.bfloat16),
                    preferred_element_type=jnp.float32)     # (Tc, P)
    else:
        y = jnp.dot(ws, x_ref[...],
                    preferred_element_type=jnp.float32)     # (Tc, P)

    # BatchNorm (training mode): single-pass batch stats along the lane axis.
    s1 = jnp.sum(y, axis=-1, keepdims=True)                 # (Tc, 1)
    s2 = jnp.sum(y * y, axis=-1, keepdims=True)             # (Tc, 1)
    mean = s1 * inv_p
    var = jnp.maximum(s2 * inv_p - mean * mean, 0.0)        # guard cancellation

    gamma = gb_ref[:, 0:1]                                  # (Tc, 1)
    beta = gb_ref[:, 1:2]                                   # (Tc, 1)
    scale = gamma * lax.rsqrt(var + EPS)
    shift = beta - mean * scale
    o_ref[...] = y * scale + shift                          # 2 VALU ops / elem


def fused_sigmoid_mul_conv_bn(x467, x471, conv_w, gamma, beta, *,
                              cout_tiles: int = 1, fast_math: bool = False):
    """x467: [1, Cin, H, W], x471: [1, Cin, 1, 1], conv_w: [Cout, Cin, 1, 1]."""
    N, Cin, H, W = x467.shape
    assert N == 1, "gate is per-sample; module spec uses N == 1"
    Cout = conv_w.shape[0]
    P = H * W
    assert Cout % cout_tiles == 0
    tc = Cout // cout_tiles
    assert tc % 8 == 0

    # All reshapes below are layout-free (no transposes, no extra XLA copies).
    x = x467.reshape(Cin, P)                 # channels-major activations
    s = x471.reshape(1, Cin)
    w = conv_w.reshape(Cout, Cin)
    gb = jnp.stack([gamma, beta], axis=1)    # (Cout, 2): one tiny operand, one DMA

    kernel = functools.partial(_fused_kernel, fast_math=fast_math)

    out = pl.pallas_call(
        kernel,
        out_shape=jax.ShapeDtypeStruct((Cout, P), jnp.float32),
        grid_spec=pltpu.PrefetchScalarGridSpec(
            num_scalar_prefetch=0,
            grid=(cout_tiles,),
            in_specs=[
                pl.BlockSpec((1, Cin), lambda j: (0, 0)),    # gate logits (shared)
                pl.BlockSpec((tc, Cin), lambda j: (j, 0)),   # weight slice
                pl.BlockSpec((Cin, P), lambda j: (0, 0)),    # x (shared, fetched once)
                pl.BlockSpec((tc, 2), lambda j: (j, 0)),     # [gamma, beta] slice
            ],
            out_specs=pl.BlockSpec((tc, P), lambda j: (j, 0)),
        ),
        compiler_params=pltpu.CompilerParams(
            dimension_semantics=("parallel",)),
    )(s, w, x, gb)

    # [Cout, P] -> [1, Cout, H, W]  (free reshape)
    return out.reshape(N, Cout, H, W)
    # TODO(synk): BatchNorm running_mean/running_var (momentum=0.01) are not
    # updated; only the forward activation is produced.


def reference(x467, x471, conv_w, gamma, beta):
    gate = jax.nn.sigmoid(x471)                            # [N, Cin, 1, 1]
    xs = gate * x467                                       # [N, Cin, H, W]
    y = jnp.einsum("nchw,oc->nohw", xs, conv_w.reshape(conv_w.shape[0], -1))
    mean = jnp.mean(y, axis=(0, 2, 3), keepdims=True)
    var = jnp.mean((y - mean) ** 2, axis=(0, 2, 3), keepdims=True)
    return (y - mean) * lax.rsqrt(var + EPS) * gamma.reshape(1, -1, 1, 1) + \
        beta.reshape(1, -1, 1, 1)


if __name__ == "__main__":
    N, Cin, H, W = 1, 1344, 14, 14
    Cout = 224

    key = jax.random.PRNGKey(0)
    k1, k2, k3, k4, k5 = jax.random.split(key, 5)
    x467 = jax.random.normal(k1, (N, Cin, H, W), dtype=jnp.float32)
    x471 = jax.random.normal(k2, (N, Cin, 1, 1), dtype=jnp.float32)
    conv_w = jax.random.normal(k3, (Cout, Cin, 1, 1), dtype=jnp.float32) * 0.02
    gamma = 1.0 + 0.1 * jax.random.normal(k4, (Cout,), dtype=jnp.float32)
    beta = 0.1 * jax.random.normal(k5, (Cout,), dtype=jnp.float32)

    ref = reference(x467, x471, conv_w, gamma, beta)

    # Default (strict f32) path: single grid step, exact sigmoid, f32 MXU.
    out = fused_sigmoid_mul_conv_bn(x467, x471, conv_w, gamma, beta)
    out = jax.block_until_ready(out)
    assert out.shape == (N, Cout, H, W), out.shape
    assert jnp.allclose(out, ref, atol=1e-3, rtol=1e-3), \
        float(jnp.max(jnp.abs(out - ref)))

    # Fast-math path (bf16 MXU + approx reciprocal): the main bandwidth/MXU
    # lever when upstream can feed bf16; validated at a looser tolerance.
    out_fast = fused_sigmoid_mul_conv_bn(x467, x471, conv_w, gamma, beta,
                                         fast_math=True)
    out_fast = jax.block_until_ready(out_fast)
    assert jnp.allclose(out_fast, ref, atol=5e-2, rtol=5e-2), \
        float(jnp.max(jnp.abs(out_fast - ref)))

    print("KERNEL_OK")
</pallas_src>

<mosaic_0001>
module attributes {stable_mosaic.version = 11 : i64} {
  func.func @_fused_kernel(%arg0: i32, %arg1: memref<1x1344xf32, #tpu.memory_space<vmem>>, %arg2: memref<224x1344xf32, #tpu.memory_space<vmem>>, %arg3: memref<1344x196xf32, #tpu.memory_space<vmem>>, %arg4: memref<224x2xf32, #tpu.memory_space<vmem>>, %arg5: memref<224x196xf32, #tpu.memory_space<vmem>>) attributes {dimension_semantics = [#tpu.dimension_semantics<parallel>], iteration_bounds = array<i64: 1>, scalar_prefetch = 0 : i64, scratch_operands = 0 : i64, tpu.core_type = #tpu.core_type<tc>, window_params = [{pipeline_mode = #tpu.pipeline_mode<synchronous>, transform_indices = @transform_0, window_bounds = array<i64: 1, 1344>}, {transform_indices = @transform_1, window_bounds = array<i64: 224, 1344>}, {pipeline_mode = #tpu.pipeline_mode<synchronous>, transform_indices = @transform_2, window_bounds = array<i64: 1344, 196>}, {transform_indices = @transform_3, window_bounds = array<i64: 224, 2>}, {transform_indices = @transform_4, window_bounds = array<i64: 224, 196>}]} {
    %c0 = arith.constant 0 : index
    %c0_0 = arith.constant 0 : index
    %0 = vector.load %arg1[%c0, %c0_0] : memref<1x1344xf32, #tpu.memory_space<vmem>>, vector<1x1344xf32>
    %cst = arith.constant 0.000000e+00 : f32
    %1 = vector.broadcast %cst : f32 to vector<1x1344xf32>
    %2 = arith.subf %1, %0 : vector<1x1344xf32>
    %3 = math.exp %2 : vector<1x1344xf32>
    %cst_1 = arith.constant 1.000000e+00 : f32
    %4 = vector.broadcast %cst_1 : f32 to vector<1x1344xf32>
    %5 = arith.addf %4, %3 : vector<1x1344xf32>
    %cst_2 = arith.constant 1.000000e+00 : f32
    %6 = vector.broadcast %cst_2 : f32 to vector<1x1344xf32>
    %7 = arith.divf %6, %5 : vector<1x1344xf32>
    %c0_3 = arith.constant 0 : index
    %c0_4 = arith.constant 0 : index
    %8 = vector.load %arg2[%c0_3, %c0_4] : memref<224x1344xf32, #tpu.memory_space<vmem>>, vector<224x1344xf32>
    %9 = vector.broadcast %7 : vector<1x1344xf32> to vector<224x1344xf32>
    %10 = arith.mulf %8, %9 : vector<224x1344xf32>
    %c0_5 = arith.constant 0 : index
    %c0_6 = arith.constant 0 : index
    %11 = vector.load %arg3[%c0_5, %c0_6] : memref<1344x196xf32, #tpu.memory_space<vmem>>, vector<1344x196xf32>
    %cst_7 = arith.constant dense<0.000000e+00> : vector<224x196xf32>
    %12 = tpu.matmul %10, %11, %cst_7 {dimension_numbers = #tpu.dot_dimension_numbers<[1], [0], [0], [1], [0, 0, 1, 1], [], []>} : vector<224x1344xf32>, vector<1344x196xf32>, vector<224x196xf32> -> vector<224x196xf32>
    %cst_8 = arith.constant dense<0.000000e+00> : vector<224xf32>
    %13 = vector.multi_reduction <add>, %12, %cst_8 [1] : vector<224x196xf32> to vector<224xf32>
    %14 = vector.shape_cast %13 : vector<224xf32> to vector<224x1xf32>
    %15 = arith.mulf %12, %12 : vector<224x196xf32>
    %cst_9 = arith.constant dense<0.000000e+00> : vector<224xf32>
    %16 = vector.multi_reduction <add>, %15, %cst_9 [1] : vector<224x196xf32> to vector<224xf32>
    %17 = vector.shape_cast %16 : vector<224xf32> to vector<224x1xf32>
    %cst_10 = arith.constant 0.00510204071 : f32
    %18 = vector.broadcast %cst_10 : f32 to vector<224x1xf32>
    %19 = arith.mulf %14, %18 : vector<224x1xf32>
    %cst_11 = arith.constant 0.00510204071 : f32
    %20 = vector.broadcast %cst_11 : f32 to vector<224x1xf32>
    %21 = arith.mulf %17, %20 : vector<224x1xf32>
    %22 = arith.mulf %19, %19 : vector<224x1xf32>
    %23 = arith.subf %21, %22 : vector<224x1xf32>
    %cst_12 = arith.constant 0.000000e+00 : f32
    %24 = vector.broadcast %cst_12 : f32 to vector<224x1xf32>
    %25 = arith.maximumf %23, %24 : vector<224x1xf32>
    %c0_13 = arith.constant 0 : index
    %c0_14 = arith.constant 0 : index
    %26 = vector.load %arg4[%c0_13, %c0_14] : memref<224x2xf32, #tpu.memory_space<vmem>>, vector<224x1xf32>
    %c0_15 = arith.constant 0 : index
    %c1 = arith.constant 1 : index
    %27 = vector.load %arg4[%c0_15, %c1] : memref<224x2xf32, #tpu.memory_space<vmem>>, vector<224x1xf32>
    %cst_16 = arith.constant 1.000000e-03 : f32
    %28 = vector.broadcast %cst_16 : f32 to vector<224x1xf32>
    %29 = arith.addf %25, %28 : vector<224x1xf32>
    %30 = math.rsqrt %29 : vector<224x1xf32>
    %31 = arith.mulf %26, %30 : vector<224x1xf32>
    %32 = arith.mulf %19, %31 : vector<224x1xf32>
    %33 = arith.subf %27, %32 : vector<224x1xf32>
    %34 = vector.broadcast %31 : vector<224x1xf32> to vector<224x196xf32>
    %35 = arith.mulf %12, %34 : vector<224x196xf32>
    %36 = vector.broadcast %33 : vector<224x1xf32> to vector<224x196xf32>
    %37 = arith.addf %35, %36 : vector<224x196xf32>
    %c0_17 = arith.constant 0 : index
    %c0_18 = arith.constant 0 : index
    %38 = vector.load %arg5[%c0_17, %c0_18] : memref<224x196xf32, #tpu.memory_space<vmem>>, vector<224x196xf32>
    tpu.vector_store %arg5[%c0_17, %c0_18], %37 {strides = array<i32>} : memref<224x196xf32, #tpu.memory_space<vmem>>, vector<224x196xf32>,
    return
  }
  func.func @transform_0(%arg0: i32) -> (i32, i32) {
    %c0_i32 = arith.constant 0 : i32
    %c0_i32_0 = arith.constant 0 : i32
    %c0_i32_1 = arith.constant 0 : i32
    return %c0_i32, %c0_i32_0 : i32, i32
  }
  func.func @transform_1(%arg0: i32) -> (i32, i32) {
    %c0_i32 = arith.constant 0 : i32
    %c0_i32_0 = arith.constant 0 : i32
    return %arg0, %c0_i32 : i32, i32
  }
  func.func @transform_2(%arg0: i32) -> (i32, i32) {
    %c0_i32 = arith.constant 0 : i32
    %c0_i32_0 = arith.constant 0 : i32
    %c0_i32_1 = arith.constant 0 : i32
    return %c0_i32, %c0_i32_0 : i32, i32
  }
  func.func @transform_3(%arg0: i32) -> (i32, i32) {
    %c0_i32 = arith.constant 0 : i32
    %c0_i32_0 = arith.constant 0 : i32
    return %arg0, %c0_i32 : i32, i32
  }
  func.func @transform_4(%arg0: i32) -> (i32, i32) {
    %c0_i32 = arith.constant 0 : i32
    %c0_i32_0 = arith.constant 0 : i32
    return %arg0, %c0_i32 : i32, i32
  }
}

</mosaic_0001>

<llo_original>
// kernel: tpu_custom_call.1
$region0: #{tpu_custom_call.1}
  #allocation0 [shape = 'u32[]', space=smem, size = 0x4, offset = 0x4, fixed_abs, tag = 'smem constant byte address 0x4 - core index']
  #allocation1 [shape = 'u32[144,128]{1,0:T(1,128)}', space=vmem, size = 0x12000, scoped, tag = 'internal scratch']
  %s0 = inlined_call_operand.vmem [shape: f32[1,1344], index: 0, kind: input, shape index: {}]
  %s1 = inlined_call_operand.vmem [shape: f32[224,1344], index: 1, kind: input, shape index: {}]
  %s2 = inlined_call_operand.vmem [shape: f32[1344,196], index: 2, kind: input, shape index: {}]
  %s3 = inlined_call_operand.vmem [shape: f32[224,2], index: 3, kind: input, shape index: {}]
  %s4 = inlined_call_operand.vmem [shape: f32[224,196], index: 4, kind: output, shape index: {}]
  %s5 = sld [smem:[#allocation0]]
  $region26: #{tpu_custom_call.1} parent=0
    _
  %s7 = ssub.s32 1, %s5
  %s8 = scalar_select 0, %s7, %s5
  // Predicated region
  $region2: #{tpu_custom_call.1} parent=0 // pred_check
    _
  $region3: #{tpu_custom_call.1} parent=0 // pred_check_branch
    %10 = sbr.rel (0) target = $region5
  $region4: #{tpu_custom_call.1} parent=0 // pred_region
    _
  $region5: #{tpu_custom_call.1} parent=0 // pred_fallthru
    _
  // Predicated region
  $region6: #{tpu_custom_call.1} parent=0 // pred_check
    _
  $region7: #{tpu_custom_call.1} parent=0 // pred_check_branch
    %12 = sbr.rel (0) target = $region9
  $region8: #{tpu_custom_call.1} parent=0 // pred_region
    _
  $region9: #{tpu_custom_call.1} parent=0 // pred_fallthru
    _
  // Predicated region
  $region10: #{tpu_custom_call.1} parent=0 // pred_check
    _
  $region11: #{tpu_custom_call.1} parent=0 // pred_check_branch
    %14 = sbr.rel (0) target = $region13
  $region12: #{tpu_custom_call.1} parent=0 // pred_region
    _
  $region13: #{tpu_custom_call.1} parent=0 // pred_fallthru
    _
  // Predicated region
  $region14: #{tpu_custom_call.1} parent=0 // pred_check
    _
  $region15: #{tpu_custom_call.1} parent=0 // pred_check_branch
    %16 = sbr.rel (0) target = $region17
  $region16: #{tpu_custom_call.1} parent=0 // pred_region
    _
  $region17: #{tpu_custom_call.1} parent=0 // pred_fallthru
    _
  %v17 = vld [vmem:[%s0] sm:$0xff]
  %v18 = vld [vmem:[%s0 + $0x8] sm:$0x7]
  %v19 = vsub.f32 0.0, %v17
  %v20 = vsub.f32 0.0, %v18
  %v21 = vmul.f32 %v19, 1.442695
  %v22 = vpow.pop %v21
  %v23 = vmul.f32 %v20, 1.442695
  %v24 = vpow.pop %v23
  %v25 = vadd.f32 %v22, 1.0
  %v26 = vadd.f32 %v24, 1.0
  %v27 = vrcp.pop %v25
  %v28 = vmul.f32 1.0, %v27
  %v29 = vrcp.pop %v26
  %v30 = vmul.f32 1.0, %v29
  %v31 = vld [vmem:[%s1] sm:$0xff]
  %v32 = vld [vmem:[%s1 + $0x8] sm:$0xff]
  %v33 = vld [vmem:[%s1 + $0x10] sm:$0xff]
  %v34 = vld [vmem:[%s1 + $0x18] sm:$0xff]
  %v35 = vld [vmem:[%s1 + $0x20] sm:$0xff]
  %v36 = vld [vmem:[%s1 + $0x28] sm:$0xff]
  %v37 = vld [vmem:[%s1 + $0x30] sm:$0xff]
  %v38 = vld [vmem:[%s1 + $0x38] sm:$0xff]
  %v39 = vld [vmem:[%s1 + $0x40] sm:$0xff]
  %v40 = vld [vmem:[%s1 + $0x48] sm:$0xff]
  %v41 = vld [vmem:[%s1 + $0x50] sm:$0xff]
  %v42 = vld [vmem:[%s1 + $0x58] sm:$0xff]
  %v43 = vld [vmem:[%s1 + $0x60] sm:$0xff]
  %v44 = vld [vmem:[%s1 + $0x68] sm:$0xff]
  %v45 = vld [vmem:[%s1 + $0x70] sm:$0xff]
  %v46 = vld [vmem:[%s1 + $0x78] sm:$0xff]
  %v47 = vld [vmem:[%s1 + $0x80] sm:$0xff]
  %v48 = vld [vmem:[%s1 + $0x88] sm:$0xff]
  %v49 = vld [vmem:[%s1 + $0x90] sm:$0xff]
  %v50 = vld [vmem:[%s1 + $0x98] sm:$0xff]
  %v51 = vld [vmem:[%s1 + $0xa0] sm:$0xff]
  %v52 = vld [vmem:[%s1 + $0xa8] sm:$0xff]
  %v53 = vld [vmem:[%s1 + $0xb0] sm:$0xff]
  %v54 = vld [vmem:[%s1 + $0xb8] sm:$0xff]
  %v55 = vld [vmem:[%s1 + $0xc0] sm:$0xff]
  %v56 = vld [vmem:[%s1 + $0xc8] sm:$0xff]
  %v57 = vld [vmem:[%s1 + $0xd0] sm:$0xff]
  %v58 = vld [vmem:[%s1 + $0xd8] sm:$0xff]
  %v59 = vld [vmem:[%s1 + $0xe0] sm:$0xff]
  %v60 = vld [vmem:[%s1 + $0xe8] sm:$0xff]
  %v61 = vld [vmem:[%s1 + $0xf0] sm:$0xff]
  %v62 = vld [vmem:[%s1 + $0xf8] sm:$0xff]
  %v63 = vld [vmem:[%s1 + $0x100] sm:$0xff]
  %v64 = vld [vmem:[%s1 + $0x108] sm:$0xff]
  %v65 = vld [vmem:[%s1 + $0x110] sm:$0xff]
  %v66 = vld [vmem:[%s1 + $0x118] sm:$0xff]
  %v67 = vld [vmem:[%s1 + $0x120] sm:$0xff]
  %v68 = vld [vmem:[%s1 + $0x128] sm:$0xff]
  %v69 = vld [vmem:[%s1 + $0x130] sm:$0xff]
  %v70 = vld [vmem:[%s1 + $0x138] sm:$0xff]
  %v71 = vld [vmem:[%s1 + $0x140] sm:$0xff]
  %v72 = vld [vmem:[%s1 + $0x148] sm:$0xff]
  %v73 = vld [vmem:[%s1 + $0x150] sm:$0xff]
  %v74 = vld [vmem:[%s1 + $0x158] sm:$0xff]
  %v75 = vld [vmem:[%s1 + $0x160] sm:$0xff]
  %v76 = vld [vmem:[%s1 + $0x168] sm:$0xff]
  %v77 = vld [vmem:[%s1 + $0x170] sm:$0xff]
  %v78 = vld [vmem:[%s1 + $0x178] sm:$0xff]
  %v79 = vld [vmem:[%s1 + $0x180] sm:$0xff]
  %v80 = vld [vmem:[%s1 + $0x188] sm:$0xff]
  %v81 = vld [vmem:[%s1 + $0x190] sm:$0xff]
  %v82 = vld [vmem:[%s1 + $0x198] sm:$0xff]
  %v83 = vld [vmem:[%s1 + $0x1a0] sm:$0xff]
  %v84 = vld [vmem:[%s1 + $0x1a8] sm:$0xff]
  %v85 = vld [vmem:[%s1 + $0x1b0] sm:$0xff]
  %v86 = vld [vmem:[%s1 + $0x1b8] sm:$0xff]
  %v87 = vld [vmem:[%s1 + $0x1c0] sm:$0xff]
  %v88 = vld [vmem:[%s1 + $0x1c8] sm:$0xff]
  %v89 = vld [vmem:[%s1 + $0x1d0] sm:$0xff]
  %v90 = vld [vmem:[%s1 + $0x1d8] sm:$0xff]
  %v91 = vld [vmem:[%s1 + $0x1e0] sm:$0xff]
  %v92 = vld [vmem:[%s1 + $0x1e8] sm:$0xff]
  %v93 = vld [vmem:[%s1 + $0x1f0] sm:$0xff]
  %v94 = vld [vmem:[%s1 + $0x1f8] sm:$0xff]
  %v95 = vld [vmem:[%s1 + $0x200] sm:$0xff]
  %v96 = vld [vmem:[%s1 + $0x208] sm:$0xff]
  %v97 = vld [vmem:[%s1 + $0x210] sm:$0xff]
  %v98 = vld [vmem:[%s1 + $0x218] sm:$0xff]
  %v99 = vld [vmem:[%s1 + $0x220] sm:$0xff]
  %v100 = vld [vmem:[%s1 + $0x228] sm:$0xff]
  %v101 = vld [vmem:[%s1 + $0x230] sm:$0xff]
  %v102 = vld [vmem:[%s1 + $0x238] sm:$0xff]
  %v103 = vld [vmem:[%s1 + $0x240] sm:$0xff]
  %v104 = vld [vmem:[%s1 + $0x248] sm:$0xff]
  %v105 = vld [vmem:[%s1 + $0x250] sm:$0xff]
  %v106 = vld [vmem:[%s1 + $0x258] sm:$0xff]
  %v107 = vld [vmem:[%s1 + $0x260] sm:$0xff]
  %v108 = vld [vmem:[%s1 + $0x268] sm:$0xff]
  %v109 = vld [vmem:[%s1 + $0x270] sm:$0xff]
  %v110 = vld [vmem:[%s1 + $0x278] sm:$0xff]
  %v111 = vld [vmem:[%s1 + $0x280] sm:$0xff]
  %v112 = vld [vmem:[%s1 + $0x288] sm:$0xff]
  %v113 = vld [vmem:[%s1 + $0x290] sm:$0xff]
  %v114 = vld [vmem:[%s1 + $0x298] sm:$0xff]
  %v115 = vld [vmem:[%s1 + $0x2a0] sm:$0xff]
  %v116 = vld [vmem:[%s1 + $0x2a8] sm:$0xff]
  %v117 = vld [vmem:[%s1 + $0x2b0] sm:$0xff]
  %v118 = vld [vmem:[%s1 + $0x2b8] sm:$0xff]
  %v119 = vld [vmem:[%s1 + $0x2c0] sm:$0xff]
  %v120 = vld [vmem:[%s1 + $0x2c8] sm:$0xff]
  %v121 = vld [vmem:[%s1 + $0x2d0] sm:$0xff]
  %v122 = vld [vmem:[%s1 + $0x2d8] sm:$0xff]
  %v123 = vld [vmem:[%s1 + $0x2e0] sm:$0xff]
  %v124 = vld [vmem:[%s1 + $0x2e8] sm:$0xff]
  %v125 = vld [vmem:[%s1 + $0x2f0] sm:$0xff]
  %v126 = vld [vmem:[%s1 + $0x2f8] sm:$0xff]
  %v127 = vld [vmem:[%s1 + $0x300] sm:$0xff]
  %v128 = vld [vmem:[%s1 + $0x308] sm:$0xff]
  %v129 = vld [vmem:[%s1 + $0x310] sm:$0xff]
  %v130 = vld [vmem:[%s1 + $0x318] sm:$0xff]
  %v131 = vld [vmem:[%s1 + $0x320] sm:$0xff]
  %v132 = vld [vmem:[%s1 + $0x328] sm:$0xff]
  %v133 = vld [vmem:[%s1 + $0x330] sm:$0xff]
  %v134 = vld [vmem:[%s1 + $0x338] sm:$0xff]
  %v135 = vld [vmem:[%s1 + $0x340] sm:$0xff]
  %v136 = vld [vmem:[%s1 + $0x348] sm:$0xff]
  %v137 = vld [vmem:[%s1 + $0x350] sm:$0xff]
  %v138 = vld [vmem:[%s1 + $0x358] sm:$0xff]
  %v139 = vld [vmem:[%s1 + $0x360] sm:$0xff]
  %v140 = vld [vmem:[%s1 + $0x368] sm:$0xff]
  %v141 = vld [vmem:[%s1 + $0x370] sm:$0xff]
  %v142 = vld [vmem:[%s1 + $0x378] sm:$0xff]
  %v143 = vld [vmem:[%s1 + $0x380] sm:$0xff]
  %v144 = vld [vmem:[%s1 + $0x388] sm:$0xff]
  %v145 = vld [vmem:[%s1 + $0x390] sm:$0xff]
  %v146 = vld [vmem:[%s1 + $0x398] sm:$0xff]
  %v147 = vld [vmem:[%s1 + $0x3a0] sm:$0xff]
  %v148 = vld [vmem:[%s1 + $0x3a8] sm:$0xff]
  %v149 = vld [vmem:[%s1 + $0x3b0] sm:$0xff]
  %v150 = vld [vmem:[%s1 + $0x3b8] sm:$0xff]
  %v151 = vld [vmem:[%s1 + $0x3c0] sm:$0xff]
  %v152 = vld [vmem:[%s1 + $0x3c8] sm:$0xff]
  %v153 = vld [vmem:[%s1 + $0x3d0] sm:$0xff]
  %v154 = vld [vmem:[%s1 + $0x3d8] sm:$0xff]
  %v155 = vld [vmem:[%s1 + $0x3e0] sm:$0xff]
  %v156 = vld [vmem:[%s1 + $0x3e8] sm:$0xff]
  %v157 = vld [vmem:[%s1 + $0x3f0] sm:$0xff]
  %v158 = vld [vmem:[%s1 + $0x3f8] sm:$0xff]
  %v159 = vld [vmem:[%s1 + $0x400] sm:$0xff]
  %v160 = vld [vmem:[%s1 + $0x408] sm:$0xff]
  %v161 = vld [vmem:[%s1 + $0x410] sm:$0xff]
  %v162 = vld [vmem:[%s1 + $0x418] sm:$0xff]
  %v163 = vld [vmem:[%s1 + $0x420] sm:$0xff]
  %v164 = vld [vmem:[%s1 + $0x428] sm:$0xff]
  %v165 = vld [vmem:[%s1 + $0x430] sm:$0xff]
  %v166 = vld [vmem:[%s1 + $0x438] sm:$0xff]
  %v167 = vld [vmem:[%s1 + $0x440] sm:$0xff]
  %v168 = vld [vmem:[%s1 + $0x448] sm:$0xff]
  %v169 = vld [vmem:[%s1 + $0x450] sm:$0xff]
  %v170 = vld [vmem:[%s1 + $0x458] sm:$0xff]
  %v171 = vld [vmem:[%s1 + $0x460] sm:$0xff]
  %v172 = vld [vmem:[%s1 + $0x468] sm:$0xff]
  %v173 = vld [vmem:[%s1 + $0x470] sm:$0xff]
  %v174 = vld [vmem:[%s1 + $0x478] sm:$0xff]
  %v175 = vld [vmem:[%s1 + $0x480] sm:$0xff]
  %v176 = vld [vmem:[%s1 + $0x488] sm:$0xff]
  %v177 = vld [vmem:[%s1 + $0x490] sm:$0xff]
  %v178 = vld [vmem:[%s1 + $0x498] sm:$0xff]
  %v179 = vld [vmem:[%s1 + $0x4a0] sm:$0xff]
  %v180 = vld [vmem:[%s1 + $0x4a8] sm:$0xff]
  %v181 = vld [vmem:[%s1 + $0x4b0] sm:$0xff]
  %v182 = vld [vmem:[%s1 + $0x4b8] sm:$0xff]
  %v183 = vld [vmem:[%s1 + $0x4c0] sm:$0xff]
  %v184 = vld [vmem:[%s1 + $0x4c8] sm:$0xff]
  %v185 = vld [vmem:[%s1 + $0x4d0] sm:$0xff]
  %v186 = vld [vmem:[%s1 + $0x4d8] sm:$0xff]
  %v187 = vld [vmem:[%s1 + $0x4e0] sm:$0xff]
  %v188 = vld [vmem:[%s1 + $0x4e8] sm:$0xff]
  %v189 = vld [vmem:[%s1 + $0x4f0] sm:$0xff]
  %v190 = vld [vmem:[%s1 + $0x4f8] sm:$0xff]
  %v191 = vld [vmem:[%s1 + $0x500] sm:$0xff]
  %v192 = vld [vmem:[%s1 + $0x508] sm:$0xff]
  %v193 = vld [vmem:[%s1 + $0x510] sm:$0xff]
  %v194 = vld [vmem:[%s1 + $0x518] sm:$0xff]
  %v195 = vld [vmem:[%s1 + $0x520] sm:$0xff]
  %v196 = vld [vmem:[%s1 + $0x528] sm:$0xff]
  %v197 = vld [vmem:[%s1 + $0x530] sm:$0xff]
  %v198 = vld [vmem:[%s1 + $0x538] sm:$0xff]
  %v199 = vld [vmem:[%s1 + $0x540] sm:$0xff]
  %v200 = vld [vmem:[%s1 + $0x548] sm:$0xff]
  %v201 = vld [vmem:[%s1 + $0x550] sm:$0xff]
  %v202 = vld [vmem:[%s1 + $0x558] sm:$0xff]
  %v203 = vld [vmem:[%s1 + $0x560] sm:$0xff]
  %v204 = vld [vmem:[%s1 + $0x568] sm:$0xff]
  %v205 = vld [vmem:[%s1 + $0x570] sm:$0xff]
  %v206 = vld [vmem:[%s1 + $0x578] sm:$0xff]
  %v207 = vld [vmem:[%s1 + $0x580] sm:$0xff]
  %v208 = vld [vmem:[%s1 + $0x588] sm:$0xff]
  %v209 = vld [vmem:[%s1 + $0x590] sm:$0xff]
  %v210 = vld [vmem:[%s1 + $0x598] sm:$0xff]
  %v211 = vld [vmem:[%s1 + $0x5a0] sm:$0xff]
  %v212 = vld [vmem:[%s1 + $0x5a8] sm:$0xff]
  %v213 = vld [vmem:[%s1 + $0x5b0] sm:$0xff]
  %v214 = vld [vmem:[%s1 + $0x5b8] sm:$0xff]
  %v215 = vld [vmem:[%s1 + $0x5c0] sm:$0xff]
  %v216 = vld [vmem:[%s1 + $0x5c8] sm:$0xff]
  %v217 = vld [vmem:[%s1 + $0x5d0] sm:$0xff]
  %v218 = vld [vmem:[%s1 + $0x5d8] sm:$0xff]
  %v219 = vld [vmem:[%s1 + $0x5e0] sm:$0xff]
  %v220 = vld [vmem:[%s1 + $0x5e8] sm:$0xff]
  %v221 = vld [vmem:[%s1 + $0x5f0] sm:$0xff]
  %v222 = vld [vmem:[%s1 + $0x5f8] sm:$0xff]
  %v223 = vld [vmem:[%s1 + $0x600] sm:$0xff]
  %v224 = vld [vmem:[%s1 + $0x608] sm:$0xff]
  %v225 = vld [vmem:[%s1 + $0x610] sm:$0xff]
  %v226 = vld [vmem:[%s1 + $0x618] sm:$0xff]
  %v227 = vld [vmem:[%s1 + $0x620] sm:$0xff]
  %v228 = vld [vmem:[%s1 + $0x628] sm:$0xff]
  %v229 = vld [vmem:[%s1 + $0x630] sm:$0xff]
  %v230 = vld [vmem:[%s1 + $0x638] sm:$0xff]
  %v231 = vld [vmem:[%s1 + $0x640] sm:$0xff]
  %v232 = vld [vmem:[%s1 + $0x648] sm:$0xff]
  %v233 = vld [vmem:[%s1 + $0x650] sm:$0xff]
  %v234 = vld [vmem:[%s1 + $0x658] sm:$0xff]
  %v235 = vld [vmem:[%s1 + $0x660] sm:$0xff]
  %v236 = vld [vmem:[%s1 + $0x668] sm:$0xff]
  %v237 = vld [vmem:[%s1 + $0x670] sm:$0xff]
  %v238 = vld [vmem:[%s1 + $0x678] sm:$0xff]
  %v239 = vld [vmem:[%s1 + $0x680] sm:$0xff]
  %v240 = vld [vmem:[%s1 + $0x688] sm:$0xff]
  %v241 = vld [vmem:[%s1 + $0x690] sm:$0xff]
  %v242 = vld [vmem:[%s1 + $0x698] sm:$0xff]
  %v243 = vld [vmem:[%s1 + $0x6a0] sm:$0xff]
  %v244 = vld [vmem:[%s1 + $0x6a8] sm:$0xff]
  %v245 = vld [vmem:[%s1 + $0x6b0] sm:$0xff]
  %v246 = vld [vmem:[%s1 + $0x6b8] sm:$0xff]
  %v247 = vld [vmem:[%s1 + $0x6c0] sm:$0xff]
  %v248 = vld [vmem:[%s1 + $0x6c8] sm:$0xff]
  %v249 = vld [vmem:[%s1 + $0x6d0] sm:$0xff]
  %v250 = vld [vmem:[%s1 + $0x6d8] sm:$0xff]
  %v251 = vld [vmem:[%s1 + $0x6e0] sm:$0xff]
  %v252 = vld [vmem:[%s1 + $0x6e8] sm:$0xff]
  %v253 = vld [vmem:[%s1 + $0x6f0] sm:$0xff]
  %v254 = vld [vmem:[%s1 + $0x6f8] sm:$0xff]
  %v255 = vld [vmem:[%s1 + $0x700] sm:$0xff]
  %v256 = vld [vmem:[%s1 + $0x708] sm:$0xff]
  %v257 = vld [vmem:[%s1 + $0x710] sm:$0xff]
  %v258 = vld [vmem:[%s1 + $0x718] sm:$0xff]
  %v259 = vld [vmem:[%s1 + $0x720] sm:$0xff]
  %v260 = vld [vmem:[%s1 + $0x728] sm:$0xff]
  %v261 = vld [vmem:[%s1 + $0x730] sm:$0xff]
  %v262 = vld [vmem:[%s1 + $0x738] sm:$0xff]
  %v263 = vld [vmem:[%s1 + $0x740] sm:$0xff]
  %v264 = vld [vmem:[%s1 + $0x748] sm:$0xff]
  %v265 = vld [vmem:[%s1 + $0x750] sm:$0xff]
  %v266 = vld [vmem:[%s1 + $0x758] sm:$0xff]
  %v267 = vld [vmem:[%s1 + $0x760] sm:$0xff]
  %v268 = vld [vmem:[%s1 + $0x768] sm:$0xff]
  %v269 = vld [vmem:[%s1 + $0x770] sm:$0xff]
  %v270 = vld [vmem:[%s1 + $0x778] sm:$0xff]
  %v271 = vld [vmem:[%s1 + $0x780] sm:$0xff]
  %v272 = vld [vmem:[%s1 + $0x788] sm:$0xff]
  %v273 = vld [vmem:[%s1 + $0x790] sm:$0xff]
  %v274 = vld [vmem:[%s1 + $0x798] sm:$0xff]
  %v275 = vld [vmem:[%s1 + $0x7a0] sm:$0xff]
  %v276 = vld [vmem:[%s1 + $0x7a8] sm:$0xff]
  %v277 = vld [vmem:[%s1 + $0x7b0] sm:$0xff]
  %v278 = vld [vmem:[%s1 + $0x7b8] sm:$0xff]
  %v279 = vld [vmem:[%s1 + $0x7c0] sm:$0xff]
  %v280 = vld [vmem:[%s1 + $0x7c8] sm:$0xff]
  %v281 = vld [vmem:[%s1 + $0x7d0] sm:$0xff]
  %v282 = vld [vmem:[%s1 + $0x7d8] sm:$0xff]
  %v283 = vld [vmem:[%s1 + $0x7e0] sm:$0xff]
  %v284 = vld [vmem:[%s1 + $0x7e8] sm:$0xff]
  %v285 = vld [vmem:[%s1 + $0x7f0] sm:$0xff]
  %v286 = vld [vmem:[%s1 + $0x7f8] sm:$0xff]
  %v287 = vld [vmem:[%s1 + $0x800] sm:$0xff]
  %v288 = vld [vmem:[%s1 + $0x808] sm:$0xff]
  %v289 = vld [vmem:[%s1 + $0x810] sm:$0xff]
  %v290 = vld [vmem:[%s1 + $0x818] sm:$0xff]
  %v291 = vld [vmem:[%s1 + $0x820] sm:$0xff]
  %v292 = vld [vmem:[%s1 + $0x828] sm:$0xff]
  %v293 = vld [vmem:[%s1 + $0x830] sm:$0xff]
  %v294 = vld [vmem:[%s1 + $0x838] sm:$0xff]
  %v295 = vld [vmem:[%s1 + $0x840] sm:$0xff]
  %v296 = vld [vmem:[%s1 + $0x848] sm:$0xff]
  %v297 = vld [vmem:[%s1 + $0x850] sm:$0xff]
  %v298 = vld [vmem:[%s1 + $0x858] sm:$0xff]
  %v299 = vld [vmem:[%s1 + $0x860] sm:$0xff]
  %v300 = vld [vmem:[%s1 + $0x868] sm:$0xff]
  %v301 = vld [vmem:[%s1 + $0x870] sm:$0xff]
  %v302 = vld [vmem:[%s1 + $0x878] sm:$0xff]
  %v303 = vld [vmem:[%s1 + $0x880] sm:$0xff]
  %v304 = vld [vmem:[%s1 + $0x888] sm:$0xff]
  %v305 = vld [vmem:[%s1 + $0x890] sm:$0xff]
  %v306 = vld [vmem:[%s1 + $0x898] sm:$0xff]
  %v307 = vld [vmem:[%s1 + $0x8a0] sm:$0xff]
  %v308 = vld [vmem:[%s1 + $0x8a8] sm:$0xff]
  %v309 = vld [vmem:[%s1 + $0x8b0] sm:$0xff]
  %v310 = vld [vmem:[%s1 + $0x8b8] sm:$0xff]
  %v311 = vld [vmem:[%s1 + $0x8c0] sm:$0xff]
  %v312 = vld [vmem:[%s1 + $0x8c8] sm:$0xff]
  %v313 = vld [vmem:[%s1 + $0x8d0] sm:$0xff]
  %v314 = vld [vmem:[%s1 + $0x8d8] sm:$0xff]
  %v315 = vld [vmem:[%s1 + $0x8e0] sm:$0xff]
  %v316 = vld [vmem:[%s1 + $0x8e8] sm:$0xff]
  %v317 = vld [vmem:[%s1 + $0x8f0] sm:$0xff]
  %v318 = vld [vmem:[%s1 + $0x8f8] sm:$0xff]
  %v319 = vld [vmem:[%s1 + $0x900] sm:$0xff]
  %v320 = vld [vmem:[%s1 + $0x908] sm:$0xff]
  %v321 = vld [vmem:[%s1 + $0x910] sm:$0xff]
  %v322 = vld [vmem:[%s1 + $0x918] sm:$0xff]
  %v323 = vld [vmem:[%s1 + $0x920] sm:$0xff]
  %v324 = vld [vmem:[%s1 + $0x928] sm:$0xff]
  %v325 = vld [vmem:[%s1 + $0x930] sm:$0xff]
  %v326 = vld [vmem:[%s1 + $0x938] sm:$0xff]
  %v327 = vld [vmem:[%s1 + $0x940] sm:$0xff]
  %v328 = vld [vmem:[%s1 + $0x948] sm:$0xff]
  %v329 = vld [vmem:[%s1 + $0x950] sm:$0xff]
  %v330 = vld [vmem:[%s1 + $0x958] sm:$0xff]
  %v331 = vld [vmem:[%s1 + $0x960] sm:$0xff]
  %v332 = vld [vmem:[%s1 + $0x968] sm:$0xff]
  %v333 = vld [vmem:[%s1 + $0x970] sm:$0xff]
  %v334 = vld [vmem:[%s1 + $0x978] sm:$0xff]
  %v335 = vld [vmem:[%s1 + $0x980] sm:$0xff]
  %v336 = vld [vmem:[%s1 + $0x988] sm:$0xff]
  %v337 = vld [vmem:[%s1 + $0x990] sm:$0xff]
  %v338 = vld [vmem:[%s1 + $0x998] sm:$0xff]
  %v341 = vlaneseq
  %v342 = vshrl.u32 %v341, 7
  %v343 = vsub.s32 0, %v342
  %v344 = vrot.slane %v28, %v343
  %v345 = vlaneseq
  %v346 = vshrl.u32 %v345, 7
  %v347 = vsub.s32 1, %v346
  %v348 = vrot.slane %v28, %v347
  %v349 = vlaneseq
  %v350 = vshrl.u32 %v349, 7
  %v351 = vsub.s32 2, %v350
  %v352 = vrot.slane %v28, %v351
  %v353 = vlaneseq
  %v354 = vshrl.u32 %v353, 7
  %v355 = vsub.s32 3, %v354
  %v356 = vrot.slane %v28, %v355
  %v357 = vlaneseq
  %v358 = vshrl.u32 %v357, 7
  %v359 = vsub.s32 4, %v358
  %v360 = vrot.slane %v28, %v359
  %v361 = vlaneseq
  %v362 = vshrl.u32 %v361, 7
  %v363 = vsub.s32 5, %v362
  %v364 = vrot.slane %v28, %v363
  %v365 = vlaneseq
  %v366 = vshrl.u32 %v365, 7
  %v367 = vsub.s32 6, %v366
  %v368 = vrot.slane %v28, %v367
  %v369 = vlaneseq
  %v370 = vshrl.u32 %v369, 7
  %v371 = vsub.s32 7, %v370
  %v372 = vrot.slane %v28, %v371
  %v373 = vlaneseq
  %v374 = vshrl.u32 %v373, 7
  %v375 = vsub.s32 0, %v374
  %v376 = vrot.slane %v30, %v375
  %v377 = vlaneseq
  %v378 = vshrl.u32 %v377, 7
  %v379 = vsub.s32 1, %v378
  %v380 = vrot.slane %v30, %v379
  %v381 = vlaneseq
  %v382 = vshrl.u32 %v381, 7
  %v383 = vsub.s32 2, %v382
  %v384 = vrot.slane %v30, %v383
  %v396 = vmul.f32 %v31, %v344
  %v397 = vmul.f32 %v32, %v348
  %v398 = vmul.f32 %v33, %v352
  %v399 = vmul.f32 %v34, %v356
  %v400 = vmul.f32 %v35, %v360
  %v401 = vmul.f32 %v36, %v364
  %v402 = vmul.f32 %v37, %v368
  %v403 = vmul.f32 %v38, %v372
  %v404 = vmul.f32 %v39, %v376
  %v405 = vmul.f32 %v40, %v380
  %v406 = vmul.f32 %v41, %v384
  %v407 = vmul.f32 %v42, %v344
  %v408 = vmul.f32 %v43, %v348
  %v409 = vmul.f32 %v44, %v352
  %v410 = vmul.f32 %v45, %v356
  %v411 = vmul.f32 %v46, %v360
  %v412 = vmul.f32 %v47, %v364
  %v413 = vmul.f32 %v48, %v368
  %v414 = vmul.f32 %v49, %v372
  %v415 = vmul.f32 %v50, %v376
  %v416 = vmul.f32 %v51, %v380
  %v417 = vmul.f32 %v52, %v384
  %v418 = vmul.f32 %v53, %v344
  %v419 = vmul.f32 %v54, %v348
  %v420 = vmul.f32 %v55, %v352
  %v421 = vmul.f32 %v56, %v356
  %v422 = vmul.f32 %v57, %v360
  %v423 = vmul.f32 %v58, %v364
  %v424 = vmul.f32 %v59, %v368
  %v425 = vmul.f32 %v60, %v372
  %v426 = vmul.f32 %v61, %v376
  %v427 = vmul.f32 %v62, %v380
  %v428 = vmul.f32 %v63, %v384
  %v429 = vmul.f32 %v64, %v344
  %v430 = vmul.f32 %v65, %v348
  %v431 = vmul.f32 %v66, %v352
  %v432 = vmul.f32 %v67, %v356
  %v433 = vmul.f32 %v68, %v360
  %v434 = vmul.f32 %v69, %v364
  %v435 = vmul.f32 %v70, %v368
  %v436 = vmul.f32 %v71, %v372
  %v437 = vmul.f32 %v72, %v376
  %v438 = vmul.f32 %v73, %v380
  %v439 = vmul.f32 %v74, %v384
  %v440 = vmul.f32 %v75, %v344
  %v441 = vmul.f32 %v76, %v348
  %v442 = vmul.f32 %v77, %v352
  %v443 = vmul.f32 %v78, %v356
  %v444 = vmul.f32 %v79, %v360
  %v445 = vmul.f32 %v80, %v364
  %v446 = vmul.f32 %v81, %v368
  %v447 = vmul.f32 %v82, %v372
  %v448 = vmul.f32 %v83, %v376
  %v449 = vmul.f32 %v84, %v380
  %v450 = vmul.f32 %v85, %v384
  %v451 = vmul.f32 %v86, %v344
  %v452 = vmul.f32 %v87, %v348
  %v453 = vmul.f32 %v88, %v352
  %v454 = vmul.f32 %v89, %v356
  %v455 = vmul.f32 %v90, %v360
  %v456 = vmul.f32 %v91, %v364
  %v457 = vmul.f32 %v92, %v368
  %v458 = vmul.f32 %v93, %v372
  %v459 = vmul.f32 %v94, %v376
  %v460 = vmul.f32 %v95, %v380
  %v461 = vmul.f32 %v96, %v384
  %v462 = vmul.f32 %v97, %v344
  %v463 = vmul.f32 %v98, %v348
  %v464 = vmul.f32 %v99, %v352
  %v465 = vmul.f32 %v100, %v356
  %v466 = vmul.f32 %v101, %v360
  %v467 = vmul.f32 %v102, %v364
  %v468 = vmul.f32 %v103, %v368
  %v469 = vmul.f32 %v104, %v372
  %v470 = vmul.f32 %v105, %v376
  %v471 = vmul.f32 %v106, %v380
  %v472 = vmul.f32 %v107, %v384
  %v473 = vmul.f32 %v108, %v344
  %v474 = vmul.f32 %v109, %v348
  %v475 = vmul.f32 %v110, %v352
  %v476 = vmul.f32 %v111, %v356
  %v477 = vmul.f32 %v112, %v360
  %v478 = vmul.f32 %v113, %v364
  %v479 = vmul.f32 %v114, %v368
  %v480 = vmul.f32 %v115, %v372
  %v481 = vmul.f32 %v116, %v376
  %v482 = vmul.f32 %v117, %v380
  %v483 = vmul.f32 %v118, %v384
  %v484 = vmul.f32 %v119, %v344
  %v485 = vmul.f32 %v120, %v348
  %v486 = vmul.f32 %v121, %v352
  %v487 = vmul.f32 %v122, %v356
  %v488 = vmul.f32 %v123, %v360
  %v489 = vmul.f32 %v124, %v364
  %v490 = vmul.f32 %v125, %v368
  %v491 = vmul.f32 %v126, %v372
  %v492 = vmul.f32 %v127, %v376
  %v493 = vmul.f32 %v128, %v380
  %v494 = vmul.f32 %v129, %v384
  %v495 = vmul.f32 %v130, %v344
  %v496 = vmul.f32 %v131, %v348
  %v497 = vmul.f32 %v132, %v352
  %v498 = vmul.f32 %v133, %v356
  %v499 = vmul.f32 %v134, %v360
  %v500 = vmul.f32 %v135, %v364
  %v501 = vmul.f32 %v136, %v368
  %v502 = vmul.f32 %v137, %v372
  %v503 = vmul.f32 %v138, %v376
  %v504 = vmul.f32 %v139, %v380
  %v505 = vmul.f32 %v140, %v384
  %v506 = vmul.f32 %v141, %v344
  %v507 = vmul.f32 %v142, %v348
  %v508 = vmul.f32 %v143, %v352
  %v509 = vmul.f32 %v144, %v356
  %v510 = vmul.f32 %v145, %v360
  %v511 = vmul.f32 %v146, %v364
  %v512 = vmul.f32 %v147, %v368
  %v513 = vmul.f32 %v148, %v372
  %v514 = vmul.f32 %v149, %v376
  %v515 = vmul.f32 %v150, %v380
  %v516 = vmul.f32 %v151, %v384
  %v517 = vmul.f32 %v152, %v344
  %v518 = vmul.f32 %v153, %v348
  %v519 = vmul.f32 %v154, %v352
  %v520 = vmul.f32 %v155, %v356
  %v521 = vmul.f32 %v156, %v360
  %v522 = vmul.f32 %v157, %v364
  %v523 = vmul.f32 %v158, %v368
  %v524 = vmul.f32 %v159, %v372
  %v525 = vmul.f32 %v160, %v376
  %v526 = vmul.f32 %v161, %v380
  %v527 = vmul.f32 %v162, %v384
  %v528 = vmul.f32 %v163, %v344
  %v529 = vmul.f32 %v164, %v348
  %v530 = vmul.f32 %v165, %v352
  %v531 = vmul.f32 %v166, %v356
  %v532 = vmul.f32 %v167, %v360
  %v533 = vmul.f32 %v168, %v364
  %v534 = vmul.f32 %v169, %v368
  %v535 = vmul.f32 %v170, %v372
  %v536 = vmul.f32 %v171, %v376
  %v537 = vmul.f32 %v172, %v380
  %v538 = vmul.f32 %v173, %v384
  %v539 = vmul.f32 %v174, %v344
  %v540 = vmul.f32 %v175, %v348
  %v541 = vmul.f32 %v176, %v352
  %v542 = vmul.f32 %v177, %v356
  %v543 = vmul.f32 %v178, %v360
  %v544 = vmul.f32 %v179, %v364
  %v545 = vmul.f32 %v180, %v368
  %v546 = vmul.f32 %v181, %v372
  %v547 = vmul.f32 %v182, %v376
  %v548 = vmul.f32 %v183, %v380
  %v549 = vmul.f32 %v184, %v384
  %v550 = vmul.f32 %v185, %v344
  %v551 = vmul.f32 %v186, %v348
  %v552 = vmul.f32 %v187, %v352
  %v553 = vmul.f32 %v188, %v356
  %v554 = vmul.f32 %v189, %v360
  %v555 = vmul.f32 %v190, %v364
  %v556 = vmul.f32 %v191, %v368
  %v557 = vmul.f32 %v192, %v372
  %v558 = vmul.f32 %v193, %v376
  %v559 = vmul.f32 %v194, %v380
  %v560 = vmul.f32 %v195, %v384
  %v561 = vmul.f32 %v196, %v344
  %v562 = vmul.f32 %v197, %v348
  %v563 = vmul.f32 %v198, %v352
  %v564 = vmul.f32 %v199, %v356
  %v565 = vmul.f32 %v200, %v360
  %v566 = vmul.f32 %v201, %v364
  %v567 = vmul.f32 %v202, %v368
  %v568 = vmul.f32 %v203, %v372
  %v569 = vmul.f32 %v204, %v376
  %v570 = vmul.f32 %v205, %v380
  %v571 = vmul.f32 %v206, %v384
  %v572 = vmul.f32 %v207, %v344
  %v573 = vmul.f32 %v208, %v348
  %v574 = vmul.f32 %v209, %v352
  %v575 = vmul.f32 %v210, %v356
  %v576 = vmul.f32 %v211, %v360
  %v577 = vmul.f32 %v212, %v364
  %v578 = vmul.f32 %v213, %v368
  %v579 = vmul.f32 %v214, %v372
  %v580 = vmul.f32 %v215, %v376
  %v581 = vmul.f32 %v216, %v380
  %v582 = vmul.f32 %v217, %v384
  %v583 = vmul.f32 %v218, %v344
  %v584 = vmul.f32 %v219, %v348
  %v585 = vmul.f32 %v220, %v352
  %v586 = vmul.f32 %v221, %v356
  %v587 = vmul.f32 %v222, %v360
  %v588 = vmul.f32 %v223, %v364
  %v589 = vmul.f32 %v224, %v368
  %v590 = vmul.f32 %v225, %v372
  %v591 = vmul.f32 %v226, %v376
  %v592 = vmul.f32 %v227, %v380
  %v593 = vmul.f32 %v228, %v384
  %v594 = vmul.f32 %v229, %v344
  %v595 = vmul.f32 %v230, %v348
  %v596 = vmul.f32 %v231, %v352
  %v597 = vmul.f32 %v232, %v356
  %v598 = vmul.f32 %v233, %v360
  %v599 = vmul.f32 %v234, %v364
  %v600 = vmul.f32 %v235, %v368
  %v601 = vmul.f32 %v236, %v372
  %v602 = vmul.f32 %v237, %v376
  %v603 = vmul.f32 %v238, %v380
  %v604 = vmul.f32 %v239, %v384
  %v605 = vmul.f32 %v240, %v344
  %v606 = vmul.f32 %v241, %v348
  %v607 = vmul.f32 %v242, %v352
  %v608 = vmul.f32 %v243, %v356
  %v609 = vmul.f32 %v244, %v360
  %v610 = vmul.f32 %v245, %v364
  %v611 = vmul.f32 %v246, %v368
  %v612 = vmul.f32 %v247, %v372
  %v613 = vmul.f32 %v248, %v376
  %v614 = vmul.f32 %v249, %v380
  %v615 = vmul.f32 %v250, %v384
  %v616 = vmul.f32 %v251, %v344
  %v617 = vmul.f32 %v252, %v348
  %v618 = vmul.f32 %v253, %v352
  %v619 = vmul.f32 %v254, %v356
  %v620 = vmul.f32 %v255, %v360
  %v621 = vmul.f32 %v256, %v364
  %v622 = vmul.f32 %v257, %v368
  %v623 = vmul.f32 %v258, %v372
  %v624 = vmul.f32 %v259, %v376
  %v625 = vmul.f32 %v260, %v380
  %v626 = vmul.f32 %v261, %v384
  %v627 = vmul.f32 %v262, %v344
  %v628 = vmul.f32 %v263, %v348
  %v629 = vmul.f32 %v264, %v352
  %v630 = vmul.f32 %v265, %v356
  %v631 = vmul.f32 %v266, %v360
  %v632 = vmul.f32 %v267, %v364
  %v633 = vmul.f32 %v268, %v368
  %v634 = vmul.f32 %v269, %v372
  %v635 = vmul.f32 %v270, %v376
  %v636 = vmul.f32 %v271, %v380
  %v637 = vmul.f32 %v272, %v384
  %v638 = vmul.f32 %v273, %v344
  %v639 = vmul.f32 %v274, %v348
  %v640 = vmul.f32 %v275, %v352
  %v641 = vmul.f32 %v276, %v356
  %v642 = vmul.f32 %v277, %v360
  %v643 = vmul.f32 %v278, %v364
  %v644 = vmul.f32 %v279, %v368
  %v645 = vmul.f32 %v280, %v372
  %v646 = vmul.f32 %v281, %v376
  %v647 = vmul.f32 %v282, %v380
  %v648 = vmul.f32 %v283, %v384
  %v649 = vmul.f32 %v284, %v344
  %v650 = vmul.f32 %v285, %v348
  %v651 = vmul.f32 %v286, %v352
  %v652 = vmul.f32 %v287, %v356
  %v653 = vmul.f32 %v288, %v360
  %v654 = vmul.f32 %v289, %v364
  %v655 = vmul.f32 %v290, %v368
  %v656 = vmul.f32 %v291, %v372
  %v657 = vmul.f32 %v292, %v376
  %v658 = vmul.f32 %v293, %v380
  %v659 = vmul.f32 %v294, %v384
  %v660 = vmul.f32 %v295, %v344
  %v661 = vmul.f32 %v296, %v348
  %v662 = vmul.f32 %v297, %v352
  %v663 = vmul.f32 %v298, %v356
  %v664 = vmul.f32 %v299, %v360
  %v665 = vmul.f32 %v300, %v364
  %v666 = vmul.f32 %v301, %v368
  %v667 = vmul.f32 %v302, %v372
  %v668 = vmul.f32 %v303, %v376
  %v669 = vmul.f32 %v304, %v380
  %v670 = vmul.f32 %v305, %v384
  %v671 = vmul.f32 %v306, %v344
  %v672 = vmul.f32 %v307, %v348
  %v673 = vmul.f32 %v308, %v352
  %v674 = vmul.f32 %v309, %v356
  %v675 = vmul.f32 %v310, %v360
  %v676 = vmul.f32 %v311, %v364
  %v677 = vmul.f32 %v312, %v368
  %v678 = vmul.f32 %v313, %v372
  %v679 = vmul.f32 %v314, %v376
  %v680 = vmul.f32 %v315, %v380
  %v681 = vmul.f32 %v316, %v384
  %v682 = vmul.f32 %v317, %v344
  %v683 = vmul.f32 %v318, %v348
  %v684 = vmul.f32 %v319, %v352
  %v685 = vmul.f32 %v320, %v356
  %v686 = vmul.f32 %v321, %v360
  %v687 = vmul.f32 %v322, %v364
  %v688 = vmul.f32 %v323, %v368
  %v689 = vmul.f32 %v324, %v372
  %v690 = vmul.f32 %v325, %v376
  %v691 = vmul.f32 %v326, %v380
  %v692 = vmul.f32 %v327, %v384
  %v693 = vmul.f32 %v328, %v344
  %v694 = vmul.f32 %v329, %v348
  %v695 = vmul.f32 %v330, %v352
  %v696 = vmul.f32 %v331, %v356
  %v697 = vmul.f32 %v332, %v360
  %v698 = vmul.f32 %v333, %v364
  %v699 = vmul.f32 %v334, %v368
  %v700 = vmul.f32 %v335, %v372
  %v701 = vmul.f32 %v336, %v376
  %v702 = vmul.f32 %v337, %v380
  %v703 = vmul.f32 %v338, %v384
  %v704 = vld [vmem:[%s2] sm:$0xff]
  %v705 = vld [vmem:[%s2 + $0x8] sm:$0xff]
  %v706 = vld [vmem:[%s2 + $0x10] sm:$0xff]
  %v707 = vld [vmem:[%s2 + $0x18] sm:$0xff]
  %v708 = vld [vmem:[%s2 + $0x20] sm:$0xff]
  %v709 = vld [vmem:[%s2 + $0x28] sm:$0xff]
  %v710 = vld [vmem:[%s2 + $0x30] sm:$0xff]
  %v711 = vld [vmem:[%s2 + $0x38] sm:$0xff]
  %v712 = vld [vmem:[%s2 + $0x40] sm:$0xff]
  %v713 = vld [vmem:[%s2 + $0x48] sm:$0xff]
  %v714 = vld [vmem:[%s2 + $0x50] sm:$0xff]
  %v715 = vld [vmem:[%s2 + $0x58] sm:$0xff]
  %v716 = vld [vmem:[%s2 + $0x60] sm:$0xff]
  %v717 = vld [vmem:[%s2 + $0x68] sm:$0xff]
  %v718 = vld [vmem:[%s2 + $0x70] sm:$0xff]
  %v719 = vld [vmem:[%s2 + $0x78] sm:$0xff]
  %v720 = vld [vmem:[%s2 + $0x80] sm:$0xff]
  %v721 = vld [vmem:[%s2 + $0x88] sm:$0xff]
  %v722 = vld [vmem:[%s2 + $0x90] sm:$0xff]
  %v723 = vld [vmem:[%s2 + $0x98] sm:$0xff]
  %v724 = vld [vmem:[%s2 + $0xa0] sm:$0xff]
  %v725 = vld [vmem:[%s2 + $0xa8] sm:$0xff]
  %v726 = vld [vmem:[%s2 + $0xb0] sm:$0xff]
  %v727 = vld [vmem:[%s2 + $0xb8] sm:$0xff]
  %v728 = vld [vmem:[%s2 + $0xc0] sm:$0xff]
  %v729 = vld [vmem:[%s2 + $0xc8] sm:$0xff]
  %v730 = vld [vmem:[%s2 + $0xd0] sm:$0xff]
  %v731 = vld [vmem:[%s2 + $0xd8] sm:$0xff]
  %v732 = vld [vmem:[%s2 + $0xe0] sm:$0xff]
  %v733 = vld [vmem:[%s2 + $0xe8] sm:$0xff]
  %v734 = vld [vmem:[%s2 + $0xf0] sm:$0xff]
  %v735 = vld [vmem:[%s2 + $0xf8] sm:$0xff]
  %v736 = vld [vmem:[%s2 + $0x100] sm:$0xff]
  %v737 = vld [vmem:[%s2 + $0x108] sm:$0xff]
  %v738 = vld [vmem:[%s2 + $0x110] sm:$0xff]
  %v739 = vld [vmem:[%s2 + $0x118] sm:$0xff]
  %v740 = vld [vmem:[%s2 + $0x120] sm:$0xff]
  %v741 = vld [vmem:[%s2 + $0x128] sm:$0xff]
  %v742 = vld [vmem:[%s2 + $0x130] sm:$0xff]
  %v743 = vld [vmem:[%s2 + $0x138] sm:$0xff]
  %v744 = vld [vmem:[%s2 + $0x140] sm:$0xff]
  %v745 = vld [vmem:[%s2 + $0x148] sm:$0xff]
  %v746 = vld [vmem:[%s2 + $0x150] sm:$0xff]
  %v747 = vld [vmem:[%s2 + $0x158] sm:$0xff]
  %v748 = vld [vmem:[%s2 + $0x160] sm:$0xff]
  %v749 = vld [vmem:[%s2 + $0x168] sm:$0xff]
  %v750 = vld [vmem:[%s2 + $0x170] sm:$0xff]
  %v751 = vld [vmem:[%s2 + $0x178] sm:$0xff]
  %v752 = vld [vmem:[%s2 + $0x180] sm:$0xff]
  %v753 = vld [vmem:[%s2 + $0x188] sm:$0xff]
  %v754 = vld [vmem:[%s2 + $0x190] sm:$0xff]
  %v755 = vld [vmem:[%s2 + $0x198] sm:$0xff]
  %v756 = vld [vmem:[%s2 + $0x1a0] sm:$0xff]
  %v757 = vld [vmem:[%s2 + $0x1a8] sm:$0xff]
  %v758 = vld [vmem:[%s2 + $0x1b0] sm:$0xff]
  %v759 = vld [vmem:[%s2 + $0x1b8] sm:$0xff]
  %v760 = vld [vmem:[%s2 + $0x1c0] sm:$0xff]
  %v761 = vld [vmem:[%s2 + $0x1c8] sm:$0xff]
  %v762 = vld [vmem:[%s2 + $0x1d0] sm:$0xff]
  %v763 = vld [vmem:[%s2 + $0x1d8] sm:$0xff]
  %v764 = vld [vmem:[%s2 + $0x1e0] sm:$0xff]
  %v765 = vld [vmem:[%s2 + $0x1e8] sm:$0xff]
  %v766 = vld [vmem:[%s2 + $0x1f0] sm:$0xff]
  %v767 = vld [vmem:[%s2 + $0x1f8] sm:$0xff]
  %v768 = vld [vmem:[%s2 + $0x200] sm:$0xff]
  %v769 = vld [vmem:[%s2 + $0x208] sm:$0xff]
  %v770 = vld [vmem:[%s2 + $0x210] sm:$0xff]
  %v771 = vld [vmem:[%s2 + $0x218] sm:$0xff]
  %v772 = vld [vmem:[%s2 + $0x220] sm:$0xff]
  %v773 = vld [vmem:[%s2 + $0x228] sm:$0xff]
  %v774 = vld [vmem:[%s2 + $0x230] sm:$0xff]
  %v775 = vld [vmem:[%s2 + $0x238] sm:$0xff]
  %v776 = vld [vmem:[%s2 + $0x240] sm:$0xff]
  %v777 = vld [vmem:[%s2 + $0x248] sm:$0xff]
  %v778 = vld [vmem:[%s2 + $0x250] sm:$0xff]
  %v779 = vld [vmem:[%s2 + $0x258] sm:$0xff]
  %v780 = vld [vmem:[%s2 + $0x260] sm:$0xff]
  %v781 = vld [vmem:[%s2 + $0x268] sm:$0xff]
  %v782 = vld [vmem:[%s2 + $0x270] sm:$0xff]
  %v783 = vld [vmem:[%s2 + $0x278] sm:$0xff]
  %v784 = vld [vmem:[%s2 + $0x280] sm:$0xff]
  %v785 = vld [vmem:[%s2 + $0x288] sm:$0xff]
  %v786 = vld [vmem:[%s2 + $0x290] sm:$0xff]
  %v787 = vld [vmem:[%s2 + $0x298] sm:$0xff]
  %v788 = vld [vmem:[%s2 + $0x2a0] sm:$0xff]
  %v789 = vld [vmem:[%s2 + $0x2a8] sm:$0xff]
  %v790 = vld [vmem:[%s2 + $0x2b0] sm:$0xff]
  %v791 = vld [vmem:[%s2 + $0x2b8] sm:$0xff]
  %v792 = vld [vmem:[%s2 + $0x2c0] sm:$0xff]
  %v793 = vld [vmem:[%s2 + $0x2c8] sm:$0xff]
  %v794 = vld [vmem:[%s2 + $0x2d0] sm:$0xff]
  %v795 = vld [vmem:[%s2 + $0x2d8] sm:$0xff]
  %v796 = vld [vmem:[%s2 + $0x2e0] sm:$0xff]
  %v797 = vld [vmem:[%s2 + $0x2e8] sm:$0xff]
  %v798 = vld [vmem:[%s2 + $0x2f0] sm:$0xff]
  %v799 = vld [vmem:[%s2 + $0x2f8] sm:$0xff]
  %v800 = vld [vmem:[%s2 + $0x300] sm:$0xff]
  %v801 = vld [vmem:[%s2 + $0x308] sm:$0xff]
  %v802 = vld [vmem:[%s2 + $0x310] sm:$0xff]
  %v803 = vld [vmem:[%s2 + $0x318] sm:$0xff]
  %v804 = vld [vmem:[%s2 + $0x320] sm:$0xff]
  %v805 = vld [vmem:[%s2 + $0x328] sm:$0xff]
  %v806 = vld [vmem:[%s2 + $0x330] sm:$0xff]
  %v807 = vld [vmem:[%s2 + $0x338] sm:$0xff]
  %v808 = vld [vmem:[%s2 + $0x340] sm:$0xff]
  %v809 = vld [vmem:[%s2 + $0x348] sm:$0xff]
  %v810 = vld [vmem:[%s2 + $0x350] sm:$0xff]
  %v811 = vld [vmem:[%s2 + $0x358] sm:$0xff]
  %v812 = vld [vmem:[%s2 + $0x360] sm:$0xff]
  %v813 = vld [vmem:[%s2 + $0x368] sm:$0xff]
  %v814 = vld [vmem:[%s2 + $0x370] sm:$0xff]
  %v815 = vld [vmem:[%s2 + $0x378] sm:$0xff]
  %v816 = vld [vmem:[%s2 + $0x380] sm:$0xff]
  %v817 = vld [vmem:[%s2 + $0x388] sm:$0xff]
  %v818 = vld [vmem:[%s2 + $0x390] sm:$0xff]
  %v819 = vld [vmem:[%s2 + $0x398] sm:$0xff]
  %v820 = vld [vmem:[%s2 + $0x3a0] sm:$0xff]
  %v821 = vld [vmem:[%s2 + $0x3a8] sm:$0xff]
  %v822 = vld [vmem:[%s2 + $0x3b0] sm:$0xff]
  %v823 = vld [vmem:[%s2 + $0x3b8] sm:$0xff]
  %v824 = vld [vmem:[%s2 + $0x3c0] sm:$0xff]
  %v825 = vld [vmem:[%s2 + $0x3c8] sm:$0xff]
  %v826 = vld [vmem:[%s2 + $0x3d0] sm:$0xff]
  %v827 = vld [vmem:[%s2 + $0x3d8] sm:$0xff]
  %v828 = vld [vmem:[%s2 + $0x3e0] sm:$0xff]
  %v829 = vld [vmem:[%s2 + $0x3e8] sm:$0xff]
  %v830 = vld [vmem:[%s2 + $0x3f0] sm:$0xff]
  %v831 = vld [vmem:[%s2 + $0x3f8] sm:$0xff]
  %v832 = vld [vmem:[%s2 + $0x400] sm:$0xff]
  %v833 = vld [vmem:[%s2 + $0x408] sm:$0xff]
  %v834 = vld [vmem:[%s2 + $0x410] sm:$0xff]
  %v835 = vld [vmem:[%s2 + $0x418] sm:$0xff]
  %v836 = vld [vmem:[%s2 + $0x420] sm:$0xff]
  %v837 = vld [vmem:[%s2 + $0x428] sm:$0xff]
  %v838 = vld [vmem:[%s2 + $0x430] sm:$0xff]
  %v839 = vld [vmem:[%s2 + $0x438] sm:$0xff]
  %v840 = vld [vmem:[%s2 + $0x440] sm:$0xff]
  %v841 = vld [vmem:[%s2 + $0x448] sm:$0xff]
  %v842 = vld [vmem:[%s2 + $0x450] sm:$0xff]
  %v843 = vld [vmem:[%s2 + $0x458] sm:$0xff]
  %v844 = vld [vmem:[%s2 + $0x460] sm:$0xff]
  %v845 = vld [vmem:[%s2 + $0x468] sm:$0xff]
  %v846 = vld [vmem:[%s2 + $0x470] sm:$0xff]
  %v847 = vld [vmem:[%s2 + $0x478] sm:$0xff]
  %v848 = vld [vmem:[%s2 + $0x480] sm:$0xff]
  %v849 = vld [vmem:[%s2 + $0x488] sm:$0xff]
  %v850 = vld [vmem:[%s2 + $0x490] sm:$0xff]
  %v851 = vld [vmem:[%s2 + $0x498] sm:$0xff]
  %v852 = vld [vmem:[%s2 + $0x4a0] sm:$0xff]
  %v853 = vld [vmem:[%s2 + $0x4a8] sm:$0xff]
  %v854 = vld [vmem:[%s2 + $0x4b0] sm:$0xff]
  %v855 = vld [vmem:[%s2 + $0x4b8] sm:$0xff]
  %v856 = vld [vmem:[%s2 + $0x4c0] sm:$0xff]
  %v857 = vld [vmem:[%s2 + $0x4c8] sm:$0xff]
  %v858 = vld [vmem:[%s2 + $0x4d0] sm:$0xff]
  %v859 = vld [vmem:[%s2 + $0x4d8] sm:$0xff]
  %v860 = vld [vmem:[%s2 + $0x4e0] sm:$0xff]
  %v861 = vld [vmem:[%s2 + $0x4e8] sm:$0xff]
  %v862 = vld [vmem:[%s2 + $0x4f0] sm:$0xff]
  %v863 = vld [vmem:[%s2 + $0x4f8] sm:$0xff]
  %v864 = vld [vmem:[%s2 + $0x500] sm:$0xff]
  %v865 = vld [vmem:[%s2 + $0x508] sm:$0xff]
  %v866 = vld [vmem:[%s2 + $0x510] sm:$0xff]
  %v867 = vld [vmem:[%s2 + $0x518] sm:$0xff]
  %v868 = vld [vmem:[%s2 + $0x520] sm:$0xff]
  %v869 = vld [vmem:[%s2 + $0x528] sm:$0xff]
  %v870 = vld [vmem:[%s2 + $0x530] sm:$0xff]
  %v871 = vld [vmem:[%s2 + $0x538] sm:$0xff]
  %v872 = vld [vmem:[%s2 + $0x540] sm:$0xff]
  %v873 = vld [vmem:[%s2 + $0x548] sm:$0xff]
  %v874 = vld [vmem:[%s2 + $0x550] sm:$0xff]
  %v875 = vld [vmem:[%s2 + $0x558] sm:$0xff]
  %v876 = vld [vmem:[%s2 + $0x560] sm:$0xff]
  %v877 = vld [vmem:[%s2 + $0x568] sm:$0xff]
  %v878 = vld [vmem:[%s2 + $0x570] sm:$0xff]
  %v879 = vld [vmem:[%s2 + $0x578] sm:$0xff]
  %v880 = vld [vmem:[%s2 + $0x580] sm:$0xff]
  %v881 = vld [vmem:[%s2 + $0x588] sm:$0xff]
  %v882 = vld [vmem:[%s2 + $0x590] sm:$0xff]
  %v883 = vld [vmem:[%s2 + $0x598] sm:$0xff]
  %v884 = vld [vmem:[%s2 + $0x5a0] sm:$0xff]
  %v885 = vld [vmem:[%s2 + $0x5a8] sm:$0xff]
  %v886 = vld [vmem:[%s2 + $0x5b0] sm:$0xff]
  %v887 = vld [vmem:[%s2 + $0x5b8] sm:$0xff]
  %v888 = vld [vmem:[%s2 + $0x5c0] sm:$0xff]
  %v889 = vld [vmem:[%s2 + $0x5c8] sm:$0xff]
  %v890 = vld [vmem:[%s2 + $0x5d0] sm:$0xff]
  %v891 = vld [vmem:[%s2 + $0x5d8] sm:$0xff]
  %v892 = vld [vmem:[%s2 + $0x5e0] sm:$0xff]
  %v893 = vld [vmem:[%s2 + $0x5e8] sm:$0xff]
  %v894 = vld [vmem:[%s2 + $0x5f0] sm:$0xff]
  %v895 = vld [vmem:[%s2 + $0x5f8] sm:$0xff]
  %v896 = vld [vmem:[%s2 + $0x600] sm:$0xff]
  %v897 = vld [vmem:[%s2 + $0x608] sm:$0xff]
  %v898 = vld [vmem:[%s2 + $0x610] sm:$0xff]
  %v899 = vld [vmem:[%s2 + $0x618] sm:$0xff]
  %v900 = vld [vmem:[%s2 + $0x620] sm:$0xff]
  %v901 = vld [vmem:[%s2 + $0x628] sm:$0xff]
  %v902 = vld [vmem:[%s2 + $0x630] sm:$0xff]
  %v903 = vld [vmem:[%s2 + $0x638] sm:$0xff]
  %v904 = vld [vmem:[%s2 + $0x640] sm:$0xff]
  %v905 = vld [vmem:[%s2 + $0x648] sm:$0xff]
  %v906 = vld [vmem:[%s2 + $0x650] sm:$0xff]
  %v907 = vld [vmem:[%s2 + $0x658] sm:$0xff]
  %v908 = vld [vmem:[%s2 + $0x660] sm:$0xff]
  %v909 = vld [vmem:[%s2 + $0x668] sm:$0xff]
  %v910 = vld [vmem:[%s2 + $0x670] sm:$0xff]
  %v911 = vld [vmem:[%s2 + $0x678] sm:$0xff]
  %v912 = vld [vmem:[%s2 + $0x680] sm:$0xff]
  %v913 = vld [vmem:[%s2 + $0x688] sm:$0xff]
  %v914 = vld [vmem:[%s2 + $0x690] sm:$0xff]
  %v915 = vld [vmem:[%s2 + $0x698] sm:$0xff]
  %v916 = vld [vmem:[%s2 + $0x6a0] sm:$0xff]
  %v917 = vld [vmem:[%s2 + $0x6a8] sm:$0xff]
  %v918 = vld [vmem:[%s2 + $0x6b0] sm:$0xff]
  %v919 = vld [vmem:[%s2 + $0x6b8] sm:$0xff]
  %v920 = vld [vmem:[%s2 + $0x6c0] sm:$0xff]
  %v921 = vld [vmem:[%s2 + $0x6c8] sm:$0xff]
  %v922 = vld [vmem:[%s2 + $0x6d0] sm:$0xff]
  %v923 = vld [vmem:[%s2 + $0x6d8] sm:$0xff]
  %v924 = vld [vmem:[%s2 + $0x6e0] sm:$0xff]
  %v925 = vld [vmem:[%s2 + $0x6e8] sm:$0xff]
  %v926 = vld [vmem:[%s2 + $0x6f0] sm:$0xff]
  %v927 = vld [vmem:[%s2 + $0x6f8] sm:$0xff]
  %v928 = vld [vmem:[%s2 + $0x700] sm:$0xff]
  %v929 = vld [vmem:[%s2 + $0x708] sm:$0xff]
  %v930 = vld [vmem:[%s2 + $0x710] sm:$0xff]
  %v931 = vld [vmem:[%s2 + $0x718] sm:$0xff]
  %v932 = vld [vmem:[%s2 + $0x720] sm:$0xff]
  %v933 = vld [vmem:[%s2 + $0x728] sm:$0xff]
  %v934 = vld [vmem:[%s2 + $0x730] sm:$0xff]
  %v935 = vld [vmem:[%s2 + $0x738] sm:$0xff]
  %v936 = vld [vmem:[%s2 + $0x740] sm:$0xff]
  %v937 = vld [vmem:[%s2 + $0x748] sm:$0xff]
  %v938 = vld [vmem:[%s2 + $0x750] sm:$0xff]
  %v939 = vld [vmem:[%s2 + $0x758] sm:$0xff]
  %v940 = vld [vmem:[%s2 + $0x760] sm:$0xff]
  %v941 = vld [vmem:[%s2 + $0x768] sm:$0xff]
  %v942 = vld [vmem:[%s2 + $0x770] sm:$0xff]
  %v943 = vld [vmem:[%s2 + $0x778] sm:$0xff]
  %v944 = vld [vmem:[%s2 + $0x780] sm:$0xff]
  %v945 = vld [vmem:[%s2 + $0x788] sm:$0xff]
  %v946 = vld [vmem:[%s2 + $0x790] sm:$0xff]
  %v947 = vld [vmem:[%s2 + $0x798] sm:$0xff]
  %v948 = vld [vmem:[%s2 + $0x7a0] sm:$0xff]
  %v949 = vld [vmem:[%s2 + $0x7a8] sm:$0xff]
  %v950 = vld [vmem:[%s2 + $0x7b0] sm:$0xff]
  %v951 = vld [vmem:[%s2 + $0x7b8] sm:$0xff]
  %v952 = vld [vmem:[%s2 + $0x7c0] sm:$0xff]
  %v953 = vld [vmem:[%s2 + $0x7c8] sm:$0xff]
  %v954 = vld [vmem:[%s2 + $0x7d0] sm:$0xff]
  %v955 = vld [vmem:[%s2 + $0x7d8] sm:$0xff]
  %v956 = vld [vmem:[%s2 + $0x7e0] sm:$0xff]
  %v957 = vld [vmem:[%s2 + $0x7e8] sm:$0xff]
  %v958 = vld [vmem:[%s2 + $0x7f0] sm:$0xff]
  %v959 = vld [vmem:[%s2 + $0x7f8] sm:$0xff]
  %v960 = vld [vmem:[%s2 + $0x800] sm:$0xff]
  %v961 = vld [vmem:[%s2 + $0x808] sm:$0xff]
  %v962 = vld [vmem:[%s2 + $0x810] sm:$0xff]
  %v963 = vld [vmem:[%s2 + $0x818] sm:$0xff]
  %v964 = vld [vmem:[%s2 + $0x820] sm:$0xff]
  %v965 = vld [vmem:[%s2 + $0x828] sm:$0xff]
  %v966 = vld [vmem:[%s2 + $0x830] sm:$0xff]
  %v967 = vld [vmem:[%s2 + $0x838] sm:$0xff]
  %v968 = vld [vmem:[%s2 + $0x840] sm:$0xff]
  %v969 = vld [vmem:[%s2 + $0x848] sm:$0xff]
  %v970 = vld [vmem:[%s2 + $0x850] sm:$0xff]
  %v971 = vld [vmem:[%s2 + $0x858] sm:$0xff]
  %v972 = vld [vmem:[%s2 + $0x860] sm:$0xff]
  %v973 = vld [vmem:[%s2 + $0x868] sm:$0xff]
  %v974 = vld [vmem:[%s2 + $0x870] sm:$0xff]
  %v975 = vld [vmem:[%s2 + $0x878] sm:$0xff]
  %v976 = vld [vmem:[%s2 + $0x880] sm:$0xff]
  %v977 = vld [vmem:[%s2 + $0x888] sm:$0xff]
  %v978 = vld [vmem:[%s2 + $0x890] sm:$0xff]
  %v979 = vld [vmem:[%s2 + $0x898] sm:$0xff]
  %v980 = vld [vmem:[%s2 + $0x8a0] sm:$0xff]
  %v981 = vld [vmem:[%s2 + $0x8a8] sm:$0xff]
  %v982 = vld [vmem:[%s2 + $0x8b0] sm:$0xff]
  %v983 = vld [vmem:[%s2 + $0x8b8] sm:$0xff]
  %v984 = vld [vmem:[%s2 + $0x8c0] sm:$0xff]
  %v985 = vld [vmem:[%s2 + $0x8c8] sm:$0xff]
  %v986 = vld [vmem:[%s2 + $0x8d0] sm:$0xff]
  %v987 = vld [vmem:[%s2 + $0x8d8] sm:$0xff]
  %v988 = vld [vmem:[%s2 + $0x8e0] sm:$0xff]
  %v989 = vld [vmem:[%s2 + $0x8e8] sm:$0xff]
  %v990 = vld [vmem:[%s2 + $0x8f0] sm:$0xff]
  %v991 = vld [vmem:[%s2 + $0x8f8] sm:$0xff]
  %v992 = vld [vmem:[%s2 + $0x900] sm:$0xff]
  %v993 = vld [vmem:[%s2 + $0x908] sm:$0xff]
  %v994 = vld [vmem:[%s2 + $0x910] sm:$0xff]
  %v995 = vld [vmem:[%s2 + $0x918] sm:$0xff]
  %v996 = vld [vmem:[%s2 + $0x920] sm:$0xff]
  %v997 = vld [vmem:[%s2 + $0x928] sm:$0xff]
  %v998 = vld [vmem:[%s2 + $0x930] sm:$0xff]
  %v999 = vld [vmem:[%s2 + $0x938] sm:$0xff]
  %v1000 = vld [vmem:[%s2 + $0x940] sm:$0xff]
  %v1001 = vld [vmem:[%s2 + $0x948] sm:$0xff]
  %v1002 = vld [vmem:[%s2 + $0x950] sm:$0xff]
  %v1003 = vld [vmem:[%s2 + $0x958] sm:$0xff]
  %v1004 = vld [vmem:[%s2 + $0x960] sm:$0xff]
  %v1005 = vld [vmem:[%s2 + $0x968] sm:$0xff]
  %v1006 = vld [vmem:[%s2 + $0x970] sm:$0xff]
  %v1007 = vld [vmem:[%s2 + $0x978] sm:$0xff]
  %v1008 = vld [vmem:[%s2 + $0x980] sm:$0xff]
  %v1009 = vld [vmem:[%s2 + $0x988] sm:$0xff]
  %v1010 = vld [vmem:[%s2 + $0x990] sm:$0xff]
  %v1011 = vld [vmem:[%s2 + $0x998] sm:$0xff]
  %v1012 = vld [vmem:[%s2 + $0x9a0] sm:$0xff]
  %v1013 = vld [vmem:[%s2 + $0x9a8] sm:$0xff]
  %v1014 = vld [vmem:[%s2 + $0x9b0] sm:$0xff]
  %v1015 = vld [vmem:[%s2 + $0x9b8] sm:$0xff]
  %v1016 = vld [vmem:[%s2 + $0x9c0] sm:$0xff]
  %v1017 = vld [vmem:[%s2 + $0x9c8] sm:$0xff]
  %v1018 = vld [vmem:[%s2 + $0x9d0] sm:$0xff]
  %v1019 = vld [vmem:[%s2 + $0x9d8] sm:$0xff]
  %v1020 = vld [vmem:[%s2 + $0x9e0] sm:$0xff]
  %v1021 = vld [vmem:[%s2 + $0x9e8] sm:$0xff]
  %v1022 = vld [vmem:[%s2 + $0x9f0] sm:$0xff]
  %v1023 = vld [vmem:[%s2 + $0x9f8] sm:$0xff]
  %v1024 = vld [vmem:[%s2 + $0xa00] sm:$0xff]
  %v1025 = vld [vmem:[%s2 + $0xa08] sm:$0xff]
  %v1026 = vld [vmem:[%s2 + $0xa10] sm:$0xff]
  %v1027 = vld [vmem:[%s2 + $0xa18] sm:$0xff]
  %v1028 = vld [vmem:[%s2 + $0xa20] sm:$0xff]
  %v1029 = vld [vmem:[%s2 + $0xa28] sm:$0xff]
  %v1030 = vld [vmem:[%s2 + $0xa30] sm:$0xff]
  %v1031 = vld [vmem:[%s2 + $0xa38] sm:$0xff]
  %v1032 = vld [vmem:[%s2 + $0xa40] sm:$0xff]
  %v1033 = vld [vmem:[%s2 + $0xa48] sm:$0xff]
  %v1034 = vld [vmem:[%s2 + $0xa50] sm:$0xff]
  %v1035 = vld [vmem:[%s2 + $0xa58] sm:$0xff]
  %v1036 = vld [vmem:[%s2 + $0xa60] sm:$0xff]
  %v1037 = vld [vmem:[%s2 + $0xa68] sm:$0xff]
  %v1038 = vld [vmem:[%s2 + $0xa70] sm:$0xff]
  %v1039 = vld [vmem:[%s2 + $0xa78] sm:$0xff]
  %vm1040 = vcmask 523264
  %v1042 = vsel %vm1040, %v406, 0
  %v1045 = vsel %vm1040, %v417, 0
  %v1048 = vsel %vm1040, %v428, 0
  %v1051 = vsel %vm1040, %v439, 0
  %v1054 = vsel %vm1040, %v450, 0
  %v1057 = vsel %vm1040, %v461, 0
  %v1060 = vsel %vm1040, %v472, 0
  %v1063 = vsel %vm1040, %v483, 0
  %v1066 = vsel %vm1040, %v494, 0
  %v1069 = vsel %vm1040, %v505, 0
  %v1072 = vsel %vm1040, %v516, 0
  %v1075 = vsel %vm1040, %v527, 0
  %v1078 = vsel %vm1040, %v538, 0
  %v1081 = vsel %vm1040, %v549, 0
  %v1084 = vsel %vm1040, %v560, 0
  %v1087 = vsel %vm1040, %v571, 0
  %v1090 = vsel %vm1040, %v582, 0
  %v1093 = vsel %vm1040, %v593, 0
  %v1096 = vsel %vm1040, %v604, 0
  %v1099 = vsel %vm1040, %v615, 0
  %v1102 = vsel %vm1040, %v626, 0
  %v1105 = vsel %vm1040, %v637, 0
  %v1108 = vsel %vm1040, %v648, 0
  %v1111 = vsel %vm1040, %v659, 0
  %v1114 = vsel %vm1040, %v670, 0
  %v1117 = vsel %vm1040, %v681, 0
  %v1120 = vsel %vm1040, %v692, 0
  %v1123 = vsel %vm1040, %v703, 0
  %1125 = vmatprep.subr.mxu0 %v705
  %1126 = vmatpush1.msra.mxu0 %v704
  %1127 = vmatprep.subr.mxu0 %v707
  %1128 = vmatpush1.msra.mxu0 %v706
  %1129 = vmatprep.subr.mxu0 %v709
  %1130 = vmatpush1.msra.mxu0 %v708
  %1131 = vmatprep.subr.mxu0 %v711
  %1132 = vmatpush1.msra.mxu0 %v710
  %1133 = vmatprep.subr.mxu0 %v713
  %1134 = vmatpush1.msra.mxu0 %v712
  %1135 = vmatprep.subr.mxu0 %v715
  %1136 = vmatpush1.msra.mxu0 %v714
  %1137 = vmatprep.subr.mxu0 %v717
  %1138 = vmatpush1.msra.mxu0 %v716
  %1139 = vmatprep.subr.mxu0 %v719
  %1140 = vmatpush1.msra.mxu0 %v718
  %1141 = vmatprep.subr.mxu0 %v721
  %1142 = vmatpush1.msra.mxu0 %v720
  %1143 = vmatprep.subr.mxu0 %v723
  %1144 = vmatpush1.msra.mxu0 %v722
  %1145 = vmatprep.subr.mxu0 %v725
  %1146 = vmatpush1.msra.mxu0 %v724
  %1147 = vmatprep.subr.mxu0 %v727
  %1148 = vmatpush1.msra.mxu0 %v726
  %1149 = vmatprep.subr.mxu0 %v729
  %1150 = vmatpush1.msra.mxu0 %v728
  %1151 = vmatprep.subr.mxu0 %v731
  %1152 = vmatpush1.msra.mxu0 %v730
  %1153 = vmatprep.subr.mxu0 %v733
  %1154 = vmatpush1.msra.mxu0 %v732
  %1155 = vmatprep.subr.mxu0 %v735
  %1156 = vmatpush1.msra.mxu0 %v734
  %1157 = vmatprep.subr.mxu0 %v737
  %1158 = vmatpush1.msra.mxu0 %v736
  %1159 = vmatprep.subr.mxu0 %v739
  %1160 = vmatpush1.msra.mxu0 %v738
  %1161 = vmatprep.subr.mxu0 %v741
  %1162 = vmatpush1.msra.mxu0 %v740
  %1163 = vmatprep.subr.mxu0 %v743
  %1164 = vmatpush1.msra.mxu0 %v742
  %1165 = vmatprep.subr.mxu0 %v745
  %1166 = vmatpush1.msra.mxu0 %v744
  %1167 = vmatprep.subr.mxu0 %v747
  %1168 = vmatpush1.msra.mxu0 %v746
  %1169 = vmatprep.subr.mxu0 %v749
  %1170 = vmatpush1.msra.mxu0 %v748
  %1171 = vmatprep.subr.mxu0 %v751
  %1172 = vmatpush1.msra.mxu0 %v750
  %1173 = vmatprep.subr.mxu0 %v753
  %1174 = vmatpush1.msra.mxu0 %v752
  %1175 = vmatprep.subr.mxu0 %v755
  %1176 = vmatpush1.msra.mxu0 %v754
  %1177 = vmatprep.subr.mxu0 %v757
  %1178 = vmatpush1.msra.mxu0 %v756
  %1179 = vmatprep.subr.mxu0 %v759
  %1180 = vmatpush1.msra.mxu0 %v758
  %1181 = vmatprep.subr.mxu0 %v761
  %1182 = vmatpush1.msra.mxu0 %v760
  %1183 = vmatprep.subr.mxu0 %v763
  %1184 = vmatpush1.msra.mxu0 %v762
  %1185 = vmatprep.subr.mxu0 %v765
  %1186 = vmatpush1.msra.mxu0 %v764
  %1187 = vmatprep.subr.mxu0 %v767
  %1188 = vmatpush1.msra.mxu0 %v766
  %1189 = vmatprep.mubr.f32.mxu0 %v397
  %1190 = vmatmul.mubr.f32.gmra.mrb[0].mxu0 %v396
  %v1191 = vpop.f32.mrb[0].mxu0
  %v1192 = vadd.f32 0.0, %v1191
  %v1193 = vpop.f32.mrb[0].mxu0
  %v1194 = vadd.f32 0.0, %v1193
  %1195 = vmatprep.mubr.f32.mxu0 %v408
  %1196 = vmatmul.mubr.f32.gmra.mrb[0].mxu0 %v407
  %v1197 = vpop.f32.mrb[0].mxu0
  %v1198 = vadd.f32 0.0, %v1197
  %v1199 = vpop.f32.mrb[0].mxu0
  %v1200 = vadd.f32 0.0, %v1199
  %1201 = vmatprep.mubr.f32.mxu0 %v419
  %1202 = vmatmul.mubr.f32.gmra.mrb[0].mxu0 %v418
  %v1203 = vpop.f32.mrb[0].mxu0
  %v1204 = vadd.f32 0.0, %v1203
  %v1205 = vpop.f32.mrb[0].mxu0
  %v1206 = vadd.f32 0.0, %v1205
  %1207 = vmatprep.mubr.f32.mxu0 %v430
  %1208 = vmatmul.mubr.f32.gmra.mrb[0].mxu0 %v429
  %v1209 = vpop.f32.mrb[0].mxu0
  %v1210 = vadd.f32 0.0, %v1209
  %v1211 = vpop.f32.mrb[0].mxu0
  %v1212 = vadd.f32 0.0, %v1211
  %1213 = vmatprep.mubr.f32.mxu0 %v441
  %1214 = vmatmul.mubr.f32.gmra.mrb[0].mxu0 %v440
  %v1215 = vpop.f32.mrb[0].mxu0
  %v1216 = vadd.f32 0.0, %v1215
  %v1217 = vpop.f32.mrb[0].mxu0
  %v1218 = vadd.f32 0.0, %v1217
  %1219 = vmatprep.mubr.f32.mxu0 %v452
  %1220 = vmatmul.mubr.f32.gmra.mrb[0].mxu0 %v451
  %v1221 = vpop.f32.mrb[0].mxu0
  %v1222 = vadd.f32 0.0, %v1221
  %v1223 = vpop.f32.mrb[0].mxu0
  %v1224 = vadd.f32 0.0, %v1223
  %1225 = vmatprep.mubr.f32.mxu0 %v463
  %1226 = vmatmul.mubr.f32.gmra.mrb[0].mxu0 %v462
  %v1227 = vpop.f32.mrb[0].mxu0
  %v1228 = vadd.f32 0.0, %v1227
  %v1229 = vpop.f32.mrb[0].mxu0
  %v1230 = vadd.f32 0.0, %v1229
  %1231 = vmatprep.mubr.f32.mxu0 %v474
  %1232 = vmatmul.mubr.f32.gmra.mrb[0].mxu0 %v473
  %v1233 = vpop.f32.mrb[0].mxu0
  %v1234 = vadd.f32 0.0, %v1233
  %v1235 = vpop.f32.mrb[0].mxu0
  %v1236 = vadd.f32 0.0, %v1235
  %1237 = vmatprep.mubr.f32.mxu0 %v485
  %1238 = vmatmul.mubr.f32.gmra.mrb[0].mxu0 %v484
  %v1239 = vpop.f32.mrb[0].mxu0
  %v1240 = vadd.f32 0.0, %v1239
  %v1241 = vpop.f32.mrb[0].mxu0
  %v1242 = vadd.f32 0.0, %v1241
  %1243 = vmatprep.mubr.f32.mxu0 %v496
  %1244 = vmatmul.mubr.f32.gmra.mrb[0].mxu0 %v495
  %v1245 = vpop.f32.mrb[0].mxu0
  %v1246 = vadd.f32 0.0, %v1245
  %v1247 = vpop.f32.mrb[0].mxu0
  %v1248 = vadd.f32 0.0, %v1247
  %1249 = vmatprep.mubr.f32.mxu0 %v507
  %1250 = vmatmul.mubr.f32.gmra.mrb[0].mxu0 %v506
  %v1251 = vpop.f32.mrb[0].mxu0
  %v1252 = vadd.f32 0.0, %v1251
  %v1253 = vpop.f32.mrb[0].mxu0
  %v1254 = vadd.f32 0.0, %v1253
  %1255 = vmatprep.mubr.f32.mxu0 %v518
  %1256 = vmatmul.mubr.f32.gmra.mrb[0].mxu0 %v517
  %v1257 = vpop.f32.mrb[0].mxu0
  %v1258 = vadd.f32 0.0, %v1257
  %v1259 = vpop.f32.mrb[0].mxu0
  %v1260 = vadd.f32 0.0, %v1259
  %1261 = vmatprep.mubr.f32.mxu0 %v529
  %1262 = vmatmul.mubr.f32.gmra.mrb[0].mxu0 %v528
  %v1263 = vpop.f32.mrb[0].mxu0
  %v1264 = vadd.f32 0.0, %v1263
  %v1265 = vpop.f32.mrb[0].mxu0
  %v1266 = vadd.f32 0.0, %v1265
  %1267 = vmatprep.mubr.f32.mxu0 %v540
  %1268 = vmatmul.mubr.f32.gmra.mrb[0].mxu0 %v539
  %v1269 = vpop.f32.mrb[0].mxu0
  %v1270 = vadd.f32 0.0, %v1269
  %v1271 = vpop.f32.mrb[0].mxu0
  %v1272 = vadd.f32 0.0, %v1271
  %1273 = vmatprep.mubr.f32.mxu0 %v551
  %1274 = vmatmul.mubr.f32.gmra.mrb[0].mxu0 %v550
  %v1275 = vpop.f32.mrb[0].mxu0
  %v1276 = vadd.f32 0.0, %v1275
  %v1277 = vpop.f32.mrb[0].mxu0
  %v1278 = vadd.f32 0.0, %v1277
  %1279 = vmatprep.mubr.f32.mxu0 %v562
  %1280 = vmatmul.mubr.f32.gmra.mrb[0].mxu0 %v561
  %v1281 = vpop.f32.mrb[0].mxu0
  %v1282 = vadd.f32 0.0, %v1281
  %v1283 = vpop.f32.mrb[0].mxu0
  %v1284 = vadd.f32 0.0, %v1283
  %1285 = vmatprep.mubr.f32.mxu0 %v573
  %1286 = vmatmul.mubr.f32.gmra.mrb[0].mxu0 %v572
  %v1287 = vpop.f32.mrb[0].mxu0
  %v1288 = vadd.f32 0.0, %v1287
  %v1289 = vpop.f32.mrb[0].mxu0
  %v1290 = vadd.f32 0.0, %v1289
  %1291 = vmatprep.mubr.f32.mxu0 %v584
  %1292 = vmatmul.mubr.f32.gmra.mrb[0].mxu0 %v583
  %v1293 = vpop.f32.mrb[0].mxu0
  %v1294 = vadd.f32 0.0, %v1293
  %v1295 = vpop.f32.mrb[0].mxu0
  %v1296 = vadd.f32 0.0, %v1295
  %1297 = vmatprep.mubr.f32.mxu0 %v595
  %1298 = vmatmul.mubr.f32.gmra.mrb[0].mxu0 %v594
  %v1299 = vpop.f32.mrb[0].mxu0
  %v1300 = vadd.f32 0.0, %v1299
  %v1301 = vpop.f32.mrb[0].mxu0
  %v1302 = vadd.f32 0.0, %v1301
  %1303 = vmatprep.mubr.f32.mxu0 %v606
  %1304 = vmatmul.mubr.f32.gmra.mrb[0].mxu0 %v605
  %v1305 = vpop.f32.mrb[0].mxu0
  %v1306 = vadd.f32 0.0, %v1305
  %v1307 = vpop.f32.mrb[0].mxu0
  %v1308 = vadd.f32 0.0, %v1307
  %1309 = vmatprep.mubr.f32.mxu0 %v617
  %1310 = vmatmul.mubr.f32.gmra.mrb[0].mxu0 %v616
  %v1311 = vpop.f32.mrb[0].mxu0
  %v1312 = vadd.f32 0.0, %v1311
  %v1313 = vpop.f32.mrb[0].mxu0
  %v1314 = vadd.f32 0.0, %v1313
  %1315 = vmatprep.mubr.f32.mxu0 %v628
  %1316 = vmatmul.mubr.f32.gmra.mrb[0].mxu0 %v627
  %v1317 = vpop.f32.mrb[0].mxu0
  %v1318 = vadd.f32 0.0, %v1317
  %v1319 = vpop.f32.mrb[0].mxu0
  %v1320 = vadd.f32 0.0, %v1319
  %1321 = vmatprep.mubr.f32.mxu0 %v639
  %1322 = vmatmul.mubr.f32.gmra.mrb[0].mxu0 %v638
  %v1323 = vpop.f32.mrb[0].mxu0
  %v1324 = vadd.f32 0.0, %v1323
  %v1325 = vpop.f32.mrb[0].mxu0
  %v1326 = vadd.f32 0.0, %v1325
  %1327 = vmatprep.mubr.f32.mxu0 %v650
  %1328 = vmatmul.mubr.f32.gmra.mrb[0].mxu0 %v649
  %v1329 = vpop.f32.mrb[0].mxu0
  %v1330 = vadd.f32 0.0, %v1329
  %v1331 = vpop.f32.mrb[0].mxu0
  %v1332 = vadd.f32 0.0, %v1331
  %1333 = vmatprep.mubr.f32.mxu0 %v661
  %1334 = vmatmul.mubr.f32.gmra.mrb[0].mxu0 %v660
  %v1335 = vpop.f32.mrb[0].mxu0
  %v1336 = vadd.f32 0.0, %v1335
  %v1337 = vpop.f32.mrb[0].mxu0
  %v1338 = vadd.f32 0.0, %v1337
  %1339 = vmatprep.mubr.f32.mxu0 %v672
  %1340 = vmatmul.mubr.f32.gmra.mrb[0].mxu0 %v671
  %v1341 = vpop.f32.mrb[0].mxu0
  %v1342 = vadd.f32 0.0, %v1341
  %v1343 = vpop.f32.mrb[0].mxu0
  %v1344 = vadd.f32 0.0, %v1343
  %1345 = vmatprep.mubr.f32.mxu0 %v683
  %1346 = vmatmul.mubr.f32.gmra.mrb[0].mxu0 %v682
  %v1347 = vpop.f32.mrb[0].mxu0
  %v1348 = vadd.f32 0.0, %v1347
  %v1349 = vpop.f32.mrb[0].mxu0
  %v1350 = vadd.f32 0.0, %v1349
  %1351 = vmatprep.mubr.f32.mxu0 %v694
  %1352 = vmatmul.mubr.f32.gmra.mrb[0].mxu0 %v693
  %v1353 = vpop.f32.mrb[0].mxu0
  %v1354 = vadd.f32 0.0, %v1353
  %v1355 = vpop.f32.mrb[0].mxu0
  %v1356 = vadd.f32 0.0, %v1355
  %1357 = vdwg.mxu0
  %1358 = vmatprep.subr.mxu0 %v769
  %1359 = vmatpush1.msra.mxu0 %v768
  %1360 = vmatprep.subr.mxu0 %v771
  %1361 = vmatpush1.msra.mxu0 %v770
  %1362 = vmatprep.subr.mxu0 %v773
  %1363 = vmatpush1.msra.mxu0 %v772
  %1364 = vmatprep.subr.mxu0 %v775
  %1365 = vmatpush1.msra.mxu0 %v774
  %1366 = vmatprep.subr.mxu0 %v777
  %1367 = vmatpush1.msra.mxu0 %v776
  %1368 = vmatprep.subr.mxu0 %v779
  %1369 = vmatpush1.msra.mxu0 %v778
  %1370 = vmatprep.subr.mxu0 %v781
  %1371 = vmatpush1.msra.mxu0 %v780
  %1372 = vmatprep.subr.mxu0 %v783
  %1373 = vmatpush1.msra.mxu0 %v782
  %1374 = vmatprep.subr.mxu0 %v785
  %1375 = vmatpush1.msra.mxu0 %v784
  %1376 = vmatprep.subr.mxu0 %v787
  %1377 = vmatpush1.msra.mxu0 %v786
  %1378 = vmatprep.subr.mxu0 %v789
  %1379 = vmatpush1.msra.mxu0 %v788
  %1380 = vmatprep.subr.mxu0 %v791
  %1381 = vmatpush1.msra.mxu0 %v790
  %1382 = vmatprep.subr.mxu0 %v793
  %1383 = vmatpush1.msra.mxu0 %v792
  %1384 = vmatprep.subr.mxu0 %v795
  %1385 = vmatpush1.msra.mxu0 %v794
  %1386 = vmatprep.subr.mxu0 %v797
  %1387 = vmatpush1.msra.mxu0 %v796
  %1388 = vmatprep.subr.mxu0 %v799
  %1389 = vmatpush1.msra.mxu0 %v798
  %1390 = vmatprep.subr.mxu0 %v801
  %1391 = vmatpush1.msra.mxu0 %v800
  %1392 = vmatprep.subr.mxu0 %v803
  %1393 = vmatpush1.msra.mxu0 %v802
  %1394 = vmatprep.subr.mxu0 %v805
  %1395 = vmatpush1.msra.mxu0 %v804
  %1396 = vmatprep.subr.mxu0 %v807
  %1397 = vmatpush1.msra.mxu0 %v806
  %1398 = vmatprep.subr.mxu0 %v809
  %1399 = vmatpush1.msra.mxu0 %v808
  %1400 = vmatprep.subr.mxu0 %v811
  %1401 = vmatpush1.msra.mxu0 %v810
  %1402 = vmatprep.subr.mxu0 %v813
  %1403 = vmatpush1.msra.mxu0 %v812
  %1404 = vmatprep.subr.mxu0 %v815
  %1405 = vmatpush1.msra.mxu0 %v814
  %1406 = vmatprep.subr.mxu0 %v817
  %1407 = vmatpush1.msra.mxu0 %v816
  %1408 = vmatprep.subr.mxu0 %v819
  %1409 = vmatpush1.msra.mxu0 %v818
  %1410 = vmatprep.subr.mxu0 %v821
  %1411 = vmatpush1.msra.mxu0 %v820
  %1412 = vmatprep.subr.mxu0 %v823
  %1413 = vmatpush1.msra.mxu0 %v822
  %1414 = vmatprep.subr.mxu0 %v825
  %1415 = vmatpush1.msra.mxu0 %v824
  %1416 = vmatprep.subr.mxu0 %v827
  %1417 = vmatpush1.msra.mxu0 %v826
  %1418 = vmatprep.subr.mxu0 %v829
  %1419 = vmatpush1.msra.mxu0 %v828
  %1420 = vmatprep.subr.mxu0 %v831
  %1421 = vmatpush1.msra.mxu0 %v830
  %1422 = vmatprep.mubr.f32.mxu0 %v399
  %1423 = vmatmul.mubr.f32.gmra.mrb[0].mxu0 %v398
  %v1424 = vpop.f32.mrb[0].mxu0
  %v1425 = vadd.f32 %v1192, %v1424
  %v1426 = vpop.f32.mrb[0].mxu0
  %v1427 = vadd.f32 %v1194, %v1426
  %1428 = vmatprep.mubr.f32.mxu0 %v410
  %1429 = vmatmul.mubr.f32.gmra.mrb[0].mxu0 %v409
  %v1430 = vpop.f32.mrb[0].mxu0
  %v1431 = vadd.f32 %v1198, %v1430
  %v1432 = vpop.f32.mrb[0].mxu0
  %v1433 = vadd.f32 %v1200, %v1432
  %1434 = vmatprep.mubr.f32.mxu0 %v421
  %1435 = vmatmul.mubr.f32.gmra.mrb[0].mxu0 %v420
  %v1436 = vpop.f32.mrb[0].mxu0
  %v1437 = vadd.f32 %v1204, %v1436
  %v1438 = vpop.f32.mrb[0].mxu0
  %v1439 = vadd.f32 %v1206, %v1438
  %1440 = vmatprep.mubr.f32.mxu0 %v432
  %1441 = vmatmul.mubr.f32.gmra.mrb[0].mxu0 %v431
  %v1442 = vpop.f32.mrb[0].mxu0
  %v1443 = vadd.f32 %v1210, %v1442
  %v1444 = vpop.f32.mrb[0].mxu0
  %v1445 = vadd.f32 %v1212, %v1444
  %1446 = vmatprep.mubr.f32.mxu0 %v443
  %1447 = vmatmul.mubr.f32.gmra.mrb[0].mxu0 %v442
  %v1448 = vpop.f32.mrb[0].mxu0
  %v1449 = vadd.f32 %v1216, %v1448
  %v1450 = vpop.f32.mrb[0].mxu0
  %v1451 = vadd.f32 %v1218, %v1450
  %1452 = vmatprep.mubr.f32.mxu0 %v454
  %1453 = vmatmul.mubr.f32.gmra.mrb[0].mxu0 %v453
  %v1454 = vpop.f32.mrb[0].mxu0
  %v1455 = vadd.f32 %v1222, %v1454
  %v1456 = vpop.f32.mrb[0].mxu0
  %v1457 = vadd.f32 %v1224, %v1456
  %1458 = vmatprep.mubr.f32.mxu0 %v465
  %1459 = vmatmul.mubr.f32.gmra.mrb[0].mxu0 %v464
  %v1460 = vpop.f32.mrb[0].mxu0
  %v1461 = vadd.f32 %v1228, %v1460
  %v1462 = vpop.f32.mrb[0].mxu0
  %v1463 = vadd.f32 %v1230, %v1462
  %1464 = vmatprep.mubr.f32.mxu0 %v476
  %1465 = vmatmul.mubr.f32.gmra.mrb[0].mxu0 %v475
  %v1466 = vpop.f32.mrb[0].mxu0
  %v1467 = vadd.f32 %v1234, %v1466
  %v1468 = vpop.f32.mrb[0].mxu0
  %v1469 = vadd.f32 %v1236, %v1468
  %1470 = vmatprep.mubr.f32.mxu0 %v487
  %1471 = vmatmul.mubr.f32.gmra.mrb[0].mxu0 %v486
  %v1472 = vpop.f32.mrb[0].mxu0
  %v1473 = vadd.f32 %v1240, %v1472
  %v1474 = vpop.f32.mrb[0].mxu0
  %v1475 = vadd.f32 %v1242, %v1474
  %1476 = vmatprep.mubr.f32.mxu0 %v498
  %1477 = vmatmul.mubr.f32.gmra.mrb[0].mxu0 %v497
  %v1478 = vpop.f32.mrb[0].mxu0
  %v1479 = vadd.f32 %v1246, %v1478
  %v1480 = vpop.f32.mrb[0].mxu0
  %v1481 = vadd.f32 %v1248, %v1480
  %1482 = vmatprep.mubr.f32.mxu0 %v509
  %1483 = vmatmul.mubr.f32.gmra.mrb[0].mxu0 %v508
  %v1484 = vpop.f32.mrb[0].mxu0
  %v1485 = vadd.f32 %v1252, %v1484
  %v1486 = vpop.f32.mrb[0].mxu0
  %v1487 = vadd.f32 %v1254, %v1486
  %1488 = vmatprep.mubr.f32.mxu0 %v520
  %1489 = vmatmul.mubr.f32.gmra.mrb[0].mxu0 %v519
  %v1490 = vpop.f32.mrb[0].mxu0
  %v1491 = vadd.f32 %v1258, %v1490
  %v1492 = vpop.f32.mrb[0].mxu0
  %v1493 = vadd.f32 %v1260, %v1492
  %1494 = vmatprep.mubr.f32.mxu0 %v531
  %1495 = vmatmul.mubr.f32.gmra.mrb[0].mxu0 %v530
  %v1496 = vpop.f32.mrb[0].mxu0
  %v1497 = vadd.f32 %v1264, %v1496
  %v1498 = vpop.f32.mrb[0].mxu0
  %v1499 = vadd.f32 %v1266, %v1498
  %1500 = vmatprep.mubr.f32.mxu0 %v542
  %1501 = vmatmul.mubr.f32.gmra.mrb[0].mxu0 %v541
  %v1502 = vpop.f32.mrb[0].mxu0
  %v1503 = vadd.f32 %v1270, %v1502
  %v1504 = vpop.f32.mrb[0].mxu0
  %v1505 = vadd.f32 %v1272, %v1504
  %1506 = vmatprep.mubr.f32.mxu0 %v553
  %1507 = vmatmul.mubr.f32.gmra.mrb[0].mxu0 %v552
  %v1508 = vpop.f32.mrb[0].mxu0
  %v1509 = vadd.f32 %v1276, %v1508
  %v1510 = vpop.f32.mrb[0].mxu0
  %v1511 = vadd.f32 %v1278, %v1510
  %1512 = vmatprep.mubr.f32.mxu0 %v564
  %1513 = vmatmul.mubr.f32.gmra.mrb[0].mxu0 %v563
  %v1514 = vpop.f32.mrb[0].mxu0
  %v1515 = vadd.f32 %v1282, %v1514
  %v1516 = vpop.f32.mrb[0].mxu0
  %v1517 = vadd.f32 %v1284, %v1516
  %1518 = vmatprep.mubr.f32.mxu0 %v575
  %1519 = vmatmul.mubr.f32.gmra.mrb[0].mxu0 %v574
  %v1520 = vpop.f32.mrb[0].mxu0
  %v1521 = vadd.f32 %v1288, %v1520
  %v1522 = vpop.f32.mrb[0].mxu0
  %v1523 = vadd.f32 %v1290, %v1522
  %1524 = vmatprep.mubr.f32.mxu0 %v586
  %1525 = vmatmul.mubr.f32.gmra.mrb[0].mxu0 %v585
  %v1526 = vpop.f32.mrb[0].mxu0
  %v1527 = vadd.f32 %v1294, %v1526
  %v1528 = vpop.f32.mrb[0].mxu0
  %v1529 = vadd.f32 %v1296, %v1528
  %1530 = vmatprep.mubr.f32.mxu0 %v597
  %1531 = vmatmul.mubr.f32.gmra.mrb[0].mxu0 %v596
  %v1532 = vpop.f32.mrb[0].mxu0
  %v1533 = vadd.f32 %v1300, %v1532
  %v1534 = vpop.f32.mrb[0].mxu0
  %v1535 = vadd.f32 %v1302, %v1534
  %1536 = vmatprep.mubr.f32.mxu0 %v608
  %1537 = vmatmul.mubr.f32.gmra.mrb[0].mxu0 %v607
  %v1538 = vpop.f32.mrb[0].mxu0
  %v1539 = vadd.f32 %v1306, %v1538
  %v1540 = vpop.f32.mrb[0].mxu0
  %v1541 = vadd.f32 %v1308, %v1540
  %1542 = vmatprep.mubr.f32.mxu0 %v619
  %1543 = vmatmul.mubr.f32.gmra.mrb[0].mxu0 %v618
  %v1544 = vpop.f32.mrb[0].mxu0
  %v1545 = vadd.f32 %v1312, %v1544
  %v1546 = vpop.f32.mrb[0].mxu0
  %v1547 = vadd.f32 %v1314, %v1546
  %1548 = vmatprep.mubr.f32.mxu0 %v630
  %1549 = vmatmul.mubr.f32.gmra.mrb[0].mxu0 %v629
  %v1550 = vpop.f32.mrb[0].mxu0
  %v1551 = vadd.f32 %v1318, %v1550
  %v1552 = vpop.f32.mrb[0].mxu0
  %v1553 = vadd.f32 %v1320, %v1552
  %1554 = vmatprep.mubr.f32.mxu0 %v641
  %1555 = vmatmul.mubr.f32.gmra.mrb[0].mxu0 %v640
  %v1556 = vpop.f32.mrb[0].mxu0
  %v1557 = vadd.f32 %v1324, %v1556
  %v1558 = vpop.f32.mrb[0].mxu0
  %v1559 = vadd.f32 %v1326, %v1558
  %1560 = vmatprep.mubr.f32.mxu0 %v652
  %1561 = vmatmul.mubr.f32.gmra.mrb[0].mxu0 %v651
  %v1562 = vpop.f32.mrb[0].mxu0
  %v1563 = vadd.f32 %v1330, %v1562
  %v1564 = vpop.f32.mrb[0].mxu0
  %v1565 = vadd.f32 %v1332, %v1564
  %1566 = vmatprep.mubr.f32.mxu0 %v663
  %1567 = vmatmul.mubr.f32.gmra.mrb[0].mxu0 %v662
  %v1568 = vpop.f32.mrb[0].mxu0
  %v1569 = vadd.f32 %v1336, %v1568
  %v1570 = vpop.f32.mrb[0].mxu0
  %v1571 = vadd.f32 %v1338, %v1570
  %1572 = vmatprep.mubr.f32.mxu0 %v674
  %1573 = vmatmul.mubr.f32.gmra.mrb[0].mxu0 %v673
  %v1574 = vpop.f32.mrb[0].mxu0
  %v1575 = vadd.f32 %v1342, %v1574
  %v1576 = vpop.f32.mrb[0].mxu0
  %v1577 = vadd.f32 %v1344, %v1576
  %1578 = vmatprep.mubr.f32.mxu0 %v685
  %1579 = vmatmul.mubr.f32.gmra.mrb[0].mxu0 %v684
  %v1580 = vpop.f32.mrb[0].mxu0
  %v1581 = vadd.f32 %v1348, %v1580
  %v1582 = vpop.f32.mrb[0].mxu0
  %v1583 = vadd.f32 %v1350, %v1582
  %1584 = vmatprep.mubr.f32.mxu0 %v696
  %1585 = vmatmul.mubr.f32.gmra.mrb[0].mxu0 %v695
  %v1586 = vpop.f32.mrb[0].mxu0
  %v1587 = vadd.f32 %v1354, %v1586
  %v1588 = vpop.f32.mrb[0].mxu0
  %v1589 = vadd.f32 %v1356, %v1588
  %1590 = vdwg.mxu0
  %1591 = vmatprep.subr.mxu0 %v833
  %1592 = vmatpush1.msra.mxu0 %v832
  %1593 = vmatprep.subr.mxu0 %v835
  %1594 = vmatpush1.msra.mxu0 %v834
  %1595 = vmatprep.subr.mxu0 %v837
  %1596 = vmatpush1.msra.mxu0 %v836
  %1597 = vmatprep.subr.mxu0 %v839
  %1598 = vmatpush1.msra.mxu0 %v838
  %1599 = vmatprep.subr.mxu0 %v841
  %1600 = vmatpush1.msra.mxu0 %v840
  %1601 = vmatprep.subr.mxu0 %v843
  %1602 = vmatpush1.msra.mxu0 %v842
  %1603 = vmatprep.subr.mxu0 %v845
  %1604 = vmatpush1.msra.mxu0 %v844
  %1605 = vmatprep.subr.mxu0 %v847
  %1606 = vmatpush1.msra.mxu0 %v846
  %1607 = vmatprep.subr.mxu0 %v849
  %1608 = vmatpush1.msra.mxu0 %v848
  %1609 = vmatprep.subr.mxu0 %v851
  %1610 = vmatpush1.msra.mxu0 %v850
  %1611 = vmatprep.subr.mxu0 %v853
  %1612 = vmatpush1.msra.mxu0 %v852
  %1613 = vmatprep.subr.mxu0 %v855
  %1614 = vmatpush1.msra.mxu0 %v854
  %1615 = vmatprep.subr.mxu0 %v857
  %1616 = vmatpush1.msra.mxu0 %v856
  %1617 = vmatprep.subr.mxu0 %v859
  %1618 = vmatpush1.msra.mxu0 %v858
  %1619 = vmatprep.subr.mxu0 %v861
  %1620 = vmatpush1.msra.mxu0 %v860
  %1621 = vmatprep.subr.mxu0 %v863
  %1622 = vmatpush1.msra.mxu0 %v862
  %1623 = vmatprep.subr.mxu0 %v865
  %1624 = vmatpush1.msra.mxu0 %v864
  %1625 = vmatprep.subr.mxu0 %v867
  %1626 = vmatpush1.msra.mxu0 %v866
  %1627 = vmatprep.subr.mxu0 %v869
  %1628 = vmatpush1.msra.mxu0 %v868
  %1629 = vmatprep.subr.mxu0 %v871
  %1630 = vmatpush1.msra.mxu0 %v870
  %1631 = vmatprep.subr.mxu0 %v873
  %1632 = vmatpush1.msra.mxu0 %v872
  %1633 = vmatprep.subr.mxu0 %v875
  %1634 = vmatpush1.msra.mxu0 %v874
  %1635 = vmatprep.subr.mxu0 %v877
  %1636 = vmatpush1.msra.mxu0 %v876
  %1637 = vmatprep.subr.mxu0 %v879
  %1638 = vmatpush1.msra.mxu0 %v878
  %1639 = vmatprep.subr.mxu0 %v881
  %1640 = vmatpush1.msra.mxu0 %v880
  %1641 = vmatprep.subr.mxu0 %v883
  %1642 = vmatpush1.msra.mxu0 %v882
  %1643 = vmatprep.subr.mxu0 %v885
  %1644 = vmatpush1.msra.mxu0 %v884
  %1645 = vmatprep.subr.mxu0 %v887
  %1646 = vmatpush1.msra.mxu0 %v886
  %1647 = vmatprep.subr.mxu0 %v889
  %1648 = vmatpush1.msra.mxu0 %v888
  %1649 = vmatprep.subr.mxu0 %v891
  %1650 = vmatpush1.msra.mxu0 %v890
  %1651 = vmatprep.subr.mxu0 %v893
  %1652 = vmatpush1.msra.mxu0 %v892
  %1653 = vmatprep.subr.mxu0 %v895
  %1654 = vmatpush1.msra.mxu0 %v894
  %1655 = vmatprep.mubr.f32.mxu0 %v401
  %1656 = vmatmul.mubr.f32.gmra.mrb[0].mxu0 %v400
  %v1657 = vpop.f32.mrb[0].mxu0
  %v1658 = vadd.f32 %v1425, %v1657
  %v1659 = vpop.f32.mrb[0].mxu0
  %v1660 = vadd.f32 %v1427, %v1659
  %1661 = vmatprep.mubr.f32.mxu0 %v412
  %1662 = vmatmul.mubr.f32.gmra.mrb[0].mxu0 %v411
  %v1663 = vpop.f32.mrb[0].mxu0
  %v1664 = vadd.f32 %v1431, %v1663
  %v1665 = vpop.f32.mrb[0].mxu0
  %v1666 = vadd.f32 %v1433, %v1665
  %1667 = vmatprep.mubr.f32.mxu0 %v423
  %1668 = vmatmul.mubr.f32.gmra.mrb[0].mxu0 %v422
  %v1669 = vpop.f32.mrb[0].mxu0
  %v1670 = vadd.f32 %v1437, %v1669
  %v1671 = vpop.f32.mrb[0].mxu0
  %v1672 = vadd.f32 %v1439, %v1671
  %1673 = vmatprep.mubr.f32.mxu0 %v434
  %1674 = vmatmul.mubr.f32.gmra.mrb[0].mxu0 %v433
  %v1675 = vpop.f32.mrb[0].mxu0
  %v1676 = vadd.f32 %v1443, %v1675
  %v1677 = vpop.f32.mrb[0].mxu0
  %v1678 = vadd.f32 %v1445, %v1677
  %1679 = vmatprep.mubr.f32.mxu0 %v445
  %1680 = vmatmul.mubr.f32.gmra.mrb[0].mxu0 %v444
  %v1681 = vpop.f32.mrb[0].mxu0
  %v1682 = vadd.f32 %v1449, %v1681
  %v1683 = vpop.f32.mrb[0].mxu0
  %v1684 = vadd.f32 %v1451, %v1683
  %1685 = vmatprep.mubr.f32.mxu0 %v456
  %1686 = vmatmul.mubr.f32.gmra.mrb[0].mxu0 %v455
  %v1687 = vpop.f32.mrb[0].mxu0
  %v1688 = vadd.f32 %v1455, %v1687
  %v1689 = vpop.f32.mrb[0].mxu0
  %v1690 = vadd.f32 %v1457, %v1689
  %1691 = vmatprep.mubr.f32.mxu0 %v467
  %1692 = vmatmul.mubr.f32.gmra.mrb[0].mxu0 %v466
  %v1693 = vpop.f32.mrb[0].mxu0
  %v1694 = vadd.f32 %v1461, %v1693
  %v1695 = vpop.f32.mrb[0].mxu0
  %v1696 = vadd.f32 %v1463, %v1695
  %1697 = vmatprep.mubr.f32.mxu0 %v478
  %1698 = vmatmul.mubr.f32.gmra.mrb[0].mxu0 %v477
  %v1699 = vpop.f32.mrb[0].mxu0
  %v1700 = vadd.f32 %v1467, %v1699
  %v1701 = vpop.f32.mrb[0].mxu0
  %v1702 = vadd.f32 %v1469, %v1701
  %1703 = vmatprep.mubr.f32.mxu0 %v489
  %1704 = vmatmul.mubr.f32.gmra.mrb[0].mxu0 %v488
  %v1705 = vpop.f32.mrb[0].mxu0
  %v1706 = vadd.f32 %v1473, %v1705
  %v1707 = vpop.f32.mrb[0].mxu0
  %v1708 = vadd.f32 %v1475, %v1707
  %1709 = vmatprep.mubr.f32.mxu0 %v500
  %1710 = vmatmul.mubr.f32.gmra.mrb[0].mxu0 %v499
  %v1711 = vpop.f32.mrb[0].mxu0
  %v1712 = vadd.f32 %v1479, %v1711
  %v1713 = vpop.f32.mrb[0].mxu0
  %v1714 = vadd.f32 %v1481, %v1713
  %1715 = vmatprep.mubr.f32.mxu0 %v511
  %1716 = vmatmul.mubr.f32.gmra.mrb[0].mxu0 %v510
  %v1717 = vpop.f32.mrb[0].mxu0
  %v1718 = vadd.f32 %v1485, %v1717
  %v1719 = vpop.f32.mrb[0].mxu0
  %v1720 = vadd.f32 %v1487, %v1719
  %1721 = vmatprep.mubr.f32.mxu0 %v522
  %1722 = vmatmul.mubr.f32.gmra.mrb[0].mxu0 %v521
  %v1723 = vpop.f32.mrb[0].mxu0
  %v1724 = vadd.f32 %v1491, %v1723
  %v1725 = vpop.f32.mrb[0].mxu0
  %v1726 = vadd.f32 %v1493, %v1725
  %1727 = vmatprep.mubr.f32.mxu0 %v533
  %1728 = vmatmul.mubr.f32.gmra.mrb[0].mxu0 %v532
  %v1729 = vpop.f32.mrb[0].mxu0
  %v1730 = vadd.f32 %v1497, %v1729
  %v1731 = vpop.f32.mrb[0].mxu0
  %v1732 = vadd.f32 %v1499, %v1731
  %1733 = vmatprep.mubr.f32.mxu0 %v544
  %1734 = vmatmul.mubr.f32.gmra.mrb[0].mxu0 %v543
  %v1735 = vpop.f32.mrb[0].mxu0
  %v1736 = vadd.f32 %v1503, %v1735
  %v1737 = vpop.f32.mrb[0].mxu0
  %v1738 = vadd.f32 %v1505, %v1737
  %1739 = vmatprep.mubr.f32.mxu0 %v555
  %1740 = vmatmul.mubr.f32.gmra.mrb[0].mxu0 %v554
  %v1741 = vpop.f32.mrb[0].mxu0
  %v1742 = vadd.f32 %v1509, %v1741
  %v1743 = vpop.f32.mrb[0].mxu0
  %v1744 = vadd.f32 %v1511, %v1743
  %1745 = vmatprep.mubr.f32.mxu0 %v566
  %1746 = vmatmul.mubr.f32.gmra.mrb[0].mxu0 %v565
  %v1747 = vpop.f32.mrb[0].mxu0
  %v1748 = vadd.f32 %v1515, %v1747
  %v1749 = vpop.f32.mrb[0].mxu0
  %v1750 = vadd.f32 %v1517, %v1749
  %1751 = vmatprep.mubr.f32.mxu0 %v577
  %1752 = vmatmul.mubr.f32.gmra.mrb[0].mxu0 %v576
  %v1753 = vpop.f32.mrb[0].mxu0
  %v1754 = vadd.f32 %v1521, %v1753
  %v1755 = vpop.f32.mrb[0].mxu0
  %v1756 = vadd.f32 %v1523, %v1755
  %1757 = vmatprep.mubr.f32.mxu0 %v588
  %1758 = vmatmul.mubr.f32.gmra.mrb[0].mxu0 %v587
  %v1759 = vpop.f32.mrb[0].mxu0
  %v1760 = vadd.f32 %v1527, %v1759
  %v1761 = vpop.f32.mrb[0].mxu0
  %v1762 = vadd.f32 %v1529, %v1761
  %1763 = vmatprep.mubr.f32.mxu0 %v599
  %1764 = vmatmul.mubr.f32.gmra.mrb[0].mxu0 %v598
  %v1765 = vpop.f32.mrb[0].mxu0
  %v1766 = vadd.f32 %v1533, %v1765
  %v1767 = vpop.f32.mrb[0].mxu0
  %v1768 = vadd.f32 %v1535, %v1767
  %1769 = vmatprep.mubr.f32.mxu0 %v610
  %1770 = vmatmul.mubr.f32.gmra.mrb[0].mxu0 %v609
  %v1771 = vpop.f32.mrb[0].mxu0
  %v1772 = vadd.f32 %v1539, %v1771
  %v1773 = vpop.f32.mrb[0].mxu0
  %v1774 = vadd.f32 %v1541, %v1773
  %1775 = vmatprep.mubr.f32.mxu0 %v621
  %1776 = vmatmul.mubr.f32.gmra.mrb[0].mxu0 %v620
  %v1777 = vpop.f32.mrb[0].mxu0
  %v1778 = vadd.f32 %v1545, %v1777
  %v1779 = vpop.f32.mrb[0].mxu0
  %v1780 = vadd.f32 %v1547, %v1779
  %1781 = vmatprep.mubr.f32.mxu0 %v632
  %1782 = vmatmul.mubr.f32.gmra.mrb[0].mxu0 %v631
  %v1783 = vpop.f32.mrb[0].mxu0
  %v1784 = vadd.f32 %v1551, %v1783
  %v1785 = vpop.f32.mrb[0].mxu0
  %v1786 = vadd.f32 %v1553, %v1785
  %1787 = vmatprep.mubr.f32.mxu0 %v643
  %1788 = vmatmul.mubr.f32.gmra.mrb[0].mxu0 %v642
  %v1789 = vpop.f32.mrb[0].mxu0
  %v1790 = vadd.f32 %v1557, %v1789
  %v1791 = vpop.f32.mrb[0].mxu0
  %v1792 = vadd.f32 %v1559, %v1791
  %1793 = vmatprep.mubr.f32.mxu0 %v654
  %1794 = vmatmul.mubr.f32.gmra.mrb[0].mxu0 %v653
  %v1795 = vpop.f32.mrb[0].mxu0
  %v1796 = vadd.f32 %v1563, %v1795
  %v1797 = vpop.f32.mrb[0].mxu0
  %v1798 = vadd.f32 %v1565, %v1797
  %1799 = vmatprep.mubr.f32.mxu0 %v665
  %1800 = vmatmul.mubr.f32.gmra.mrb[0].mxu0 %v664
  %v1801 = vpop.f32.mrb[0].mxu0
  %v1802 = vadd.f32 %v1569, %v1801
  %v1803 = vpop.f32.mrb[0].mxu0
  %v1804 = vadd.f32 %v1571, %v1803
  %1805 = vmatprep.mubr.f32.mxu0 %v676
  %1806 = vmatmul.mubr.f32.gmra.mrb[0].mxu0 %v675
  %v1807 = vpop.f32.mrb[0].mxu0
  %v1808 = vadd.f32 %v1575, %v1807
  %v1809 = vpop.f32.mrb[0].mxu0
  %v1810 = vadd.f32 %v1577, %v1809
  %1811 = vmatprep.mubr.f32.mxu0 %v687
  %1812 = vmatmul.mubr.f32.gmra.mrb[0].mxu0 %v686
  %v1813 = vpop.f32.mrb[0].mxu0
  %v1814 = vadd.f32 %v1581, %v1813
  %v1815 = vpop.f32.mrb[0].mxu0
  %v1816 = vadd.f32 %v1583, %v1815
  %1817 = vmatprep.mubr.f32.mxu0 %v698
  %1818 = vmatmul.mubr.f32.gmra.mrb[0].mxu0 %v697
  %v1819 = vpop.f32.mrb[0].mxu0
  %v1820 = vadd.f32 %v1587, %v1819
  %v1821 = vpop.f32.mrb[0].mxu0
  %v1822 = vadd.f32 %v1589, %v1821
  %1823 = vdwg.mxu0
  %1824 = vmatprep.subr.mxu0 %v897
  %1825 = vmatpush1.msra.mxu0 %v896
  %1826 = vmatprep.subr.mxu0 %v899
  %1827 = vmatpush1.msra.mxu0 %v898
  %1828 = vmatprep.subr.mxu0 %v901
  %1829 = vmatpush1.msra.mxu0 %v900
  %1830 = vmatprep.subr.mxu0 %v903
  %1831 = vmatpush1.msra.mxu0 %v902
  %1832 = vmatprep.subr.mxu0 %v905
  %1833 = vmatpush1.msra.mxu0 %v904
  %1834 = vmatprep.subr.mxu0 %v907
  %1835 = vmatpush1.msra.mxu0 %v906
  %1836 = vmatprep.subr.mxu0 %v909
  %1837 = vmatpush1.msra.mxu0 %v908
  %1838 = vmatprep.subr.mxu0 %v911
  %1839 = vmatpush1.msra.mxu0 %v910
  %1840 = vmatprep.subr.mxu0 %v913
  %1841 = vmatpush1.msra.mxu0 %v912
  %1842 = vmatprep.subr.mxu0 %v915
  %1843 = vmatpush1.msra.mxu0 %v914
  %1844 = vmatprep.subr.mxu0 %v917
  %1845 = vmatpush1.msra.mxu0 %v916
  %1846 = vmatprep.subr.mxu0 %v919
  %1847 = vmatpush1.msra.mxu0 %v918
  %1848 = vmatprep.subr.mxu0 %v921
  %1849 = vmatpush1.msra.mxu0 %v920
  %1850 = vmatprep.subr.mxu0 %v923
  %1851 = vmatpush1.msra.mxu0 %v922
  %1852 = vmatprep.subr.mxu0 %v925
  %1853 = vmatpush1.msra.mxu0 %v924
  %1854 = vmatprep.subr.mxu0 %v927
  %1855 = vmatpush1.msra.mxu0 %v926
  %1856 = vmatprep.subr.mxu0 %v929
  %1857 = vmatpush1.msra.mxu0 %v928
  %1858 = vmatprep.subr.mxu0 %v931
  %1859 = vmatpush1.msra.mxu0 %v930
  %1860 = vmatprep.subr.mxu0 %v933
  %1861 = vmatpush1.msra.mxu0 %v932
  %1862 = vmatprep.subr.mxu0 %v935
  %1863 = vmatpush1.msra.mxu0 %v934
  %1864 = vmatprep.subr.mxu0 %v937
  %1865 = vmatpush1.msra.mxu0 %v936
  %1866 = vmatprep.subr.mxu0 %v939
  %1867 = vmatpush1.msra.mxu0 %v938
  %1868 = vmatprep.subr.mxu0 %v941
  %1869 = vmatpush1.msra.mxu0 %v940
  %1870 = vmatprep.subr.mxu0 %v943
  %1871 = vmatpush1.msra.mxu0 %v942
  %1872 = vmatprep.subr.mxu0 %v945
  %1873 = vmatpush1.msra.mxu0 %v944
  %1874 = vmatprep.subr.mxu0 %v947
  %1875 = vmatpush1.msra.mxu0 %v946
  %1876 = vmatprep.subr.mxu0 %v949
  %1877 = vmatpush1.msra.mxu0 %v948
  %1878 = vmatprep.subr.mxu0 %v951
  %1879 = vmatpush1.msra.mxu0 %v950
  %1880 = vmatprep.subr.mxu0 %v953
  %1881 = vmatpush1.msra.mxu0 %v952
  %1882 = vmatprep.subr.mxu0 %v955
  %1883 = vmatpush1.msra.mxu0 %v954
  %1884 = vmatprep.subr.mxu0 %v957
  %1885 = vmatpush1.msra.mxu0 %v956
  %1886 = vmatprep.subr.mxu0 %v959
  %1887 = vmatpush1.msra.mxu0 %v958
  %1888 = vmatprep.mubr.f32.mxu0 %v403
  %1889 = vmatmul.mubr.f32.gmra.mrb[0].mxu0 %v402
  %v1890 = vpop.f32.mrb[0].mxu0
  %v1891 = vadd.f32 %v1658, %v1890
  %v1892 = vpop.f32.mrb[0].mxu0
  %v1893 = vadd.f32 %v1660, %v1892
  %1894 = vmatprep.mubr.f32.mxu0 %v414
  %1895 = vmatmul.mubr.f32.gmra.mrb[0].mxu0 %v413
  %v1896 = vpop.f32.mrb[0].mxu0
  %v1897 = vadd.f32 %v1664, %v1896
  %v1898 = vpop.f32.mrb[0].mxu0
  %v1899 = vadd.f32 %v1666, %v1898
  %1900 = vmatprep.mubr.f32.mxu0 %v425
  %1901 = vmatmul.mubr.f32.gmra.mrb[0].mxu0 %v424
  %v1902 = vpop.f32.mrb[0].mxu0
  %v1903 = vadd.f32 %v1670, %v1902
  %v1904 = vpop.f32.mrb[0].mxu0
  %v1905 = vadd.f32 %v1672, %v1904
  %1906 = vmatprep.mubr.f32.mxu0 %v436
  %1907 = vmatmul.mubr.f32.gmra.mrb[0].mxu0 %v435
  %v1908 = vpop.f32.mrb[0].mxu0
  %v1909 = vadd.f32 %v1676, %v1908
  %v1910 = vpop.f32.mrb[0].mxu0
  %v1911 = vadd.f32 %v1678, %v1910
  %1912 = vmatprep.mubr.f32.mxu0 %v447
  %1913 = vmatmul.mubr.f32.gmra.mrb[0].mxu0 %v446
  %v1914 = vpop.f32.mrb[0].mxu0
  %v1915 = vadd.f32 %v1682, %v1914
  %v1916 = vpop.f32.mrb[0].mxu0
  %v1917 = vadd.f32 %v1684, %v1916
  %1918 = vmatprep.mubr.f32.mxu0 %v458
  %1919 = vmatmul.mubr.f32.gmra.mrb[0].mxu0 %v457
  %v1920 = vpop.f32.mrb[0].mxu0
  %v1921 = vadd.f32 %v1688, %v1920
  %v1922 = vpop.f32.mrb[0].mxu0
  %v1923 = vadd.f32 %v1690, %v1922
  %1924 = vmatprep.mubr.f32.mxu0 %v469
  %1925 = vmatmul.mubr.f32.gmra.mrb[0].mxu0 %v468
  %v1926 = vpop.f32.mrb[0].mxu0
  %v1927 = vadd.f32 %v1694, %v1926
  %v1928 = vpop.f32.mrb[0].mxu0
  %v1929 = vadd.f32 %v1696, %v1928
  %1930 = vmatprep.mubr.f32.mxu0 %v480
  %1931 = vmatmul.mubr.f32.gmra.mrb[0].mxu0 %v479
  %v1932 = vpop.f32.mrb[0].mxu0
  %v1933 = vadd.f32 %v1700, %v1932
  %v1934 = vpop.f32.mrb[0].mxu0
  %v1935 = vadd.f32 %v1702, %v1934
  %1936 = vmatprep.mubr.f32.mxu0 %v491
  %1937 = vmatmul.mubr.f32.gmra.mrb[0].mxu0 %v490
  %v1938 = vpop.f32.mrb[0].mxu0
  %v1939 = vadd.f32 %v1706, %v1938
  %v1940 = vpop.f32.mrb[0].mxu0
  %v1941 = vadd.f32 %v1708, %v1940
  %1942 = vmatprep.mubr.f32.mxu0 %v502
  %1943 = vmatmul.mubr.f32.gmra.mrb[0].mxu0 %v501
  %v1944 = vpop.f32.mrb[0].mxu0
  %v1945 = vadd.f32 %v1712, %v1944
  %v1946 = vpop.f32.mrb[0].mxu0
  %v1947 = vadd.f32 %v1714, %v1946
  %1948 = vmatprep.mubr.f32.mxu0 %v513
  %1949 = vmatmul.mubr.f32.gmra.mrb[0].mxu0 %v512
  %v1950 = vpop.f32.mrb[0].mxu0
  %v1951 = vadd.f32 %v1718, %v1950
  %v1952 = vpop.f32.mrb[0].mxu0
  %v1953 = vadd.f32 %v1720, %v1952
  %1954 = vmatprep.mubr.f32.mxu0 %v524
  %1955 = vmatmul.mubr.f32.gmra.mrb[0].mxu0 %v523
  %v1956 = vpop.f32.mrb[0].mxu0
  %v1957 = vadd.f32 %v1724, %v1956
  %v1958 = vpop.f32.mrb[0].mxu0
  %v1959 = vadd.f32 %v1726, %v1958
  %1960 = vmatprep.mubr.f32.mxu0 %v535
  %1961 = vmatmul.mubr.f32.gmra.mrb[0].mxu0 %v534
  %v1962 = vpop.f32.mrb[0].mxu0
  %v1963 = vadd.f32 %v1730, %v1962
  %v1964 = vpop.f32.mrb[0].mxu0
  %v1965 = vadd.f32 %v1732, %v1964
  %1966 = vmatprep.mubr.f32.mxu0 %v546
  %1967 = vmatmul.mubr.f32.gmra.mrb[0].mxu0 %v545
  %v1968 = vpop.f32.mrb[0].mxu0
  %v1969 = vadd.f32 %v1736, %v1968
  %v1970 = vpop.f32.mrb[0].mxu0
  %v1971 = vadd.f32 %v1738, %v1970
  %1972 = vmatprep.mubr.f32.mxu0 %v557
  %1973 = vmatmul.mubr.f32.gmra.mrb[0].mxu0 %v556
  %v1974 = vpop.f32.mrb[0].mxu0
  %v1975 = vadd.f32 %v1742, %v1974
  %v1976 = vpop.f32.mrb[0].mxu0
  %v1977 = vadd.f32 %v1744, %v1976
  %1978 = vmatprep.mubr.f32.mxu0 %v568
  %1979 = vmatmul.mubr.f32.gmra.mrb[0].mxu0 %v567
  %v1980 = vpop.f32.mrb[0].mxu0
  %v1981 = vadd.f32 %v1748, %v1980
  %v1982 = vpop.f32.mrb[0].mxu0
  %v1983 = vadd.f32 %v1750, %v1982
  %1984 = vmatprep.mubr.f32.mxu0 %v579
  %1985 = vmatmul.mubr.f32.gmra.mrb[0].mxu0 %v578
  %v1986 = vpop.f32.mrb[0].mxu0
  %v1987 = vadd.f32 %v1754, %v1986
  %v1988 = vpop.f32.mrb[0].mxu0
  %v1989 = vadd.f32 %v1756, %v1988
  %1990 = vmatprep.mubr.f32.mxu0 %v590
  %1991 = vmatmul.mubr.f32.gmra.mrb[0].mxu0 %v589
  %v1992 = vpop.f32.mrb[0].mxu0
  %v1993 = vadd.f32 %v1760, %v1992
  %v1994 = vpop.f32.mrb[0].mxu0
  %v1995 = vadd.f32 %v1762, %v1994
  %1996 = vmatprep.mubr.f32.mxu0 %v601
  %1997 = vmatmul.mubr.f32.gmra.mrb[0].mxu0 %v600
  %v1998 = vpop.f32.mrb[0].mxu0
  %v1999 = vadd.f32 %v1766, %v1998
  %v2000 = vpop.f32.mrb[0].mxu0
  %v2001 = vadd.f32 %v1768, %v2000
  %2002 = vmatprep.mubr.f32.mxu0 %v612
  %2003 = vmatmul.mubr.f32.gmra.mrb[0].mxu0 %v611
  %v2004 = vpop.f32.mrb[0].mxu0
  %v2005 = vadd.f32 %v1772, %v2004
  %v2006 = vpop.f32.mrb[0].mxu0
  %v2007 = vadd.f32 %v1774, %v2006
  %2008 = vmatprep.mubr.f32.mxu0 %v623
  %2009 = vmatmul.mubr.f32.gmra.mrb[0].mxu0 %v622
  %v2010 = vpop.f32.mrb[0].mxu0
  %v2011 = vadd.f32 %v1778, %v2010
  %v2012 = vpop.f32.mrb[0].mxu0
  %v2013 = vadd.f32 %v1780, %v2012
  %2014 = vmatprep.mubr.f32.mxu0 %v634
  %2015 = vmatmul.mubr.f32.gmra.mrb[0].mxu0 %v633
  %v2016 = vpop.f32.mrb[0].mxu0
  %v2017 = vadd.f32 %v1784, %v2016
  %v2018 = vpop.f32.mrb[0].mxu0
  %v2019 = vadd.f32 %v1786, %v2018
  %2020 = vmatprep.mubr.f32.mxu0 %v645
  %2021 = vmatmul.mubr.f32.gmra.mrb[0].mxu0 %v644
  %v2022 = vpop.f32.mrb[0].mxu0
  %v2023 = vadd.f32 %v1790, %v2022
  %v2024 = vpop.f32.mrb[0].mxu0
  %v2025 = vadd.f32 %v1792, %v2024
  %2026 = vmatprep.mubr.f32.mxu0 %v656
  %2027 = vmatmul.mubr.f32.gmra.mrb[0].mxu0 %v655
  %v2028 = vpop.f32.mrb[0].mxu0
  %v2029 = vadd.f32 %v1796, %v2028
  %v2030 = vpop.f32.mrb[0].mxu0
  %v2031 = vadd.f32 %v1798, %v2030
  %2032 = vmatprep.mubr.f32.mxu0 %v667
  %2033 = vmatmul.mubr.f32.gmra.mrb[0].mxu0 %v666
  %v2034 = vpop.f32.mrb[0].mxu0
  %v2035 = vadd.f32 %v1802, %v2034
  %v2036 = vpop.f32.mrb[0].mxu0
  %v2037 = vadd.f32 %v1804, %v2036
  %2038 = vmatprep.mubr.f32.mxu0 %v678
  %2039 = vmatmul.mubr.f32.gmra.mrb[0].mxu0 %v677
  %v2040 = vpop.f32.mrb[0].mxu0
  %v2041 = vadd.f32 %v1808, %v2040
  %v2042 = vpop.f32.mrb[0].mxu0
  %v2043 = vadd.f32 %v1810, %v2042
  %2044 = vmatprep.mubr.f32.mxu0 %v689
  %2045 = vmatmul.mubr.f32.gmra.mrb[0].mxu0 %v688
  %v2046 = vpop.f32.mrb[0].mxu0
  %v2047 = vadd.f32 %v1814, %v2046
  %v2048 = vpop.f32.mrb[0].mxu0
  %v2049 = vadd.f32 %v1816, %v2048
  %2050 = vmatprep.mubr.f32.mxu0 %v700
  %2051 = vmatmul.mubr.f32.gmra.mrb[0].mxu0 %v699
  %v2052 = vpop.f32.mrb[0].mxu0
  %v2053 = vadd.f32 %v1820, %v2052
  %v2054 = vpop.f32.mrb[0].mxu0
  %v2055 = vadd.f32 %v1822, %v2054
  %2056 = vdwg.mxu0
  %2057 = vmatprep.subr.mxu0 %v961
  %2058 = vmatpush1.msra.mxu0 %v960
  %2059 = vmatprep.subr.mxu0 %v963
  %2060 = vmatpush1.msra.mxu0 %v962
  %2061 = vmatprep.subr.mxu0 %v965
  %2062 = vmatpush1.msra.mxu0 %v964
  %2063 = vmatprep.subr.mxu0 %v967
  %2064 = vmatpush1.msra.mxu0 %v966
  %2065 = vmatprep.subr.mxu0 %v969
  %2066 = vmatpush1.msra.mxu0 %v968
  %2067 = vmatprep.subr.mxu0 %v971
  %2068 = vmatpush1.msra.mxu0 %v970
  %2069 = vmatprep.subr.mxu0 %v973
  %2070 = vmatpush1.msra.mxu0 %v972
  %2071 = vmatprep.subr.mxu0 %v975
  %2072 = vmatpush1.msra.mxu0 %v974
  %2073 = vmatprep.subr.mxu0 %v977
  %2074 = vmatpush1.msra.mxu0 %v976
  %2075 = vmatprep.subr.mxu0 %v979
  %2076 = vmatpush1.msra.mxu0 %v978
  %2077 = vmatprep.subr.mxu0 %v981
  %2078 = vmatpush1.msra.mxu0 %v980
  %2079 = vmatprep.subr.mxu0 %v983
  %2080 = vmatpush1.msra.mxu0 %v982
  %2081 = vmatprep.subr.mxu0 %v985
  %2082 = vmatpush1.msra.mxu0 %v984
  %2083 = vmatprep.subr.mxu0 %v987
  %2084 = vmatpush1.msra.mxu0 %v986
  %2085 = vmatprep.subr.mxu0 %v989
  %2086 = vmatpush1.msra.mxu0 %v988
  %2087 = vmatprep.subr.mxu0 %v991
  %2088 = vmatpush1.msra.mxu0 %v990
  %2089 = vmatprep.subr.mxu0 %v993
  %2090 = vmatpush1.msra.mxu0 %v992
  %2091 = vmatprep.subr.mxu0 %v995
  %2092 = vmatpush1.msra.mxu0 %v994
  %2093 = vmatprep.subr.mxu0 %v997
  %2094 = vmatpush1.msra.mxu0 %v996
  %2095 = vmatprep.subr.mxu0 %v999
  %2096 = vmatpush1.msra.mxu0 %v998
  %2097 = vmatprep.subr.mxu0 %v1001
  %2098 = vmatpush1.msra.mxu0 %v1000
  %2099 = vmatprep.subr.mxu0 %v1003
  %2100 = vmatpush1.msra.mxu0 %v1002
  %2101 = vmatprep.subr.mxu0 %v1005
  %2102 = vmatpush1.msra.mxu0 %v1004
  %2103 = vmatprep.subr.mxu0 %v1007
  %2104 = vmatpush1.msra.mxu0 %v1006
  %2105 = vmatprep.subr.mxu0 %v1009
  %2106 = vmatpush1.msra.mxu0 %v1008
  %2107 = vmatprep.subr.mxu0 %v1011
  %2108 = vmatpush1.msra.mxu0 %v1010
  %2109 = vmatprep.subr.mxu0 %v1013
  %2110 = vmatpush1.msra.mxu0 %v1012
  %2111 = vmatprep.subr.mxu0 %v1015
  %2112 = vmatpush1.msra.mxu0 %v1014
  %2113 = vmatprep.subr.mxu0 %v1017
  %2114 = vmatpush1.msra.mxu0 %v1016
  %2115 = vmatprep.subr.mxu0 %v1019
  %2116 = vmatpush1.msra.mxu0 %v1018
  %2117 = vmatprep.subr.mxu0 %v1021
  %2118 = vmatpush1.msra.mxu0 %v1020
  %2119 = vmatprep.subr.mxu0 %v1023
  %2120 = vmatpush1.msra.mxu0 %v1022
  %2121 = vmatprep.mubr.f32.mxu0 %v405
  %2122 = vmatmul.mubr.f32.gmra.mrb[0].mxu0 %v404
  %v2123 = vpop.f32.mrb[0].mxu0
  %v2124 = vadd.f32 %v1891, %v2123
  %v2125 = vpop.f32.mrb[0].mxu0
  %v2126 = vadd.f32 %v1893, %v2125
  %2127 = vmatprep.mubr.f32.mxu0 %v416
  %2128 = vmatmul.mubr.f32.gmra.mrb[0].mxu0 %v415
  %v2129 = vpop.f32.mrb[0].mxu0
  %v2130 = vadd.f32 %v1897, %v2129
  %v2131 = vpop.f32.mrb[0].mxu0
  %v2132 = vadd.f32 %v1899, %v2131
  %2133 = vmatprep.mubr.f32.mxu0 %v427
  %2134 = vmatmul.mubr.f32.gmra.mrb[0].mxu0 %v426
  %v2135 = vpop.f32.mrb[0].mxu0
  %v2136 = vadd.f32 %v1903, %v2135
  %v2137 = vpop.f32.mrb[0].mxu0
  %v2138 = vadd.f32 %v1905, %v2137
  %2139 = vmatprep.mubr.f32.mxu0 %v438
  %2140 = vmatmul.mubr.f32.gmra.mrb[0].mxu0 %v437
  %v2141 = vpop.f32.mrb[0].mxu0
  %v2142 = vadd.f32 %v1909, %v2141
  %v2143 = vpop.f32.mrb[0].mxu0
  %v2144 = vadd.f32 %v1911, %v2143
  %2145 = vmatprep.mubr.f32.mxu0 %v449
  %2146 = vmatmul.mubr.f32.gmra.mrb[0].mxu0 %v448
  %v2147 = vpop.f32.mrb[0].mxu0
  %v2148 = vadd.f32 %v1915, %v2147
  %v2149 = vpop.f32.mrb[0].mxu0
  %v2150 = vadd.f32 %v1917, %v2149
  %2151 = vmatprep.mubr.f32.mxu0 %v460
  %2152 = vmatmul.mubr.f32.gmra.mrb[0].mxu0 %v459
  %v2153 = vpop.f32.mrb[0].mxu0
  %v2154 = vadd.f32 %v1921, %v2153
  %v2155 = vpop.f32.mrb[0].mxu0
  %v2156 = vadd.f32 %v1923, %v2155
  %2157 = vmatprep.mubr.f32.mxu0 %v471
  %2158 = vmatmul.mubr.f32.gmra.mrb[0].mxu0 %v470
  %v2159 = vpop.f32.mrb[0].mxu0
  %v2160 = vadd.f32 %v1927, %v2159
  %v2161 = vpop.f32.mrb[0].mxu0
  %v2162 = vadd.f32 %v1929, %v2161
  %2163 = vmatprep.mubr.f32.mxu0 %v482
  %2164 = vmatmul.mubr.f32.gmra.mrb[0].mxu0 %v481
  %v2165 = vpop.f32.mrb[0].mxu0
  %v2166 = vadd.f32 %v1933, %v2165
  %v2167 = vpop.f32.mrb[0].mxu0
  %v2168 = vadd.f32 %v1935, %v2167
  %2169 = vmatprep.mubr.f32.mxu0 %v493
  %2170 = vmatmul.mubr.f32.gmra.mrb[0].mxu0 %v492
  %v2171 = vpop.f32.mrb[0].mxu0
  %v2172 = vadd.f32 %v1939, %v2171
  %v2173 = vpop.f32.mrb[0].mxu0
  %v2174 = vadd.f32 %v1941, %v2173
  %2175 = vmatprep.mubr.f32.mxu0 %v504
  %2176 = vmatmul.mubr.f32.gmra.mrb[0].mxu0 %v503
  %v2177 = vpop.f32.mrb[0].mxu0
  %v2178 = vadd.f32 %v1945, %v2177
  %v2179 = vpop.f32.mrb[0].mxu0
  %v2180 = vadd.f32 %v1947, %v2179
  %2181 = vmatprep.mubr.f32.mxu0 %v515
  %2182 = vmatmul.mubr.f32.gmra.mrb[0].mxu0 %v514
  %v2183 = vpop.f32.mrb[0].mxu0
  %v2184 = vadd.f32 %v1951, %v2183
  %v2185 = vpop.f32.mrb[0].mxu0
  %v2186 = vadd.f32 %v1953, %v2185
  %2187 = vmatprep.mubr.f32.mxu0 %v526
  %2188 = vmatmul.mubr.f32.gmra.mrb[0].mxu0 %v525
  %v2189 = vpop.f32.mrb[0].mxu0
  %v2190 = vadd.f32 %v1957, %v2189
  %v2191 = vpop.f32.mrb[0].mxu0
  %v2192 = vadd.f32 %v1959, %v2191
  %2193 = vmatprep.mubr.f32.mxu0 %v537
  %2194 = vmatmul.mubr.f32.gmra.mrb[0].mxu0 %v536
  %v2195 = vpop.f32.mrb[0].mxu0
  %v2196 = vadd.f32 %v1963, %v2195
  %v2197 = vpop.f32.mrb[0].mxu0
  %v2198 = vadd.f32 %v1965, %v2197
  %2199 = vmatprep.mubr.f32.mxu0 %v548
  %2200 = vmatmul.mubr.f32.gmra.mrb[0].mxu0 %v547
  %v2201 = vpop.f32.mrb[0].mxu0
  %v2202 = vadd.f32 %v1969, %v2201
  %v2203 = vpop.f32.mrb[0].mxu0
  %v2204 = vadd.f32 %v1971, %v2203
  %2205 = vmatprep.mubr.f32.mxu0 %v559
  %2206 = vmatmul.mubr.f32.gmra.mrb[0].mxu0 %v558
  %v2207 = vpop.f32.mrb[0].mxu0
  %v2208 = vadd.f32 %v1975, %v2207
  %v2209 = vpop.f32.mrb[0].mxu0
  %v2210 = vadd.f32 %v1977, %v2209
  %2211 = vmatprep.mubr.f32.mxu0 %v570
  %2212 = vmatmul.mubr.f32.gmra.mrb[0].mxu0 %v569
  %v2213 = vpop.f32.mrb[0].mxu0
  %v2214 = vadd.f32 %v1981, %v2213
  %v2215 = vpop.f32.mrb[0].mxu0
  %v2216 = vadd.f32 %v1983, %v2215
  %2217 = vmatprep.mubr.f32.mxu0 %v581
  %2218 = vmatmul.mubr.f32.gmra.mrb[0].mxu0 %v580
  %v2219 = vpop.f32.mrb[0].mxu0
  %v2220 = vadd.f32 %v1987, %v2219
  %v2221 = vpop.f32.mrb[0].mxu0
  %v2222 = vadd.f32 %v1989, %v2221
  %2223 = vmatprep.mubr.f32.mxu0 %v592
  %2224 = vmatmul.mubr.f32.gmra.mrb[0].mxu0 %v591
  %v2225 = vpop.f32.mrb[0].mxu0
  %v2226 = vadd.f32 %v1993, %v2225
  %v2227 = vpop.f32.mrb[0].mxu0
  %v2228 = vadd.f32 %v1995, %v2227
  %2229 = vmatprep.mubr.f32.mxu0 %v603
  %2230 = vmatmul.mubr.f32.gmra.mrb[0].mxu0 %v602
  %v2231 = vpop.f32.mrb[0].mxu0
  %v2232 = vadd.f32 %v1999, %v2231
  %v2233 = vpop.f32.mrb[0].mxu0
  %v2234 = vadd.f32 %v2001, %v2233
  %2235 = vmatprep.mubr.f32.mxu0 %v614
  %2236 = vmatmul.mubr.f32.gmra.mrb[0].mxu0 %v613
  %v2237 = vpop.f32.mrb[0].mxu0
  %v2238 = vadd.f32 %v2005, %v2237
  %v2239 = vpop.f32.mrb[0].mxu0
  %v2240 = vadd.f32 %v2007, %v2239
  %2241 = vmatprep.mubr.f32.mxu0 %v625
  %2242 = vmatmul.mubr.f32.gmra.mrb[0].mxu0 %v624
  %v2243 = vpop.f32.mrb[0].mxu0
  %v2244 = vadd.f32 %v2011, %v2243
  %v2245 = vpop.f32.mrb[0].mxu0
  %v2246 = vadd.f32 %v2013, %v2245
  %2247 = vmatprep.mubr.f32.mxu0 %v636
  %2248 = vmatmul.mubr.f32.gmra.mrb[0].mxu0 %v635
  %v2249 = vpop.f32.mrb[0].mxu0
  %v2250 = vadd.f32 %v2017, %v2249
  %v2251 = vpop.f32.mrb[0].mxu0
  %v2252 = vadd.f32 %v2019, %v2251
  %2253 = vmatprep.mubr.f32.mxu0 %v647
  %2254 = vmatmul.mubr.f32.gmra.mrb[0].mxu0 %v646
  %v2255 = vpop.f32.mrb[0].mxu0
  %v2256 = vadd.f32 %v2023, %v2255
  %v2257 = vpop.f32.mrb[0].mxu0
  %v2258 = vadd.f32 %v2025, %v2257
  %2259 = vmatprep.mubr.f32.mxu0 %v658
  %2260 = vmatmul.mubr.f32.gmra.mrb[0].mxu0 %v657
  %v2261 = vpop.f32.mrb[0].mxu0
  %v2262 = vadd.f32 %v2029, %v2261
  %v2263 = vpop.f32.mrb[0].mxu0
  %v2264 = vadd.f32 %v2031, %v2263
  %2265 = vmatprep.mubr.f32.mxu0 %v669
  %2266 = vmatmul.mubr.f32.gmra.mrb[0].mxu0 %v668
  %v2267 = vpop.f32.mrb[0].mxu0
  %v2268 = vadd.f32 %v2035, %v2267
  %v2269 = vpop.f32.mrb[0].mxu0
  %v2270 = vadd.f32 %v2037, %v2269
  %2271 = vmatprep.mubr.f32.mxu0 %v680
  %2272 = vmatmul.mubr.f32.gmra.mrb[0].mxu0 %v679
  %v2273 = vpop.f32.mrb[0].mxu0
  %v2274 = vadd.f32 %v2041, %v2273
  %v2275 = vpop.f32.mrb[0].mxu0
  %v2276 = vadd.f32 %v2043, %v2275
  %2277 = vmatprep.mubr.f32.mxu0 %v691
  %2278 = vmatmul.mubr.f32.gmra.mrb[0].mxu0 %v690
  %v2279 = vpop.f32.mrb[0].mxu0
  %v2280 = vadd.f32 %v2047, %v2279
  %v2281 = vpop.f32.mrb[0].mxu0
  %v2282 = vadd.f32 %v2049, %v2281
  %2283 = vmatprep.mubr.f32.mxu0 %v702
  %2284 = vmatmul.mubr.f32.gmra.mrb[0].mxu0 %v701
  %v2285 = vpop.f32.mrb[0].mxu0
  %v2286 = vadd.f32 %v2053, %v2285
  %v2287 = vpop.f32.mrb[0].mxu0
  %v2288 = vadd.f32 %v2055, %v2287
  %2289 = vdwg.mxu0
  %2290 = vmatprep.subr.mxu0 %v1025
  %2291 = vmatpush1.msra.mxu0 %v1024
  %2292 = vmatprep.subr.mxu0 %v1027
  %2293 = vmatpush1.msra.mxu0 %v1026
  %2294 = vmatprep.subr.mxu0 %v1029
  %2295 = vmatpush1.msra.mxu0 %v1028
  %2296 = vmatprep.subr.mxu0 %v1031
  %2297 = vmatpush1.msra.mxu0 %v1030
  %2298 = vmatprep.subr.mxu0 %v1033
  %2299 = vmatpush1.msra.mxu0 %v1032
  %2300 = vmatprep.subr.mxu0 %v1035
  %2301 = vmatpush1.msra.mxu0 %v1034
  %2302 = vmatprep.subr.mxu0 %v1037
  %2303 = vmatpush1.msra.mxu0 %v1036
  %2304 = vmatprep.subr.mxu0 %v1039
  %2305 = vmatpush1.msra.mxu0 %v1038
  %2306 = vmatprep.subr.mxu0 0.0
  %2307 = vmatpush1.msra.mxu0 0.0
  %2308 = vmatprep.subr.mxu0 0.0
  %2309 = vmatpush1.msra.mxu0 0.0
  %2310 = vmatprep.subr.mxu0 0.0
  %2311 = vmatpush1.msra.mxu0 0.0
  %2312 = vmatprep.subr.mxu0 0.0
  %2313 = vmatpush1.msra.mxu0 0.0
  %2314 = vmatprep.subr.mxu0 0.0
  %2315 = vmatpush1.msra.mxu0 0.0
  %2316 = vmatprep.subr.mxu0 0.0
  %2317 = vmatpush1.msra.mxu0 0.0
  %2318 = vmatprep.subr.mxu0 0.0
  %2319 = vmatpush1.msra.mxu0 0.0
  %2320 = vmatprep.subr.mxu0 0.0
  %2321 = vmatpush1.msra.mxu0 0.0
  %2322 = vmatprep.subr.mxu0 0.0
  %2323 = vmatpush1.msra.mxu0 0.0
  %2324 = vmatprep.subr.mxu0 0.0
  %2325 = vmatpush1.msra.mxu0 0.0
  %2326 = vmatprep.subr.mxu0 0.0
  %2327 = vmatpush1.msra.mxu0 0.0
  %2328 = vmatprep.subr.mxu0 0.0
  %2329 = vmatpush1.msra.mxu0 0.0
  %2330 = vmatprep.subr.mxu0 0.0
  %2331 = vmatpush1.msra.mxu0 0.0
  %2332 = vmatprep.subr.mxu0 0.0
  %2333 = vmatpush1.msra.mxu0 0.0
  %2334 = vmatprep.subr.mxu0 0.0
  %2335 = vmatpush1.msra.mxu0 0.0
  %2336 = vmatprep.subr.mxu0 0.0
  %2337 = vmatpush1.msra.mxu0 0.0
  %2338 = vmatprep.subr.mxu0 0.0
  %2339 = vmatpush1.msra.mxu0 0.0
  %2340 = vmatprep.subr.mxu0 0.0
  %2341 = vmatpush1.msra.mxu0 0.0
  %2342 = vmatprep.subr.mxu0 0.0
  %2343 = vmatpush1.msra.mxu0 0.0
  %2344 = vmatprep.subr.mxu0 0.0
  %2345 = vmatpush1.msra.mxu0 0.0
  %2346 = vmatprep.subr.mxu0 0.0
  %2347 = vmatpush1.msra.mxu0 0.0
  %2348 = vmatprep.subr.mxu0 0.0
  %2349 = vmatpush1.msra.mxu0 0.0
  %2350 = vmatprep.subr.mxu0 0.0
  %2351 = vmatpush1.msra.mxu0 0.0
  %2352 = vmatprep.subr.mxu0 0.0
  %2353 = vmatpush1.msra.mxu0 0.0
  %2354 = vmatprep.mubr.f32.mxu0 0.0
  %2355 = vmatmul.mubr.f32.gmra.mrb[0].mxu0 %v1042
  %v2356 = vpop.f32.mrb[0].mxu0
  %v2357 = vadd.f32 %v2124, %v2356
  %v2358 = vpop.f32.mrb[0].mxu0
  %v2359 = vadd.f32 %v2126, %v2358
  %2360 = vmatprep.mubr.f32.mxu0 0.0
  %2361 = vmatmul.mubr.f32.gmra.mrb[0].mxu0 %v1045
  %v2362 = vpop.f32.mrb[0].mxu0
  %v2363 = vadd.f32 %v2130, %v2362
  %v2364 = vpop.f32.mrb[0].mxu0
  %v2365 = vadd.f32 %v2132, %v2364
  %2366 = vmatprep.mubr.f32.mxu0 0.0
  %2367 = vmatmul.mubr.f32.gmra.mrb[0].mxu0 %v1048
  %v2368 = vpop.f32.mrb[0].mxu0
  %v2369 = vadd.f32 %v2136, %v2368
  %v2370 = vpop.f32.mrb[0].mxu0
  %v2371 = vadd.f32 %v2138, %v2370
  %2372 = vmatprep.mubr.f32.mxu0 0.0
  %2373 = vmatmul.mubr.f32.gmra.mrb[0].mxu0 %v1051
  %v2374 = vpop.f32.mrb[0].mxu0
  %v2375 = vadd.f32 %v2142, %v2374
  %v2376 = vpop.f32.mrb[0].mxu0
  %v2377 = vadd.f32 %v2144, %v2376
  %2378 = vmatprep.mubr.f32.mxu0 0.0
  %2379 = vmatmul.mubr.f32.gmra.mrb[0].mxu0 %v1054
  %v2380 = vpop.f32.mrb[0].mxu0
  %v2381 = vadd.f32 %v2148, %v2380
  %v2382 = vpop.f32.mrb[0].mxu0
  %v2383 = vadd.f32 %v2150, %v2382
  %2384 = vmatprep.mubr.f32.mxu0 0.0
  %2385 = vmatmul.mubr.f32.gmra.mrb[0].mxu0 %v1057
  %v2386 = vpop.f32.mrb[0].mxu0
  %v2387 = vadd.f32 %v2154, %v2386
  %v2388 = vpop.f32.mrb[0].mxu0
  %v2389 = vadd.f32 %v2156, %v2388
  %2390 = vmatprep.mubr.f32.mxu0 0.0
  %2391 = vmatmul.mubr.f32.gmra.mrb[0].mxu0 %v1060
  %v2392 = vpop.f32.mrb[0].mxu0
  %v2393 = vadd.f32 %v2160, %v2392
  %v2394 = vpop.f32.mrb[0].mxu0
  %v2395 = vadd.f32 %v2162, %v2394
  %2396 = vmatprep.mubr.f32.mxu0 0.0
  %2397 = vmatmul.mubr.f32.gmra.mrb[0].mxu0 %v1063
  %v2398 = vpop.f32.mrb[0].mxu0
  %v2399 = vadd.f32 %v2166, %v2398
  %v2400 = vpop.f32.mrb[0].mxu0
  %v2401 = vadd.f32 %v2168, %v2400
  %2402 = vmatprep.mubr.f32.mxu0 0.0
  %2403 = vmatmul.mubr.f32.gmra.mrb[0].mxu0 %v1066
  %v2404 = vpop.f32.mrb[0].mxu0
  %v2405 = vadd.f32 %v2172, %v2404
  %v2406 = vpop.f32.mrb[0].mxu0
  %v2407 = vadd.f32 %v2174, %v2406
  %2408 = vmatprep.mubr.f32.mxu0 0.0
  %2409 = vmatmul.mubr.f32.gmra.mrb[0].mxu0 %v1069
  %v2410 = vpop.f32.mrb[0].mxu0
  %v2411 = vadd.f32 %v2178, %v2410
  %v2412 = vpop.f32.mrb[0].mxu0
  %v2413 = vadd.f32 %v2180, %v2412
  %2414 = vmatprep.mubr.f32.mxu0 0.0
  %2415 = vmatmul.mubr.f32.gmra.mrb[0].mxu0 %v1072
  %v2416 = vpop.f32.mrb[0].mxu0
  %v2417 = vadd.f32 %v2184, %v2416
  %v2418 = vpop.f32.mrb[0].mxu0
  %v2419 = vadd.f32 %v2186, %v2418
  %2420 = vmatprep.mubr.f32.mxu0 0.0
  %2421 = vmatmul.mubr.f32.gmra.mrb[0].mxu0 %v1075
  %v2422 = vpop.f32.mrb[0].mxu0
  %v2423 = vadd.f32 %v2190, %v2422
  %v2424 = vpop.f32.mrb[0].mxu0
  %v2425 = vadd.f32 %v2192, %v2424
  %2426 = vmatprep.mubr.f32.mxu0 0.0
  %2427 = vmatmul.mubr.f32.gmra.mrb[0].mxu0 %v1078
  %v2428 = vpop.f32.mrb[0].mxu0
  %v2429 = vadd.f32 %v2196, %v2428
  %v2430 = vpop.f32.mrb[0].mxu0
  %v2431 = vadd.f32 %v2198, %v2430
  %2432 = vmatprep.mubr.f32.mxu0 0.0
  %2433 = vmatmul.mubr.f32.gmra.mrb[0].mxu0 %v1081
  %v2434 = vpop.f32.mrb[0].mxu0
  %v2435 = vadd.f32 %v2202, %v2434
  %v2436 = vpop.f32.mrb[0].mxu0
  %v2437 = vadd.f32 %v2204, %v2436
  %2438 = vmatprep.mubr.f32.mxu0 0.0
  %2439 = vmatmul.mubr.f32.gmra.mrb[0].mxu0 %v1084
  %v2440 = vpop.f32.mrb[0].mxu0
  %v2441 = vadd.f32 %v2208, %v2440
  %v2442 = vpop.f32.mrb[0].mxu0
  %v2443 = vadd.f32 %v2210, %v2442
  %2444 = vmatprep.mubr.f32.mxu0 0.0
  %2445 = vmatmul.mubr.f32.gmra.mrb[0].mxu0 %v1087
  %v2446 = vpop.f32.mrb[0].mxu0
  %v2447 = vadd.f32 %v2214, %v2446
  %v2448 = vpop.f32.mrb[0].mxu0
  %v2449 = vadd.f32 %v2216, %v2448
  %2450 = vmatprep.mubr.f32.mxu0 0.0
  %2451 = vmatmul.mubr.f32.gmra.mrb[0].mxu0 %v1090
  %v2452 = vpop.f32.mrb[0].mxu0
  %v2453 = vadd.f32 %v2220, %v2452
  %v2454 = vpop.f32.mrb[0].mxu0
  %v2455 = vadd.f32 %v2222, %v2454
  %2456 = vmatprep.mubr.f32.mxu0 0.0
  %2457 = vmatmul.mubr.f32.gmra.mrb[0].mxu0 %v1093
  %v2458 = vpop.f32.mrb[0].mxu0
  %v2459 = vadd.f32 %v2226, %v2458
  %v2460 = vpop.f32.mrb[0].mxu0
  %v2461 = vadd.f32 %v2228, %v2460
  %2462 = vmatprep.mubr.f32.mxu0 0.0
  %2463 = vmatmul.mubr.f32.gmra.mrb[0].mxu0 %v1096
  %v2464 = vpop.f32.mrb[0].mxu0
  %v2465 = vadd.f32 %v2232, %v2464
  %v2466 = vpop.f32.mrb[0].mxu0
  %v2467 = vadd.f32 %v2234, %v2466
  %2468 = vmatprep.mubr.f32.mxu0 0.0
  %2469 = vmatmul.mubr.f32.gmra.mrb[0].mxu0 %v1099
  %v2470 = vpop.f32.mrb[0].mxu0
  %v2471 = vadd.f32 %v2238, %v2470
  %v2472 = vpop.f32.mrb[0].mxu0
  %v2473 = vadd.f32 %v2240, %v2472
  %2474 = vmatprep.mubr.f32.mxu0 0.0
  %2475 = vmatmul.mubr.f32.gmra.mrb[0].mxu0 %v1102
  %v2476 = vpop.f32.mrb[0].mxu0
  %v2477 = vadd.f32 %v2244, %v2476
  %v2478 = vpop.f32.mrb[0].mxu0
  %v2479 = vadd.f32 %v2246, %v2478
  %2480 = vmatprep.mubr.f32.mxu0 0.0
  %2481 = vmatmul.mubr.f32.gmra.mrb[0].mxu0 %v1105
  %v2482 = vpop.f32.mrb[0].mxu0
  %v2483 = vadd.f32 %v2250, %v2482
  %v2484 = vpop.f32.mrb[0].mxu0
  %v2485 = vadd.f32 %v2252, %v2484
  %2486 = vmatprep.mubr.f32.mxu0 0.0
  %2487 = vmatmul.mubr.f32.gmra.mrb[0].mxu0 %v1108
  %v2488 = vpop.f32.mrb[0].mxu0
  %v2489 = vadd.f32 %v2256, %v2488
  %v2490 = vpop.f32.mrb[0].mxu0
  %v2491 = vadd.f32 %v2258, %v2490
  %2492 = vmatprep.mubr.f32.mxu0 0.0
  %2493 = vmatmul.mubr.f32.gmra.mrb[0].mxu0 %v1111
  %v2494 = vpop.f32.mrb[0].mxu0
  %v2495 = vadd.f32 %v2262, %v2494
  %v2496 = vpop.f32.mrb[0].mxu0
  %v2497 = vadd.f32 %v2264, %v2496
  %2498 = vmatprep.mubr.f32.mxu0 0.0
  %2499 = vmatmul.mubr.f32.gmra.mrb[0].mxu0 %v1114
  %v2500 = vpop.f32.mrb[0].mxu0
  %v2501 = vadd.f32 %v2268, %v2500
  %v2502 = vpop.f32.mrb[0].mxu0
  %v2503 = vadd.f32 %v2270, %v2502
  %2504 = vmatprep.mubr.f32.mxu0 0.0
  %2505 = vmatmul.mubr.f32.gmra.mrb[0].mxu0 %v1117
  %v2506 = vpop.f32.mrb[0].mxu0
  %v2507 = vadd.f32 %v2274, %v2506
  %v2508 = vpop.f32.mrb[0].mxu0
  %v2509 = vadd.f32 %v2276, %v2508
  %2510 = vmatprep.mubr.f32.mxu0 0.0
  %2511 = vmatmul.mubr.f32.gmra.mrb[0].mxu0 %v1120
  %v2512 = vpop.f32.mrb[0].mxu0
  %v2513 = vadd.f32 %v2280, %v2512
  %v2514 = vpop.f32.mrb[0].mxu0
  %v2515 = vadd.f32 %v2282, %v2514
  %2516 = vmatprep.mubr.f32.mxu0 0.0
  %2517 = vmatmul.mubr.f32.gmra.mrb[0].mxu0 %v1123
  %v2518 = vpop.f32.mrb[0].mxu0
  %v2519 = vadd.f32 %v2286, %v2518
  %v2520 = vpop.f32.mrb[0].mxu0
  %v2521 = vadd.f32 %v2288, %v2520
  %2522 = vdwg.mxu0
  %vm2523 = vcmask 556032
  %v2524 = vsel %vm2523, %v2359, 0.0
  %v2525 = vadd.f32 %v2357, %v2524
  %2526 = vadd.xlane.f32.xlu0 %v2525
  %v2527 = vpop.xlane.xlu0 %2526
  %v2528 = vsel %vm2523, %v2365, 0.0
  %v2529 = vadd.f32 %v2363, %v2528
  %2530 = vadd.xlane.f32.xlu0 %v2529
  %v2531 = vpop.xlane.xlu0 %2530
  %v2532 = vsel %vm2523, %v2371, 0.0
  %v2533 = vadd.f32 %v2369, %v2532
  %2534 = vadd.xlane.f32.xlu0 %v2533
  %v2535 = vpop.xlane.xlu0 %2534
  %v2536 = vsel %vm2523, %v2377, 0.0
  %v2537 = vadd.f32 %v2375, %v2536
  %2538 = vadd.xlane.f32.xlu0 %v2537
  %v2539 = vpop.xlane.xlu0 %2538
  %v2540 = vsel %vm2523, %v2383, 0.0
  %v2541 = vadd.f32 %v2381, %v2540
  %2542 = vadd.xlane.f32.xlu0 %v2541
  %v2543 = vpop.xlane.xlu0 %2542
  %v2544 = vsel %vm2523, %v2389, 0.0
  %v2545 = vadd.f32 %v2387, %v2544
  %2546 = vadd.xlane.f32.xlu0 %v2545
  %v2547 = vpop.xlane.xlu0 %2546
  %v2548 = vsel %vm2523, %v2395, 0.0
  %v2549 = vadd.f32 %v2393, %v2548
  %2550 = vadd.xlane.f32.xlu0 %v2549
  %v2551 = vpop.xlane.xlu0 %2550
  %v2552 = vsel %vm2523, %v2401, 0.0
  %v2553 = vadd.f32 %v2399, %v2552
  %2554 = vadd.xlane.f32.xlu0 %v2553
  %v2555 = vpop.xlane.xlu0 %2554
  %v2556 = vsel %vm2523, %v2407, 0.0
  %v2557 = vadd.f32 %v2405, %v2556
  %2558 = vadd.xlane.f32.xlu0 %v2557
  %v2559 = vpop.xlane.xlu0 %2558
  %v2560 = vsel %vm2523, %v2413, 0.0
  %v2561 = vadd.f32 %v2411, %v2560
  %2562 = vadd.xlane.f32.xlu0 %v2561
  %v2563 = vpop.xlane.xlu0 %2562
  %v2564 = vsel %vm2523, %v2419, 0.0
  %v2565 = vadd.f32 %v2417, %v2564
  %2566 = vadd.xlane.f32.xlu0 %v2565
  %v2567 = vpop.xlane.xlu0 %2566
  %v2568 = vsel %vm2523, %v2425, 0.0
  %v2569 = vadd.f32 %v2423, %v2568
  %2570 = vadd.xlane.f32.xlu0 %v2569
  %v2571 = vpop.xlane.xlu0 %2570
  %v2572 = vsel %vm2523, %v2431, 0.0
  %v2573 = vadd.f32 %v2429, %v2572
  %2574 = vadd.xlane.f32.xlu0 %v2573
  %v2575 = vpop.xlane.xlu0 %2574
  %v2576 = vsel %vm2523, %v2437, 0.0
  %v2577 = vadd.f32 %v2435, %v2576
  %2578 = vadd.xlane.f32.xlu0 %v2577
  %v2579 = vpop.xlane.xlu0 %2578
  %v2580 = vsel %vm2523, %v2443, 0.0
  %v2581 = vadd.f32 %v2441, %v2580
  %2582 = vadd.xlane.f32.xlu0 %v2581
  %v2583 = vpop.xlane.xlu0 %2582
  %v2584 = vsel %vm2523, %v2449, 0.0
  %v2585 = vadd.f32 %v2447, %v2584
  %2586 = vadd.xlane.f32.xlu0 %v2585
  %v2587 = vpop.xlane.xlu0 %2586
  %v2588 = vsel %vm2523, %v2455, 0.0
  %v2589 = vadd.f32 %v2453, %v2588
  %2590 = vadd.xlane.f32.xlu0 %v2589
  %v2591 = vpop.xlane.xlu0 %2590
  %v2592 = vsel %vm2523, %v2461, 0.0
  %v2593 = vadd.f32 %v2459, %v2592
  %2594 = vadd.xlane.f32.xlu0 %v2593
  %v2595 = vpop.xlane.xlu0 %2594
  %v2596 = vsel %vm2523, %v2467, 0.0
  %v2597 = vadd.f32 %v2465, %v2596
  %2598 = vadd.xlane.f32.xlu0 %v2597
  %v2599 = vpop.xlane.xlu0 %2598
  %v2600 = vsel %vm2523, %v2473, 0.0
  %v2601 = vadd.f32 %v2471, %v2600
  %2602 = vadd.xlane.f32.xlu0 %v2601
  %v2603 = vpop.xlane.xlu0 %2602
  %v2604 = vsel %vm2523, %v2479, 0.0
  %v2605 = vadd.f32 %v2477, %v2604
  %2606 = vadd.xlane.f32.xlu0 %v2605
  %v2607 = vpop.xlane.xlu0 %2606
  %v2608 = vsel %vm2523, %v2485, 0.0
  %v2609 = vadd.f32 %v2483, %v2608
  %2610 = vadd.xlane.f32.xlu0 %v2609
  %v2611 = vpop.xlane.xlu0 %2610
  %v2612 = vsel %vm2523, %v2491, 0.0
  %v2613 = vadd.f32 %v2489, %v2612
  %2614 = vadd.xlane.f32.xlu0 %v2613
  %v2615 = vpop.xlane.xlu0 %2614
  %v2616 = vsel %vm2523, %v2497, 0.0
  %v2617 = vadd.f32 %v2495, %v2616
  %2618 = vadd.xlane.f32.xlu0 %v2617
  %v2619 = vpop.xlane.xlu0 %2618
  %v2620 = vsel %vm2523, %v2503, 0.0
  %v2621 = vadd.f32 %v2501, %v2620
  %2622 = vadd.xlane.f32.xlu0 %v2621
  %v2623 = vpop.xlane.xlu0 %2622
  %v2624 = vsel %vm2523, %v2509, 0.0
  %v2625 = vadd.f32 %v2507, %v2624
  %2626 = vadd.xlane.f32.xlu0 %v2625
  %v2627 = vpop.xlane.xlu0 %2626
  %v2628 = vsel %vm2523, %v2515, 0.0
  %v2629 = vadd.f32 %v2513, %v2628
  %2630 = vadd.xlane.f32.xlu0 %v2629
  %v2631 = vpop.xlane.xlu0 %2630
  %v2632 = vsel %vm2523, %v2521, 0.0
  %v2633 = vadd.f32 %v2519, %v2632
  %2634 = vadd.xlane.f32.xlu0 %v2633
  %v2635 = vpop.xlane.xlu0 %2634
  %v2636 = vmul.f32 %v2357, %v2357
  %v2637 = vmul.f32 %v2359, %v2359
  %v2638 = vmul.f32 %v2363, %v2363
  %v2639 = vmul.f32 %v2365, %v2365
  %v2640 = vmul.f32 %v2369, %v2369
  %v2641 = vmul.f32 %v2371, %v2371
  %v2642 = vmul.f32 %v2375, %v2375
  %v2643 = vmul.f32 %v2377, %v2377
  %v2644 = vmul.f32 %v2381, %v2381
  %v2645 = vmul.f32 %v2383, %v2383
  %v2646 = vmul.f32 %v2387, %v2387
  %v2647 = vmul.f32 %v2389, %v2389
  %v2648 = vmul.f32 %v2393, %v2393
  %v2649 = vmul.f32 %v2395, %v2395
  %v2650 = vmul.f32 %v2399, %v2399
  %v2651 = vmul.f32 %v2401, %v2401
  %v2652 = vmul.f32 %v2405, %v2405
  %v2653 = vmul.f32 %v2407, %v2407
  %v2654 = vmul.f32 %v2411, %v2411
  %v2655 = vmul.f32 %v2413, %v2413
  %v2656 = vmul.f32 %v2417, %v2417
  %v2657 = vmul.f32 %v2419, %v2419
  %v2658 = vmul.f32 %v2423, %v2423
  %v2659 = vmul.f32 %v2425, %v2425
  %v2660 = vmul.f32 %v2429, %v2429
  %v2661 = vmul.f32 %v2431, %v2431
  %v2662 = vmul.f32 %v2435, %v2435
  %v2663 = vmul.f32 %v2437, %v2437
  %v2664 = vmul.f32 %v2441, %v2441
  %v2665 = vmul.f32 %v2443, %v2443
  %v2666 = vmul.f32 %v2447, %v2447
  %v2667 = vmul.f32 %v2449, %v2449
  %v2668 = vmul.f32 %v2453, %v2453
  %v2669 = vmul.f32 %v2455, %v2455
  %v2670 = vmul.f32 %v2459, %v2459
  %v2671 = vmul.f32 %v2461, %v2461
  %v2672 = vmul.f32 %v2465, %v2465
  %v2673 = vmul.f32 %v2467, %v2467
  %v2674 = vmul.f32 %v2471, %v2471
  %v2675 = vmul.f32 %v2473, %v2473
  %v2676 = vmul.f32 %v2477, %v2477
  %v2677 = vmul.f32 %v2479, %v2479
  %v2678 = vmul.f32 %v2483, %v2483
  %v2679 = vmul.f32 %v2485, %v2485
  %v2680 = vmul.f32 %v2489, %v2489
  %v2681 = vmul.f32 %v2491, %v2491
  %v2682 = vmul.f32 %v2495, %v2495
  %v2683 = vmul.f32 %v2497, %v2497
  %v2684 = vmul.f32 %v2501, %v2501
  %v2685 = vmul.f32 %v2503, %v2503
  %v2686 = vmul.f32 %v2507, %v2507
  %v2687 = vmul.f32 %v2509, %v2509
  %v2688 = vmul.f32 %v2513, %v2513
  %v2689 = vmul.f32 %v2515, %v2515
  %v2690 = vmul.f32 %v2519, %v2519
  %v2691 = vmul.f32 %v2521, %v2521
  %v2692 = vsel %vm2523, %v2637, 0.0
  %v2693 = vadd.f32 %v2636, %v2692
  %2694 = vadd.xlane.f32.xlu0 %v2693
  %v2695 = vpop.xlane.xlu0 %2694
  %v2696 = vsel %vm2523, %v2639, 0.0
  %v2697 = vadd.f32 %v2638, %v2696
  %2698 = vadd.xlane.f32.xlu0 %v2697
  %v2699 = vpop.xlane.xlu0 %2698
  %v2700 = vsel %vm2523, %v2641, 0.0
  %v2701 = vadd.f32 %v2640, %v2700
  %2702 = vadd.xlane.f32.xlu0 %v2701
  %v2703 = vpop.xlane.xlu0 %2702
  %v2704 = vsel %vm2523, %v2643, 0.0
  %v2705 = vadd.f32 %v2642, %v2704
  %2706 = vadd.xlane.f32.xlu0 %v2705
  %v2707 = vpop.xlane.xlu0 %2706
  %v2708 = vsel %vm2523, %v2645, 0.0
  %v2709 = vadd.f32 %v2644, %v2708
  %2710 = vadd.xlane.f32.xlu0 %v2709
  %v2711 = vpop.xlane.xlu0 %2710
  %v2712 = vsel %vm2523, %v2647, 0.0
  %v2713 = vadd.f32 %v2646, %v2712
  %2714 = vadd.xlane.f32.xlu0 %v2713
  %v2715 = vpop.xlane.xlu0 %2714
  %v2716 = vsel %vm2523, %v2649, 0.0
  %v2717 = vadd.f32 %v2648, %v2716
  %2718 = vadd.xlane.f32.xlu0 %v2717
  %v2719 = vpop.xlane.xlu0 %2718
  %v2720 = vsel %vm2523, %v2651, 0.0
  %v2721 = vadd.f32 %v2650, %v2720
  %2722 = vadd.xlane.f32.xlu0 %v2721
  %v2723 = vpop.xlane.xlu0 %2722
  %v2724 = vsel %vm2523, %v2653, 0.0
  %v2725 = vadd.f32 %v2652, %v2724
  %2726 = vadd.xlane.f32.xlu0 %v2725
  %v2727 = vpop.xlane.xlu0 %2726
  %v2728 = vsel %vm2523, %v2655, 0.0
  %v2729 = vadd.f32 %v2654, %v2728
  %2730 = vadd.xlane.f32.xlu0 %v2729
  %v2731 = vpop.xlane.xlu0 %2730
  %v2732 = vsel %vm2523, %v2657, 0.0
  %v2733 = vadd.f32 %v2656, %v2732
  %2734 = vadd.xlane.f32.xlu0 %v2733
  %v2735 = vpop.xlane.xlu0 %2734
  %v2736 = vsel %vm2523, %v2659, 0.0
  %v2737 = vadd.f32 %v2658, %v2736
  %2738 = vadd.xlane.f32.xlu0 %v2737
  %v2739 = vpop.xlane.xlu0 %2738
  %v2740 = vsel %vm2523, %v2661, 0.0
  %v2741 = vadd.f32 %v2660, %v2740
  %2742 = vadd.xlane.f32.xlu0 %v2741
  %v2743 = vpop.xlane.xlu0 %2742
  %v2744 = vsel %vm2523, %v2663, 0.0
  %v2745 = vadd.f32 %v2662, %v2744
  %2746 = vadd.xlane.f32.xlu0 %v2745
  %v2747 = vpop.xlane.xlu0 %2746
  %v2748 = vsel %vm2523, %v2665, 0.0
  %v2749 = vadd.f32 %v2664, %v2748
  %2750 = vadd.xlane.f32.xlu0 %v2749
  %v2751 = vpop.xlane.xlu0 %2750
  %v2752 = vsel %vm2523, %v2667, 0.0
  %v2753 = vadd.f32 %v2666, %v2752
  %2754 = vadd.xlane.f32.xlu0 %v2753
  %v2755 = vpop.xlane.xlu0 %2754
  %v2756 = vsel %vm2523, %v2669, 0.0
  %v2757 = vadd.f32 %v2668, %v2756
  %2758 = vadd.xlane.f32.xlu0 %v2757
  %v2759 = vpop.xlane.xlu0 %2758
  %v2760 = vsel %vm2523, %v2671, 0.0
  %v2761 = vadd.f32 %v2670, %v2760
  %2762 = vadd.xlane.f32.xlu0 %v2761
  %v2763 = vpop.xlane.xlu0 %2762
  %v2764 = vsel %vm2523, %v2673, 0.0
  %v2765 = vadd.f32 %v2672, %v2764
  %2766 = vadd.xlane.f32.xlu0 %v2765
  %v2767 = vpop.xlane.xlu0 %2766
  %v2768 = vsel %vm2523, %v2675, 0.0
  %v2769 = vadd.f32 %v2674, %v2768
  %2770 = vadd.xlane.f32.xlu0 %v2769
  %v2771 = vpop.xlane.xlu0 %2770
  %v2772 = vsel %vm2523, %v2677, 0.0
  %v2773 = vadd.f32 %v2676, %v2772
  %2774 = vadd.xlane.f32.xlu0 %v2773
  %v2775 = vpop.xlane.xlu0 %2774
  %v2776 = vsel %vm2523, %v2679, 0.0
  %v2777 = vadd.f32 %v2678, %v2776
  %2778 = vadd.xlane.f32.xlu0 %v2777
  %v2779 = vpop.xlane.xlu0 %2778
  %v2780 = vsel %vm2523, %v2681, 0.0
  %v2781 = vadd.f32 %v2680, %v2780
  %2782 = vadd.xlane.f32.xlu0 %v2781
  %v2783 = vpop.xlane.xlu0 %2782
  %v2784 = vsel %vm2523, %v2683, 0.0
  %v2785 = vadd.f32 %v2682, %v2784
  %2786 = vadd.xlane.f32.xlu0 %v2785
  %v2787 = vpop.xlane.xlu0 %2786
  %v2788 = vsel %vm2523, %v2685, 0.0
  %v2789 = vadd.f32 %v2684, %v2788
  %2790 = vadd.xlane.f32.xlu0 %v2789
  %v2791 = vpop.xlane.xlu0 %2790
  %v2792 = vsel %vm2523, %v2687, 0.0
  %v2793 = vadd.f32 %v2686, %v2792
  %2794 = vadd.xlane.f32.xlu0 %v2793
  %v2795 = vpop.xlane.xlu0 %2794
  %v2796 = vsel %vm2523, %v2689, 0.0
  %v2797 = vadd.f32 %v2688, %v2796
  %2798 = vadd.xlane.f32.xlu0 %v2797
  %v2799 = vpop.xlane.xlu0 %2798
  %v2800 = vsel %vm2523, %v2691, 0.0
  %v2801 = vadd.f32 %v2690, %v2800
  %2802 = vadd.xlane.f32.xlu0 %v2801
  %v2803 = vpop.xlane.xlu0 %2802
  %v2804 = vmul.f32 %v2527, 0.0051020407
  %v2805 = vmul.f32 %v2531, 0.0051020407
  %v2806 = vmul.f32 %v2535, 0.0051020407
  %v2807 = vmul.f32 %v2539, 0.0051020407
  %v2808 = vmul.f32 %v2543, 0.0051020407
  %v2809 = vmul.f32 %v2547, 0.0051020407
  %v2810 = vmul.f32 %v2551, 0.0051020407
  %v2811 = vmul.f32 %v2555, 0.0051020407
  %v2812 = vmul.f32 %v2559, 0.0051020407
  %v2813 = vmul.f32 %v2563, 0.0051020407
  %v2814 = vmul.f32 %v2567, 0.0051020407
  %v2815 = vmul.f32 %v2571, 0.0051020407
  %v2816 = vmul.f32 %v2575, 0.0051020407
  %v2817 = vmul.f32 %v2579, 0.0051020407
  %v2818 = vmul.f32 %v2583, 0.0051020407
  %v2819 = vmul.f32 %v2587, 0.0051020407
  %v2820 = vmul.f32 %v2591, 0.0051020407
  %v2821 = vmul.f32 %v2595, 0.0051020407
  %v2822 = vmul.f32 %v2599, 0.0051020407
  %v2823 = vmul.f32 %v2603, 0.0051020407
  %v2824 = vmul.f32 %v2607, 0.0051020407
  %v2825 = vmul.f32 %v2611, 0.0051020407
  %v2826 = vmul.f32 %v2615, 0.0051020407
  %v2827 = vmul.f32 %v2619, 0.0051020407
  %v2828 = vmul.f32 %v2623, 0.0051020407
  %v2829 = vmul.f32 %v2627, 0.0051020407
  %v2830 = vmul.f32 %v2631, 0.0051020407
  %v2831 = vmul.f32 %v2635, 0.0051020407
  %v2832 = vmul.f32 %v2695, 0.0051020407
  %v2833 = vmul.f32 %v2699, 0.0051020407
  %v2834 = vmul.f32 %v2703, 0.0051020407
  %v2835 = vmul.f32 %v2707, 0.0051020407
  %v2836 = vmul.f32 %v2711, 0.0051020407
  %v2837 = vmul.f32 %v2715, 0.0051020407
  %v2838 = vmul.f32 %v2719, 0.0051020407
  %v2839 = vmul.f32 %v2723, 0.0051020407
  %v2840 = vmul.f32 %v2727, 0.0051020407
  %v2841 = vmul.f32 %v2731, 0.0051020407
  %v2842 = vmul.f32 %v2735, 0.0051020407
  %v2843 = vmul.f32 %v2739, 0.0051020407
  %v2844 = vmul.f32 %v2743, 0.0051020407
  %v2845 = vmul.f32 %v2747, 0.0051020407
  %v2846 = vmul.f32 %v2751, 0.0051020407
  %v2847 = vmul.f32 %v2755, 0.0051020407
  %v2848 = vmul.f32 %v2759, 0.0051020407
  %v2849 = vmul.f32 %v2763, 0.0051020407
  %v2850 = vmul.f32 %v2767, 0.0051020407
  %v2851 = vmul.f32 %v2771, 0.0051020407
  %v2852 = vmul.f32 %v2775, 0.0051020407
  %v2853 = vmul.f32 %v2779, 0.0051020407
  %v2854 = vmul.f32 %v2783, 0.0051020407
  %v2855 = vmul.f32 %v2787, 0.0051020407
  %v2856 = vmul.f32 %v2791, 0.0051020407
  %v2857 = vmul.f32 %v2795, 0.0051020407
  %v2858 = vmul.f32 %v2799, 0.0051020407
  %v2859 = vmul.f32 %v2803, 0.0051020407
  %v2860 = vmul.f32 %v2804, %v2804
  %v2861 = vmul.f32 %v2805, %v2805
  %v2862 = vmul.f32 %v2806, %v2806
  %v2863 = vmul.f32 %v2807, %v2807
  %v2864 = vmul.f32 %v2808, %v2808
  %v2865 = vmul.f32 %v2809, %v2809
  %v2866 = vmul.f32 %v2810, %v2810
  %v2867 = vmul.f32 %v2811, %v2811
  %v2868 = vmul.f32 %v2812, %v2812
  %v2869 = vmul.f32 %v2813, %v2813
  %v2870 = vmul.f32 %v2814, %v2814
  %v2871 = vmul.f32 %v2815, %v2815
  %v2872 = vmul.f32 %v2816, %v2816
  %v2873 = vmul.f32 %v2817, %v2817
  %v2874 = vmul.f32 %v2818, %v2818
  %v2875 = vmul.f32 %v2819, %v2819
  %v2876 = vmul.f32 %v2820, %v2820
  %v2877 = vmul.f32 %v2821, %v2821
  %v2878 = vmul.f32 %v2822, %v2822
  %v2879 = vmul.f32 %v2823, %v2823
  %v2880 = vmul.f32 %v2824, %v2824
  %v2881 = vmul.f32 %v2825, %v2825
  %v2882 = vmul.f32 %v2826, %v2826
  %v2883 = vmul.f32 %v2827, %v2827
  %v2884 = vmul.f32 %v2828, %v2828
  %v2885 = vmul.f32 %v2829, %v2829
  %v2886 = vmul.f32 %v2830, %v2830
  %v2887 = vmul.f32 %v2831, %v2831
  %v2888 = vsub.f32 %v2832, %v2860
  %v2889 = vsub.f32 %v2833, %v2861
  %v2890 = vsub.f32 %v2834, %v2862
  %v2891 = vsub.f32 %v2835, %v2863
  %v2892 = vsub.f32 %v2836, %v2864
  %v2893 = vsub.f32 %v2837, %v2865
  %v2894 = vsub.f32 %v2838, %v2866
  %v2895 = vsub.f32 %v2839, %v2867
  %v2896 = vsub.f32 %v2840, %v2868
  %v2897 = vsub.f32 %v2841, %v2869
  %v2898 = vsub.f32 %v2842, %v2870
  %v2899 = vsub.f32 %v2843, %v2871
  %v2900 = vsub.f32 %v2844, %v2872
  %v2901 = vsub.f32 %v2845, %v2873
  %v2902 = vsub.f32 %v2846, %v2874
  %v2903 = vsub.f32 %v2847, %v2875
  %v2904 = vsub.f32 %v2848, %v2876
  %v2905 = vsub.f32 %v2849, %v2877
  %v2906 = vsub.f32 %v2850, %v2878
  %v2907 = vsub.f32 %v2851, %v2879
  %v2908 = vsub.f32 %v2852, %v2880
  %v2909 = vsub.f32 %v2853, %v2881
  %v2910 = vsub.f32 %v2854, %v2882
  %v2911 = vsub.f32 %v2855, %v2883
  %v2912 = vsub.f32 %v2856, %v2884
  %v2913 = vsub.f32 %v2857, %v2885
  %v2914 = vsub.f32 %v2858, %v2886
  %v2915 = vsub.f32 %v2859, %v2887
  %v2916 = vmax.f32 %v2888, 0.0
  %v2917 = vmax.f32 %v2889, 0.0
  %v2918 = vmax.f32 %v2890, 0.0
  %v2919 = vmax.f32 %v2891, 0.0
  %v2920 = vmax.f32 %v2892, 0.0
  %v2921 = vmax.f32 %v2893, 0.0
  %v2922 = vmax.f32 %v2894, 0.0
  %v2923 = vmax.f32 %v2895, 0.0
  %v2924 = vmax.f32 %v2896, 0.0
  %v2925 = vmax.f32 %v2897, 0.0
  %v2926 = vmax.f32 %v2898, 0.0
  %v2927 = vmax.f32 %v2899, 0.0
  %v2928 = vmax.f32 %v2900, 0.0
  %v2929 = vmax.f32 %v2901, 0.0
  %v2930 = vmax.f32 %v2902, 0.0
  %v2931 = vmax.f32 %v2903, 0.0
  %v2932 = vmax.f32 %v2904, 0.0
  %v2933 = vmax.f32 %v2905, 0.0
  %v2934 = vmax.f32 %v2906, 0.0
  %v2935 = vmax.f32 %v2907, 0.0
  %v2936 = vmax.f32 %v2908, 0.0
  %v2937 = vmax.f32 %v2909, 0.0
  %v2938 = vmax.f32 %v2910, 0.0
  %v2939 = vmax.f32 %v2911, 0.0
  %v2940 = vmax.f32 %v2912, 0.0
  %v2941 = vmax.f32 %v2913, 0.0
  %v2942 = vmax.f32 %v2914, 0.0
  %v2943 = vmax.f32 %v2915, 0.0
  %v2944 = vld [vmem:[%s3] sm:$0xff]
  %v2945 = vld [vmem:[%s3 + $0x8] sm:$0xff]
  %v2946 = vld [vmem:[%s3 + $0x10] sm:$0xff]
  %v2947 = vld [vmem:[%s3 + $0x18] sm:$0xff]
  %v2948 = vld [vmem:[%s3 + $0x20] sm:$0xff]
  %v2949 = vld [vmem:[%s3 + $0x28] sm:$0xff]
  %v2950 = vld [vmem:[%s3 + $0x30] sm:$0xff]
  %v2951 = vld [vmem:[%s3 + $0x38] sm:$0xff]
  %v2952 = vld [vmem:[%s3 + $0x40] sm:$0xff]
  %v2953 = vld [vmem:[%s3 + $0x48] sm:$0xff]
  %v2954 = vld [vmem:[%s3 + $0x50] sm:$0xff]
  %v2955 = vld [vmem:[%s3 + $0x58] sm:$0xff]
  %v2956 = vld [vmem:[%s3 + $0x60] sm:$0xff]
  %v2957 = vld [vmem:[%s3 + $0x68] sm:$0xff]
  %v2958 = vld [vmem:[%s3 + $0x70] sm:$0xff]
  %v2959 = vld [vmem:[%s3 + $0x78] sm:$0xff]
  %v2960 = vld [vmem:[%s3 + $0x80] sm:$0xff]
  %v2961 = vld [vmem:[%s3 + $0x88] sm:$0xff]
  %v2962 = vld [vmem:[%s3 + $0x90] sm:$0xff]
  %v2963 = vld [vmem:[%s3 + $0x98] sm:$0xff]
  %v2964 = vld [vmem:[%s3 + $0xa0] sm:$0xff]
  %v2965 = vld [vmem:[%s3 + $0xa8] sm:$0xff]
  %v2966 = vld [vmem:[%s3 + $0xb0] sm:$0xff]
  %v2967 = vld [vmem:[%s3 + $0xb8] sm:$0xff]
  %v2968 = vld [vmem:[%s3 + $0xc0] sm:$0xff]
  %v2969 = vld [vmem:[%s3 + $0xc8] sm:$0xff]
  %v2970 = vld [vmem:[%s3 + $0xd0] sm:$0xff]
  %v2971 = vld [vmem:[%s3 + $0xd8] sm:$0xff]
  %v2972 = vadd.f32 %v2916, 0.001
  %v2973 = vadd.f32 %v2917, 0.001
  %v2974 = vadd.f32 %v2918, 0.001
  %v2975 = vadd.f32 %v2919, 0.001
  %v2976 = vadd.f32 %v2920, 0.001
  %v2977 = vadd.f32 %v2921, 0.001
  %v2978 = vadd.f32 %v2922, 0.001
  %v2979 = vadd.f32 %v2923, 0.001
  %v2980 = vadd.f32 %v2924, 0.001
  %v2981 = vadd.f32 %v2925, 0.001
  %v2982 = vadd.f32 %v2926, 0.001
  %v2983 = vadd.f32 %v2927, 0.001
  %v2984 = vadd.f32 %v2928, 0.001
  %v2985 = vadd.f32 %v2929, 0.001
  %v2986 = vadd.f32 %v2930, 0.001
  %v2987 = vadd.f32 %v2931, 0.001
  %v2988 = vadd.f32 %v2932, 0.001
  %v2989 = vadd.f32 %v2933, 0.001
  %v2990 = vadd.f32 %v2934, 0.001
  %v2991 = vadd.f32 %v2935, 0.001
  %v2992 = vadd.f32 %v2936, 0.001
  %v2993 = vadd.f32 %v2937, 0.001
  %v2994 = vadd.f32 %v2938, 0.001
  %v2995 = vadd.f32 %v2939, 0.001
  %v2996 = vadd.f32 %v2940, 0.001
  %v2997 = vadd.f32 %v2941, 0.001
  %v2998 = vadd.f32 %v2942, 0.001
  %v2999 = vadd.f32 %v2943, 0.001
  %v3000 = vrsqrt.pop %v2972
  %v3001 = vrsqrt.pop %v2973
  %v3002 = vrsqrt.pop %v2974
  %v3003 = vrsqrt.pop %v2975
  %v3004 = vrsqrt.pop %v2976
  %v3005 = vrsqrt.pop %v2977
  %v3006 = vrsqrt.pop %v2978
  %v3007 = vrsqrt.pop %v2979
  %v3008 = vrsqrt.pop %v2980
  %v3009 = vrsqrt.pop %v2981
  %v3010 = vrsqrt.pop %v2982
  %v3011 = vrsqrt.pop %v2983
  %v3012 = vrsqrt.pop %v2984
  %v3013 = vrsqrt.pop %v2985
  %v3014 = vrsqrt.pop %v2986
  %v3015 = vrsqrt.pop %v2987
  %v3016 = vrsqrt.pop %v2988
  %v3017 = vrsqrt.pop %v2989
  %v3018 = vrsqrt.pop %v2990
  %v3019 = vrsqrt.pop %v2991
  %v3020 = vrsqrt.pop %v2992
  %v3021 = vrsqrt.pop %v2993
  %v3022 = vrsqrt.pop %v2994
  %v3023 = vrsqrt.pop %v2995
  %v3024 = vrsqrt.pop %v2996
  %v3025 = vrsqrt.pop %v2997
  %v3026 = vrsqrt.pop %v2998
  %v3027 = vrsqrt.pop %v2999
  %v3028 = vmul.f32 %v2944, %v3000
  %v3029 = vmul.f32 %v2945, %v3001
  %v3030 = vmul.f32 %v2946, %v3002
  %v3031 = vmul.f32 %v2947, %v3003
  %v3032 = vmul.f32 %v2948, %v3004
  %v3033 = vmul.f32 %v2949, %v3005
  %v3034 = vmul.f32 %v2950, %v3006
  %v3035 = vmul.f32 %v2951, %v3007
  %v3036 = vmul.f32 %v2952, %v3008
  %v3037 = vmul.f32 %v2953, %v3009
  %v3038 = vmul.f32 %v2954, %v3010
  %v3039 = vmul.f32 %v2955, %v3011
  %v3040 = vmul.f32 %v2956, %v3012
  %v3041 = vmul.f32 %v2957, %v3013
  %v3042 = vmul.f32 %v2958, %v3014
  %v3043 = vmul.f32 %v2959, %v3015
  %v3044 = vmul.f32 %v2960, %v3016
  %v3045 = vmul.f32 %v2961, %v3017
  %v3046 = vmul.f32 %v2962, %v3018
  %v3047 = vmul.f32 %v2963, %v3019
  %v3048 = vmul.f32 %v2964, %v3020
  %v3049 = vmul.f32 %v2965, %v3021
  %v3050 = vmul.f32 %v2966, %v3022
  %v3051 = vmul.f32 %v2967, %v3023
  %v3052 = vmul.f32 %v2968, %v3024
  %v3053 = vmul.f32 %v2969, %v3025
  %v3054 = vmul.f32 %v2970, %v3026
  %v3055 = vmul.f32 %v2971, %v3027
  %v3056 = vmul.f32 %v2804, %v3028
  %v3057 = vmul.f32 %v2805, %v3029
  %v3058 = vmul.f32 %v2806, %v3030
  %v3059 = vmul.f32 %v2807, %v3031
  %v3060 = vmul.f32 %v2808, %v3032
  %v3061 = vmul.f32 %v2809, %v3033
  %v3062 = vmul.f32 %v2810, %v3034
  %v3063 = vmul.f32 %v2811, %v3035
  %v3064 = vmul.f32 %v2812, %v3036
  %v3065 = vmul.f32 %v2813, %v3037
  %v3066 = vmul.f32 %v2814, %v3038
  %v3067 = vmul.f32 %v2815, %v3039
  %v3068 = vmul.f32 %v2816, %v3040
  %v3069 = vmul.f32 %v2817, %v3041
  %v3070 = vmul.f32 %v2818, %v3042
  %v3071 = vmul.f32 %v2819, %v3043
  %v3072 = vmul.f32 %v2820, %v3044
  %v3073 = vmul.f32 %v2821, %v3045
  %v3074 = vmul.f32 %v2822, %v3046
  %v3075 = vmul.f32 %v2823, %v3047
  %v3076 = vmul.f32 %v2824, %v3048
  %v3077 = vmul.f32 %v2825, %v3049
  %v3078 = vmul.f32 %v2826, %v3050
  %v3079 = vmul.f32 %v2827, %v3051
  %v3080 = vmul.f32 %v2828, %v3052
  %v3081 = vmul.f32 %v2829, %v3053
  %v3082 = vmul.f32 %v2830, %v3054
  %v3083 = vmul.f32 %v2831, %v3055
  %3112 = vrot.lane.b32.xlu0 %v3056, 1
  %v3113 = vpop.permute.xlu0 %3112
  %3114 = vrot.lane.b32.xlu0 %v3057, 1
  %v3115 = vpop.permute.xlu0 %3114
  %3116 = vrot.lane.b32.xlu0 %v3058, 1
  %v3117 = vpop.permute.xlu0 %3116
  %3118 = vrot.lane.b32.xlu0 %v3059, 1
  %v3119 = vpop.permute.xlu0 %3118
  %3120 = vrot.lane.b32.xlu0 %v3060, 1
  %v3121 = vpop.permute.xlu0 %3120
  %3122 = vrot.lane.b32.xlu0 %v3061, 1
  %v3123 = vpop.permute.xlu0 %3122
  %3124 = vrot.lane.b32.xlu0 %v3062, 1
  %v3125 = vpop.permute.xlu0 %3124
  %3126 = vrot.lane.b32.xlu0 %v3063, 1
  %v3127 = vpop.permute.xlu0 %3126
  %3128 = vrot.lane.b32.xlu0 %v3064, 1
  %v3129 = vpop.permute.xlu0 %3128
  %3130 = vrot.lane.b32.xlu0 %v3065, 1
  %v3131 = vpop.permute.xlu0 %3130
  %3132 = vrot.lane.b32.xlu0 %v3066, 1
  %v3133 = vpop.permute.xlu0 %3132
  %3134 = vrot.lane.b32.xlu0 %v3067, 1
  %v3135 = vpop.permute.xlu0 %3134
  %3136 = vrot.lane.b32.xlu0 %v3068, 1
  %v3137 = vpop.permute.xlu0 %3136
  %3138 = vrot.lane.b32.xlu0 %v3069, 1
  %v3139 = vpop.permute.xlu0 %3138
  %3140 = vrot.lane.b32.xlu0 %v3070, 1
  %v3141 = vpop.permute.xlu0 %3140
  %3142 = vrot.lane.b32.xlu0 %v3071, 1
  %v3143 = vpop.permute.xlu0 %3142
  %3144 = vrot.lane.b32.xlu0 %v3072, 1
  %v3145 = vpop.permute.xlu0 %3144
  %3146 = vrot.lane.b32.xlu0 %v3073, 1
  %v3147 = vpop.permute.xlu0 %3146
  %3148 = vrot.lane.b32.xlu0 %v3074, 1
  %v3149 = vpop.permute.xlu0 %3148
  %3150 = vrot.lane.b32.xlu0 %v3075, 1
  %v3151 = vpop.permute.xlu0 %3150
  %3152 = vrot.lane.b32.xlu0 %v3076, 1
  %v3153 = vpop.permute.xlu0 %3152
  %3154 = vrot.lane.b32.xlu0 %v3077, 1
  %v3155 = vpop.permute.xlu0 %3154
  %3156 = vrot.lane.b32.xlu0 %v3078, 1
  %v3157 = vpop.permute.xlu0 %3156
  %3158 = vrot.lane.b32.xlu0 %v3079, 1
  %v3159 = vpop.permute.xlu0 %3158
  %3160 = vrot.lane.b32.xlu0 %v3080, 1
  %v3161 = vpop.permute.xlu0 %3160
  %3162 = vrot.lane.b32.xlu0 %v3081, 1
  %v3163 = vpop.permute.xlu0 %3162
  %3164 = vrot.lane.b32.xlu0 %v3082, 1
  %v3165 = vpop.permute.xlu0 %3164
  %3166 = vrot.lane.b32.xlu0 %v3083, 1
  %v3167 = vpop.permute.xlu0 %3166
  %v3196 = vsub.f32 %v2944, %v3113
  %v3197 = vsub.f32 %v2945, %v3115
  %v3198 = vsub.f32 %v2946, %v3117
  %v3199 = vsub.f32 %v2947, %v3119
  %v3200 = vsub.f32 %v2948, %v3121
  %v3201 = vsub.f32 %v2949, %v3123
  %v3202 = vsub.f32 %v2950, %v3125
  %v3203 = vsub.f32 %v2951, %v3127
  %v3204 = vsub.f32 %v2952, %v3129
  %v3205 = vsub.f32 %v2953, %v3131
  %v3206 = vsub.f32 %v2954, %v3133
  %v3207 = vsub.f32 %v2955, %v3135
  %v3208 = vsub.f32 %v2956, %v3137
  %v3209 = vsub.f32 %v2957, %v3139
  %v3210 = vsub.f32 %v2958, %v3141
  %v3211 = vsub.f32 %v2959, %v3143
  %v3212 = vsub.f32 %v2960, %v3145
  %v3213 = vsub.f32 %v2961, %v3147
  %v3214 = vsub.f32 %v2962, %v3149
  %v3215 = vsub.f32 %v2963, %v3151
  %v3216 = vsub.f32 %v2964, %v3153
  %v3217 = vsub.f32 %v2965, %v3155
  %v3218 = vsub.f32 %v2966, %v3157
  %v3219 = vsub.f32 %v2967, %v3159
  %v3220 = vsub.f32 %v2968, %v3161
  %v3221 = vsub.f32 %v2969, %v3163
  %v3222 = vsub.f32 %v2970, %v3165
  %v3223 = vsub.f32 %v2971, %v3167
  %3225 = vset.pattern.permute.xlu0 0
  %3226 = vperm.xlu0 %3225, %v3028
  %v3227 = vpop.permute.xlu0 %3226
  %3230 = vset.pattern.permute.xlu0 0
  %3231 = vperm.xlu0 %3230, %v3029
  %v3232 = vpop.permute.xlu0 %3231
  %3235 = vset.pattern.permute.xlu0 0
  %3236 = vperm.xlu0 %3235, %v3030
  %v3237 = vpop.permute.xlu0 %3236
  %3240 = vset.pattern.permute.xlu0 0
  %3241 = vperm.xlu0 %3240, %v3031
  %v3242 = vpop.permute.xlu0 %3241
  %3245 = vset.pattern.permute.xlu0 0
  %3246 = vperm.xlu0 %3245, %v3032
  %v3247 = vpop.permute.xlu0 %3246
  %3250 = vset.pattern.permute.xlu0 0
  %3251 = vperm.xlu0 %3250, %v3033
  %v3252 = vpop.permute.xlu0 %3251
  %3255 = vset.pattern.permute.xlu0 0
  %3256 = vperm.xlu0 %3255, %v3034
  %v3257 = vpop.permute.xlu0 %3256
  %3260 = vset.pattern.permute.xlu0 0
  %3261 = vperm.xlu0 %3260, %v3035
  %v3262 = vpop.permute.xlu0 %3261
  %3265 = vset.pattern.permute.xlu0 0
  %3266 = vperm.xlu0 %3265, %v3036
  %v3267 = vpop.permute.xlu0 %3266
  %3270 = vset.pattern.permute.xlu0 0
  %3271 = vperm.xlu0 %3270, %v3037
  %v3272 = vpop.permute.xlu0 %3271
  %3275 = vset.pattern.permute.xlu0 0
  %3276 = vperm.xlu0 %3275, %v3038
  %v3277 = vpop.permute.xlu0 %3276
  %3280 = vset.pattern.permute.xlu0 0
  %3281 = vperm.xlu0 %3280, %v3039
  %v3282 = vpop.permute.xlu0 %3281
  %3285 = vset.pattern.permute.xlu0 0
  %3286 = vperm.xlu0 %3285, %v3040
  %v3287 = vpop.permute.xlu0 %3286
  %3290 = vset.pattern.permute.xlu0 0
  %3291 = vperm.xlu0 %3290, %v3041
  %v3292 = vpop.permute.xlu0 %3291
  %3295 = vset.pattern.permute.xlu0 0
  %3296 = vperm.xlu0 %3295, %v3042
  %v3297 = vpop.permute.xlu0 %3296
  %3300 = vset.pattern.permute.xlu0 0
  %3301 = vperm.xlu0 %3300, %v3043
  %v3302 = vpop.permute.xlu0 %3301
  %3305 = vset.pattern.permute.xlu0 0
  %3306 = vperm.xlu0 %3305, %v3044
  %v3307 = vpop.permute.xlu0 %3306
  %3310 = vset.pattern.permute.xlu0 0
  %3311 = vperm.xlu0 %3310, %v3045
  %v3312 = vpop.permute.xlu0 %3311
  %3315 = vset.pattern.permute.xlu0 0
  %3316 = vperm.xlu0 %3315, %v3046
  %v3317 = vpop.permute.xlu0 %3316
  %3320 = vset.pattern.permute.xlu0 0
  %3321 = vperm.xlu0 %3320, %v3047
  %v3322 = vpop.permute.xlu0 %3321
  %3325 = vset.pattern.permute.xlu0 0
  %3326 = vperm.xlu0 %3325, %v3048
  %v3327 = vpop.permute.xlu0 %3326
  %3330 = vset.pattern.permute.xlu0 0
  %3331 = vperm.xlu0 %3330, %v3049
  %v3332 = vpop.permute.xlu0 %3331
  %3335 = vset.pattern.permute.xlu0 0
  %3336 = vperm.xlu0 %3335, %v3050
  %v3337 = vpop.permute.xlu0 %3336
  %3340 = vset.pattern.permute.xlu0 0
  %3341 = vperm.xlu0 %3340, %v3051
  %v3342 = vpop.permute.xlu0 %3341
  %3345 = vset.pattern.permute.xlu0 0
  %3346 = vperm.xlu0 %3345, %v3052
  %v3347 = vpop.permute.xlu0 %3346
  %3350 = vset.pattern.permute.xlu0 0
  %3351 = vperm.xlu0 %3350, %v3053
  %v3352 = vpop.permute.xlu0 %3351
  %3355 = vset.pattern.permute.xlu0 0
  %3356 = vperm.xlu0 %3355, %v3054
  %v3357 = vpop.permute.xlu0 %3356
  %3360 = vset.pattern.permute.xlu0 0
  %3361 = vperm.xlu0 %3360, %v3055
  %v3362 = vpop.permute.xlu0 %3361
  %v3364 = vmul.f32 %v2357, %v3227
  %v3365 = vmul.f32 %v2359, %v3227
  %v3366 = vmul.f32 %v2363, %v3232
  %v3367 = vmul.f32 %v2365, %v3232
  %v3368 = vmul.f32 %v2369, %v3237
  %v3369 = vmul.f32 %v2371, %v3237
  %v3370 = vmul.f32 %v2375, %v3242
  %v3371 = vmul.f32 %v2377, %v3242
  %v3372 = vmul.f32 %v2381, %v3247
  %v3373 = vmul.f32 %v2383, %v3247
  %v3374 = vmul.f32 %v2387, %v3252
  %v3375 = vmul.f32 %v2389, %v3252
  %v3376 = vmul.f32 %v2393, %v3257
  %v3377 = vmul.f32 %v2395, %v3257
  %v3378 = vmul.f32 %v2399, %v3262
  %v3379 = vmul.f32 %v2401, %v3262
  %v3380 = vmul.f32 %v2405, %v3267
  %v3381 = vmul.f32 %v2407, %v3267
  %v3382 = vmul.f32 %v2411, %v3272
  %v3383 = vmul.f32 %v2413, %v3272
  %v3384 = vmul.f32 %v2417, %v3277
  %v3385 = vmul.f32 %v2419, %v3277
  %v3386 = vmul.f32 %v2423, %v3282
  %v3387 = vmul.f32 %v2425, %v3282
  %v3388 = vmul.f32 %v2429, %v3287
  %v3389 = vmul.f32 %v2431, %v3287
  %v3390 = vmul.f32 %v2435, %v3292
  %v3391 = vmul.f32 %v2437, %v3292
  %v3392 = vmul.f32 %v2441, %v3297
  %v3393 = vmul.f32 %v2443, %v3297
  %v3394 = vmul.f32 %v2447, %v3302
  %v3395 = vmul.f32 %v2449, %v3302
  %v3396 = vmul.f32 %v2453, %v3307
  %v3397 = vmul.f32 %v2455, %v3307
  %v3398 = vmul.f32 %v2459, %v3312
  %v3399 = vmul.f32 %v2461, %v3312
  %v3400 = vmul.f32 %v2465, %v3317
  %v3401 = vmul.f32 %v2467, %v3317
  %v3402 = vmul.f32 %v2471, %v3322
  %v3403 = vmul.f32 %v2473, %v3322
  %v3404 = vmul.f32 %v2477, %v3327
  %v3405 = vmul.f32 %v2479, %v3327
  %v3406 = vmul.f32 %v2483, %v3332
  %v3407 = vmul.f32 %v2485, %v3332
  %v3408 = vmul.f32 %v2489, %v3337
  %v3409 = vmul.f32 %v2491, %v3337
  %v3410 = vmul.f32 %v2495, %v3342
  %v3411 = vmul.f32 %v2497, %v3342
  %v3412 = vmul.f32 %v2501, %v3347
  %v3413 = vmul.f32 %v2503, %v3347
  %v3414 = vmul.f32 %v2507, %v3352
  %v3415 = vmul.f32 %v2509, %v3352
  %v3416 = vmul.f32 %v2513, %v3357
  %v3417 = vmul.f32 %v2515, %v3357
  %v3418 = vmul.f32 %v2519, %v3362
  %v3419 = vmul.f32 %v2521, %v3362
  %3421 = vset.pattern.permute.xlu0 1
  %3422 = vperm.xlu0 %3421, %v3196
  %v3423 = vpop.permute.xlu0 %3422
  %3426 = vset.pattern.permute.xlu0 1
  %3427 = vperm.xlu0 %3426, %v3197
  %v3428 = vpop.permute.xlu0 %3427
  %3431 = vset.pattern.permute.xlu0 1
  %3432 = vperm.xlu0 %3431, %v3198
  %v3433 = vpop.permute.xlu0 %3432
  %3436 = vset.pattern.permute.xlu0 1
  %3437 = vperm.xlu0 %3436, %v3199
  %v3438 = vpop.permute.xlu0 %3437
  %3441 = vset.pattern.permute.xlu0 1
  %3442 = vperm.xlu0 %3441, %v3200
  %v3443 = vpop.permute.xlu0 %3442
  %3446 = vset.pattern.permute.xlu0 1
  %3447 = vperm.xlu0 %3446, %v3201
  %v3448 = vpop.permute.xlu0 %3447
  %3451 = vset.pattern.permute.xlu0 1
  %3452 = vperm.xlu0 %3451, %v3202
  %v3453 = vpop.permute.xlu0 %3452
  %3456 = vset.pattern.permute.xlu0 1
  %3457 = vperm.xlu0 %3456, %v3203
  %v3458 = vpop.permute.xlu0 %3457
  %3461 = vset.pattern.permute.xlu0 1
  %3462 = vperm.xlu0 %3461, %v3204
  %v3463 = vpop.permute.xlu0 %3462
  %3466 = vset.pattern.permute.xlu0 1
  %3467 = vperm.xlu0 %3466, %v3205
  %v3468 = vpop.permute.xlu0 %3467
  %3471 = vset.pattern.permute.xlu0 1
  %3472 = vperm.xlu0 %3471, %v3206
  %v3473 = vpop.permute.xlu0 %3472
  %3476 = vset.pattern.permute.xlu0 1
  %3477 = vperm.xlu0 %3476, %v3207
  %v3478 = vpop.permute.xlu0 %3477
  %3481 = vset.pattern.permute.xlu0 1
  %3482 = vperm.xlu0 %3481, %v3208
  %v3483 = vpop.permute.xlu0 %3482
  %3486 = vset.pattern.permute.xlu0 1
  %3487 = vperm.xlu0 %3486, %v3209
  %v3488 = vpop.permute.xlu0 %3487
  %3491 = vset.pattern.permute.xlu0 1
  %3492 = vperm.xlu0 %3491, %v3210
  %v3493 = vpop.permute.xlu0 %3492
  %3496 = vset.pattern.permute.xlu0 1
  %3497 = vperm.xlu0 %3496, %v3211
  %v3498 = vpop.permute.xlu0 %3497
  %3501 = vset.pattern.permute.xlu0 1
  %3502 = vperm.xlu0 %3501, %v3212
  %v3503 = vpop.permute.xlu0 %3502
  %3506 = vset.pattern.permute.xlu0 1
  %3507 = vperm.xlu0 %3506, %v3213
  %v3508 = vpop.permute.xlu0 %3507
  %3511 = vset.pattern.permute.xlu0 1
  %3512 = vperm.xlu0 %3511, %v3214
  %v3513 = vpop.permute.xlu0 %3512
  %3516 = vset.pattern.permute.xlu0 1
  %3517 = vperm.xlu0 %3516, %v3215
  %v3518 = vpop.permute.xlu0 %3517
  %3521 = vset.pattern.permute.xlu0 1
  %3522 = vperm.xlu0 %3521, %v3216
  %v3523 = vpop.permute.xlu0 %3522
  %3526 = vset.pattern.permute.xlu0 1
  %3527 = vperm.xlu0 %3526, %v3217
  %v3528 = vpop.permute.xlu0 %3527
  %3531 = vset.pattern.permute.xlu0 1
  %3532 = vperm.xlu0 %3531, %v3218
  %v3533 = vpop.permute.xlu0 %3532
  %3536 = vset.pattern.permute.xlu0 1
  %3537 = vperm.xlu0 %3536, %v3219
  %v3538 = vpop.permute.xlu0 %3537
  %3541 = vset.pattern.permute.xlu0 1
  %3542 = vperm.xlu0 %3541, %v3220
  %v3543 = vpop.permute.xlu0 %3542
  %3546 = vset.pattern.permute.xlu0 1
  %3547 = vperm.xlu0 %3546, %v3221
  %v3548 = vpop.permute.xlu0 %3547
  %3551 = vset.pattern.permute.xlu0 1
  %3552 = vperm.xlu0 %3551, %v3222
  %v3553 = vpop.permute.xlu0 %3552
  %3556 = vset.pattern.permute.xlu0 1
  %3557 = vperm.xlu0 %3556, %v3223
  %v3558 = vpop.permute.xlu0 %3557
  %v3560 = vadd.f32 %v3364, %v3423
  %v3561 = vadd.f32 %v3365, %v3423
  %v3562 = vadd.f32 %v3366, %v3428
  %v3563 = vadd.f32 %v3367, %v3428
  %v3564 = vadd.f32 %v3368, %v3433
  %v3565 = vadd.f32 %v3369, %v3433
  %v3566 = vadd.f32 %v3370, %v3438
  %v3567 = vadd.f32 %v3371, %v3438
  %v3568 = vadd.f32 %v3372, %v3443
  %v3569 = vadd.f32 %v3373, %v3443
  %v3570 = vadd.f32 %v3374, %v3448
  %v3571 = vadd.f32 %v3375, %v3448
  %v3572 = vadd.f32 %v3376, %v3453
  %v3573 = vadd.f32 %v3377, %v3453
  %v3574 = vadd.f32 %v3378, %v3458
  %v3575 = vadd.f32 %v3379, %v3458
  %v3576 = vadd.f32 %v3380, %v3463
  %v3577 = vadd.f32 %v3381, %v3463
  %v3578 = vadd.f32 %v3382, %v3468
  %v3579 = vadd.f32 %v3383, %v3468
  %v3580 = vadd.f32 %v3384, %v3473
  %v3581 = vadd.f32 %v3385, %v3473
  %v3582 = vadd.f32 %v3386, %v3478
  %v3583 = vadd.f32 %v3387, %v3478
  %v3584 = vadd.f32 %v3388, %v3483
  %v3585 = vadd.f32 %v3389, %v3483
  %v3586 = vadd.f32 %v3390, %v3488
  %v3587 = vadd.f32 %v3391, %v3488
  %v3588 = vadd.f32 %v3392, %v3493
  %v3589 = vadd.f32 %v3393, %v3493
  %v3590 = vadd.f32 %v3394, %v3498
  %v3591 = vadd.f32 %v3395, %v3498
  %v3592 = vadd.f32 %v3396, %v3503
  %v3593 = vadd.f32 %v3397, %v3503
  %v3594 = vadd.f32 %v3398, %v3508
  %v3595 = vadd.f32 %v3399, %v3508
  %v3596 = vadd.f32 %v3400, %v3513
  %v3597 = vadd.f32 %v3401, %v3513
  %v3598 = vadd.f32 %v3402, %v3518
  %v3599 = vadd.f32 %v3403, %v3518
  %v3600 = vadd.f32 %v3404, %v3523
  %v3601 = vadd.f32 %v3405, %v3523
  %v3602 = vadd.f32 %v3406, %v3528
  %v3603 = vadd.f32 %v3407, %v3528
  %v3604 = vadd.f32 %v3408, %v3533
  %v3605 = vadd.f32 %v3409, %v3533
  %v3606 = vadd.f32 %v3410, %v3538
  %v3607 = vadd.f32 %v3411, %v3538
  %v3608 = vadd.f32 %v3412, %v3543
  %v3609 = vadd.f32 %v3413, %v3543
  %v3610 = vadd.f32 %v3414, %v3548
  %v3611 = vadd.f32 %v3415, %v3548
  %v3612 = vadd.f32 %v3416, %v3553
  %v3613 = vadd.f32 %v3417, %v3553
  %v3614 = vadd.f32 %v3418, %v3558
  %v3615 = vadd.f32 %v3419, %v3558
  %3616 = vst [vmem:[%s4] sm:$0xff] %v3560
  %3617 = vst.msk [vmem:[%s4 + $0x8] sm:$0xff] %vm2523, %v3561
  %3618 = vst [vmem:[%s4 + $0x10] sm:$0xff] %v3562
  %3619 = vst.msk [vmem:[%s4 + $0x18] sm:$0xff] %vm2523, %v3563
  %3620 = vst [vmem:[%s4 + $0x20] sm:$0xff] %v3564
  %3621 = vst.msk [vmem:[%s4 + $0x28] sm:$0xff] %vm2523, %v3565
  %3622 = vst [vmem:[%s4 + $0x30] sm:$0xff] %v3566
  %3623 = vst.msk [vmem:[%s4 + $0x38] sm:$0xff] %vm2523, %v3567
  %3624 = vst [vmem:[%s4 + $0x40] sm:$0xff] %v3568
  %3625 = vst.msk [vmem:[%s4 + $0x48] sm:$0xff] %vm2523, %v3569
  %3626 = vst [vmem:[%s4 + $0x50] sm:$0xff] %v3570
  %3627 = vst.msk [vmem:[%s4 + $0x58] sm:$0xff] %vm2523, %v3571
  %3628 = vst [vmem:[%s4 + $0x60] sm:$0xff] %v3572
  %3629 = vst.msk [vmem:[%s4 + $0x68] sm:$0xff] %vm2523, %v3573
  %3630 = vst [vmem:[%s4 + $0x70] sm:$0xff] %v3574
  %3631 = vst.msk [vmem:[%s4 + $0x78] sm:$0xff] %vm2523, %v3575
  %3632 = vst [vmem:[%s4 + $0x80] sm:$0xff] %v3576
  %3633 = vst.msk [vmem:[%s4 + $0x88] sm:$0xff] %vm2523, %v3577
  %3634 = vst [vmem:[%s4 + $0x90] sm:$0xff] %v3578
  %3635 = vst.msk [vmem:[%s4 + $0x98] sm:$0xff] %vm2523, %v3579
  %3636 = vst [vmem:[%s4 + $0xa0] sm:$0xff] %v3580
  %3637 = vst.msk [vmem:[%s4 + $0xa8] sm:$0xff] %vm2523, %v3581
  %3638 = vst [vmem:[%s4 + $0xb0] sm:$0xff] %v3582
  %3639 = vst.msk [vmem:[%s4 + $0xb8] sm:$0xff] %vm2523, %v3583
  %3640 = vst [vmem:[%s4 + $0xc0] sm:$0xff] %v3584
  %3641 = vst.msk [vmem:[%s4 + $0xc8] sm:$0xff] %vm2523, %v3585
  %3642 = vst [vmem:[%s4 + $0xd0] sm:$0xff] %v3586
  %3643 = vst.msk [vmem:[%s4 + $0xd8] sm:$0xff] %vm2523, %v3587
  %3644 = vst [vmem:[%s4 + $0xe0] sm:$0xff] %v3588
  %3645 = vst.msk [vmem:[%s4 + $0xe8] sm:$0xff] %vm2523, %v3589
  %3646 = vst [vmem:[%s4 + $0xf0] sm:$0xff] %v3590
  %3647 = vst.msk [vmem:[%s4 + $0xf8] sm:$0xff] %vm2523, %v3591
  %3648 = vst [vmem:[%s4 + $0x100] sm:$0xff] %v3592
  %3649 = vst.msk [vmem:[%s4 + $0x108] sm:$0xff] %vm2523, %v3593
  %3650 = vst [vmem:[%s4 + $0x110] sm:$0xff] %v3594
  %3651 = vst.msk [vmem:[%s4 + $0x118] sm:$0xff] %vm2523, %v3595
  %3652 = vst [vmem:[%s4 + $0x120] sm:$0xff] %v3596
  %3653 = vst.msk [vmem:[%s4 + $0x128] sm:$0xff] %vm2523, %v3597
  %3654 = vst [vmem:[%s4 + $0x130] sm:$0xff] %v3598
  %3655 = vst.msk [vmem:[%s4 + $0x138] sm:$0xff] %vm2523, %v3599
  %3656 = vst [vmem:[%s4 + $0x140] sm:$0xff] %v3600
  %3657 = vst.msk [vmem:[%s4 + $0x148] sm:$0xff] %vm2523, %v3601
  %3658 = vst [vmem:[%s4 + $0x150] sm:$0xff] %v3602
  %3659 = vst.msk [vmem:[%s4 + $0x158] sm:$0xff] %vm2523, %v3603
  %3660 = vst [vmem:[%s4 + $0x160] sm:$0xff] %v3604
  %3661 = vst.msk [vmem:[%s4 + $0x168] sm:$0xff] %vm2523, %v3605
  %3662 = vst [vmem:[%s4 + $0x170] sm:$0xff] %v3606
  %3663 = vst.msk [vmem:[%s4 + $0x178] sm:$0xff] %vm2523, %v3607
  %3664 = vst [vmem:[%s4 + $0x180] sm:$0xff] %v3608
  %3665 = vst.msk [vmem:[%s4 + $0x188] sm:$0xff] %vm2523, %v3609
  %3666 = vst [vmem:[%s4 + $0x190] sm:$0xff] %v3610
  %3667 = vst.msk [vmem:[%s4 + $0x198] sm:$0xff] %vm2523, %v3611
  %3668 = vst [vmem:[%s4 + $0x1a0] sm:$0xff] %v3612
  %3669 = vst.msk [vmem:[%s4 + $0x1a8] sm:$0xff] %vm2523, %v3613
  %3670 = vst [vmem:[%s4 + $0x1b0] sm:$0xff] %v3614
  %3671 = vst.msk [vmem:[%s4 + $0x1b8] sm:$0xff] %vm2523, %v3615
  // Predicated region
  $region18: #{tpu_custom_call.1} parent=0 // pred_check
    _
  $region19: #{tpu_custom_call.1} parent=0 // pred_check_branch
    %3673 = sbr.rel (0) target = $region21
  $region20: #{tpu_custom_call.1} parent=0 // pred_region
    _
  $region21: #{tpu_custom_call.1} parent=0 // pred_fallthru
    _
  // Predicated region
  $region22: #{tpu_custom_call.1} parent=0 // pred_check
    _
  $region23: #{tpu_custom_call.1} parent=0 // pred_check_branch
    %3675 = sbr.rel (0) target = $region25
  $region24: #{tpu_custom_call.1} parent=0 // pred_region
    _
  $region25: #{tpu_custom_call.1} parent=0 // pred_fallthru
    _

</llo_original>
